<compile_context>
chip_gen: v7x
topology: tpu7x:2x2x1
jax: 0.10.0
libtpu: 0.0.40
codegen_flags: <defaults>
</compile_context>

<pallas_src>
import numpy as np
import jax
import jax.numpy as jnp
from jax.experimental import pallas as pl
from jax.experimental.pallas import tpu as pltpu

K = 4        # ConvTranspose2d kernel_size
STRIDE = 2
PAD = 1
BN_EPS = 1e-5


@jax.jit
def deconv_bn_relu(x_nchw, weight, bias, gamma, beta):
    """Forward of Deconv.  x_nchw: (N, Cin, H, W), weight: (Cin, Cout, 4, 4)."""
    N, Cin, H, W = x_nchw.shape
    Cout = weight.shape[1]
    Ho, Wo = STRIDE * H, STRIDE * W

    # Row-pair block size: each grid step emits 2*R output rows.
    R = 1
    for cand in (8, 4, 2, 1):
        if H % cand == 0:
            R = cand
            break
    nrb = H // R
    C2 = 2 * Cout

    # ---- glue (input-sized, cheap): NCHW -> NHWC, pad by 1, cast to bf16 ----
    x = jnp.transpose(x_nchw, (0, 2, 3, 1))
    xp = jnp.pad(x, ((0, 0), (1, 1), (1, 1), (0, 0))).astype(jnp.bfloat16)
    Hp, Wp = H + 2, W + 2

    # Per-parity packed sub-kernels:
    #   w_packed[p, q, (dh*2+dw)*Cin + ci, co] = weight[ci, co, 3-p-2*dh, 3-q-2*dw]
    w_t = jnp.transpose(weight.astype(jnp.float32), (2, 3, 0, 1))   # (kh, kw, Cin, Cout)
    sel = np.array([[3, 1], [2, 0]])                                # [parity, tap] -> k index
    w6 = w_t[sel][:, :, sel]                                        # (p, dh, q, dw, Cin, Cout)
    w6 = jnp.transpose(w6, (0, 2, 1, 3, 4, 5))                      # (p, q, dh, dw, Cin, Cout)
    w_packed = w6.reshape(2, 2, 4 * Cin, Cout).astype(jnp.bfloat16)
    # NOTE: the ConvTranspose2d bias is dropped on purpose -- it cancels exactly
    # under training-mode BatchNorm (mean subtraction); it would only affect the
    # un-modeled running statistics.

    # ---- Pallas kernel 1: parity-decomposed transposed conv + partial BN stats
    def deconv_kernel(x_ref, w_ref, y_ref, s_ref):
        # x_ref: (1, Hp, Wp, Cin)   bf16  padded image (resident per batch index)
        # w_ref: (2, 2, 4*Cin, Cout) bf16 per-parity packed weights
        # y_ref: (1, R, 2, W, 2*Cout) f32 parity-packed output rows (lane-dense)
        # s_ref: (1, 1, 2, 2*Cout)  f32  partial [sum ; sum_sq] for BatchNorm
        r0 = pl.multiple_of(pl.program_id(1) * R, R)
        # 9 shared shifted windows, flattened to matmul-ready (R*W, Cin) tiles.
        win = [[x_ref[0, pl.ds(r0 + i, R), pl.ds(j, W), :].reshape(R * W, Cin)
                for j in range(3)] for i in range(3)]
        psum = jnp.zeros((1, C2), jnp.float32)
        psq = jnp.zeros((1, C2), jnp.float32)
        for p in range(2):            # output row parity
            outs = []
            for q in range(2):        # output column parity
                # im2col patch: contraction dim 4*Cin -> one MXU matmul.
                patch = jnp.concatenate(
                    [win[p + dh][q + dw] for dh in range(2) for dw in range(2)],
                    axis=-1)                                        # (R*W, 4*Cin)
                o = jnp.dot(patch, w_ref[p, q],
                            preferred_element_type=jnp.float32)     # (R*W, Cout)
                outs.append(o)
            row = jnp.concatenate(outs, axis=-1)                    # (R*W, 2*Cout)
            psum = psum + jnp.sum(row, axis=0, keepdims=True)
            psq = psq + jnp.sum(row * row, axis=0, keepdims=True)
            y_ref[0, :, p, :, :] = row.reshape(R, W, C2)
        s_ref[0, 0, 0:1, :] = psum
        s_ref[0, 0, 1:2, :] = psq

    y, stats = pl.pallas_call(
        deconv_kernel,
        out_shape=(
            jax.ShapeDtypeStruct((N, H, 2, W, C2), jnp.float32),
            jax.ShapeDtypeStruct((N, nrb, 2, C2), jnp.float32),
        ),
        grid=(N, nrb),
        in_specs=[
            pl.BlockSpec((1, Hp, Wp, Cin), lambda n, rb: (n, 0, 0, 0)),
            pl.BlockSpec((2, 2, 4 * Cin, Cout), lambda n, rb: (0, 0, 0, 0)),
        ],
        out_specs=(
            pl.BlockSpec((1, R, 2, W, C2), lambda n, rb: (n, rb, 0, 0, 0)),
            pl.BlockSpec((1, 1, 2, C2), lambda n, rb: (n, rb, 0, 0)),
        ),
        compiler_params=pltpu.CompilerParams(
            dimension_semantics=("parallel", "parallel"),
            vmem_limit_bytes=32 * 1024 * 1024),
    )(xp, w_packed)

    # ---- finalize BN statistics (tiny per-channel XLA reduction) -------------
    M = N * Ho * Wo
    st = stats.reshape(N * nrb, 2, 2, Cout).sum(axis=(0, 2))        # (2, Cout)
    mean = st[0] / M
    var = jnp.maximum(st[1] / M - mean * mean, 0.0)                 # biased variance
    inv = jax.lax.rsqrt(var + BN_EPS)
    g = gamma.astype(jnp.float32)
    scale = (g * inv).reshape(1, Cout)
    shift = (beta.astype(jnp.float32) - mean * g * inv).reshape(1, Cout)

    # (N, H, 2, W, 2*Cout) in row-major order IS NHWC (N, Ho, Wo, Cout): the
    # pixel shuffle back is a free reshape (no HBM traffic).
    y2 = y.reshape(M, Cout)

    tm = 256
    while tm > 1 and M % tm:
        tm //= 2

    # ---- Pallas kernel 2: tiled, pipelined scale*y + shift, ReLU -------------
    def bn_relu_kernel(y_ref, sc_ref, sh_ref, o_ref):
        o_ref[...] = jnp.maximum(y_ref[...] * sc_ref[...] + sh_ref[...], 0.0)

    out = pl.pallas_call(
        bn_relu_kernel,
        out_shape=jax.ShapeDtypeStruct((M, Cout), jnp.float32),
        grid=(M // tm,),
        in_specs=[
            pl.BlockSpec((tm, Cout), lambda i: (i, 0)),
            pl.BlockSpec((1, Cout), lambda i: (0, 0)),
            pl.BlockSpec((1, Cout), lambda i: (0, 0)),
        ],
        out_specs=pl.BlockSpec((tm, Cout), lambda i: (i, 0)),
        compiler_params=pltpu.CompilerParams(
            dimension_semantics=("parallel",),
            vmem_limit_bytes=32 * 1024 * 1024),
    )(y2, scale, shift)

    out = out.reshape(N, Ho, Wo, Cout)
    # TODO(synk): fold this NHWC->NCHW transpose into the BN kernel's out_spec
    # (in-kernel tile transpose) to remove one more HBM round trip.
    return jnp.transpose(out, (0, 3, 1, 2))


def _reference(x, weight, bias, gamma, beta):
    """Brute-force NumPy reference following PyTorch ConvTranspose2d / BatchNorm2d."""
    N, Cin, H, W = x.shape
    Cout = weight.shape[1]
    Ho = (H - 1) * STRIDE - 2 * PAD + K
    Wo = (W - 1) * STRIDE - 2 * PAD + K
    y = np.zeros((N, Cout, Ho, Wo), np.float64)
    for ih in range(H):
        for iw in range(W):
            for kh in range(K):
                for kw in range(K):
                    oh = ih * STRIDE - PAD + kh
                    ow = iw * STRIDE - PAD + kw
                    if 0 <= oh < Ho and 0 <= ow < Wo:
                        y[:, :, oh, ow] += np.einsum(
                            'nc,cd->nd', x[:, :, ih, iw], weight[:, :, kh, kw])
    y += bias[None, :, None, None]
    mean = y.mean(axis=(0, 2, 3), keepdims=True)
    var = y.var(axis=(0, 2, 3), keepdims=True)        # biased, as in PyTorch training BN
    yn = gamma[None, :, None, None] * (y - mean) / np.sqrt(var + BN_EPS) \
        + beta[None, :, None, None]
    return np.maximum(yn, 0.0)


if __name__ == "__main__":
    # Shapes consistent with the UNet decoder's Deconv(256, 128) block.
    N, Cin, Cout, H, W = 2, 256, 128, 8, 8

    key = jax.random.PRNGKey(0)
    kx, kw, kb, kg, ke = jax.random.split(key, 5)
    x = jax.random.normal(kx, (N, Cin, H, W), jnp.float32)
    weight = 0.1 * jax.random.normal(kw, (Cin, Cout, K, K), jnp.float32)  # ConvTranspose2d weight
    bias = 0.1 * jax.random.normal(kb, (Cout,), jnp.float32)
    gamma = 1.0 + 0.1 * jax.random.normal(kg, (Cout,), jnp.float32)       # BN affine params
    beta = 0.1 * jax.random.normal(ke, (Cout,), jnp.float32)
    # TODO(synk): BatchNorm running-stat (running_mean/var) updates are not modeled;
    # they do not affect the training-mode forward output.

    out = jax.block_until_ready(deconv_bn_relu(x, weight, bias, gamma, beta))

    ref = _reference(np.asarray(x, np.float64), np.asarray(weight, np.float64),
                     np.asarray(bias, np.float64), np.asarray(gamma, np.float64),
                     np.asarray(beta, np.float64))
    assert out.shape == (N, Cout, STRIDE * H, STRIDE * W), out.shape
    # bf16 matmul operands (f32 accumulation) -> relaxed tolerance vs float64 reference.
    np.testing.assert_allclose(np.asarray(out), ref, rtol=2e-2, atol=2e-2)
    print("KERNEL_OK")
</pallas_src>

<mosaic_0001>
module attributes {stable_mosaic.version = 11 : i64} {
  func.func @deconv_kernel(%arg0: i32, %arg1: i32, %arg2: memref<1x10x10x256xbf16, #tpu.memory_space<vmem>>, %arg3: memref<2x2x1024x128xbf16, #tpu.memory_space<vmem>>, %arg4: memref<1x8x2x8x256xf32, #tpu.memory_space<vmem>>, %arg5: memref<1x1x2x256xf32, #tpu.memory_space<vmem>>) attributes {dimension_semantics = [#tpu.dimension_semantics<parallel>, #tpu.dimension_semantics<parallel>], iteration_bounds = array<i64: 2, 1>, scalar_prefetch = 0 : i64, scratch_operands = 0 : i64, tpu.core_type = #tpu.core_type<tc>, window_params = [{transform_indices = @transform_0, window_bounds = array<i64: 1, 10, 10, 256>}, {pipeline_mode = #tpu.pipeline_mode<synchronous>, transform_indices = @transform_1, window_bounds = array<i64: 2, 2, 1024, 128>}, {transform_indices = @transform_2, window_bounds = array<i64: 1, 8, 2, 8, 256>}, {transform_indices = @transform_3, window_bounds = array<i64: 1, 1, 2, 256>}]} {
    %c8_i32 = arith.constant 8 : i32
    %0 = arith.muli %arg1, %c8_i32 : i32
    %1 = tpu.assume_multiple %0, 8 : i32
    %c0_i32 = arith.constant 0 : i32
    %2 = arith.addi %1, %c0_i32 : i32
    %c0 = arith.constant 0 : index
    %3 = arith.index_cast %2 : i32 to index
    %c0_0 = arith.constant 0 : index
    %c0_1 = arith.constant 0 : index
    %4 = vector.load %arg2[%c0, %3, %c0_0, %c0_1] : memref<1x10x10x256xbf16, #tpu.memory_space<vmem>>, vector<1x8x8x256xbf16>
    %5 = vector.shape_cast %4 : vector<1x8x8x256xbf16> to vector<8x8x256xbf16>
    %6 = vector.shape_cast %5 : vector<8x8x256xbf16> to vector<64x256xbf16>
    %c0_i32_2 = arith.constant 0 : i32
    %7 = arith.addi %1, %c0_i32_2 : i32
    %c0_3 = arith.constant 0 : index
    %8 = arith.index_cast %7 : i32 to index
    %c1 = arith.constant 1 : index
    %c0_4 = arith.constant 0 : index
    %9 = vector.load %arg2[%c0_3, %8, %c1, %c0_4] : memref<1x10x10x256xbf16, #tpu.memory_space<vmem>>, vector<1x8x8x256xbf16>
    %10 = vector.shape_cast %9 : vector<1x8x8x256xbf16> to vector<8x8x256xbf16>
    %11 = vector.shape_cast %10 : vector<8x8x256xbf16> to vector<64x256xbf16>
    %c0_i32_5 = arith.constant 0 : i32
    %12 = arith.addi %1, %c0_i32_5 : i32
    %c0_6 = arith.constant 0 : index
    %13 = arith.index_cast %12 : i32 to index
    %c2 = arith.constant 2 : index
    %c0_7 = arith.constant 0 : index
    %14 = vector.load %arg2[%c0_6, %13, %c2, %c0_7] : memref<1x10x10x256xbf16, #tpu.memory_space<vmem>>, vector<1x8x8x256xbf16>
    %15 = vector.shape_cast %14 : vector<1x8x8x256xbf16> to vector<8x8x256xbf16>
    %16 = vector.shape_cast %15 : vector<8x8x256xbf16> to vector<64x256xbf16>
    %c1_i32 = arith.constant 1 : i32
    %17 = arith.addi %1, %c1_i32 : i32
    %c0_8 = arith.constant 0 : index
    %18 = arith.index_cast %17 : i32 to index
    %c0_9 = arith.constant 0 : index
    %c0_10 = arith.constant 0 : index
    %19 = vector.load %arg2[%c0_8, %18, %c0_9, %c0_10] : memref<1x10x10x256xbf16, #tpu.memory_space<vmem>>, vector<1x8x8x256xbf16>
    %20 = vector.shape_cast %19 : vector<1x8x8x256xbf16> to vector<8x8x256xbf16>
    %21 = vector.shape_cast %20 : vector<8x8x256xbf16> to vector<64x256xbf16>
    %c1_i32_11 = arith.constant 1 : i32
    %22 = arith.addi %1, %c1_i32_11 : i32
    %c0_12 = arith.constant 0 : index
    %23 = arith.index_cast %22 : i32 to index
    %c1_13 = arith.constant 1 : index
    %c0_14 = arith.constant 0 : index
    %24 = vector.load %arg2[%c0_12, %23, %c1_13, %c0_14] : memref<1x10x10x256xbf16, #tpu.memory_space<vmem>>, vector<1x8x8x256xbf16>
    %25 = vector.shape_cast %24 : vector<1x8x8x256xbf16> to vector<8x8x256xbf16>
    %26 = vector.shape_cast %25 : vector<8x8x256xbf16> to vector<64x256xbf16>
    %c1_i32_15 = arith.constant 1 : i32
    %27 = arith.addi %1, %c1_i32_15 : i32
    %c0_16 = arith.constant 0 : index
    %28 = arith.index_cast %27 : i32 to index
    %c2_17 = arith.constant 2 : index
    %c0_18 = arith.constant 0 : index
    %29 = vector.load %arg2[%c0_16, %28, %c2_17, %c0_18] : memref<1x10x10x256xbf16, #tpu.memory_space<vmem>>, vector<1x8x8x256xbf16>
    %30 = vector.shape_cast %29 : vector<1x8x8x256xbf16> to vector<8x8x256xbf16>
    %31 = vector.shape_cast %30 : vector<8x8x256xbf16> to vector<64x256xbf16>
    %c2_i32 = arith.constant 2 : i32
    %32 = arith.addi %1, %c2_i32 : i32
    %c0_19 = arith.constant 0 : index
    %33 = arith.index_cast %32 : i32 to index
    %c0_20 = arith.constant 0 : index
    %c0_21 = arith.constant 0 : index
    %34 = vector.load %arg2[%c0_19, %33, %c0_20, %c0_21] : memref<1x10x10x256xbf16, #tpu.memory_space<vmem>>, vector<1x8x8x256xbf16>
    %35 = vector.shape_cast %34 : vector<1x8x8x256xbf16> to vector<8x8x256xbf16>
    %36 = vector.shape_cast %35 : vector<8x8x256xbf16> to vector<64x256xbf16>
    %c2_i32_22 = arith.constant 2 : i32
    %37 = arith.addi %1, %c2_i32_22 : i32
    %c0_23 = arith.constant 0 : index
    %38 = arith.index_cast %37 : i32 to index
    %c1_24 = arith.constant 1 : index
    %c0_25 = arith.constant 0 : index
    %39 = vector.load %arg2[%c0_23, %38, %c1_24, %c0_25] : memref<1x10x10x256xbf16, #tpu.memory_space<vmem>>, vector<1x8x8x256xbf16>
    %40 = vector.shape_cast %39 : vector<1x8x8x256xbf16> to vector<8x8x256xbf16>
    %41 = vector.shape_cast %40 : vector<8x8x256xbf16> to vector<64x256xbf16>
    %c2_i32_26 = arith.constant 2 : i32
    %42 = arith.addi %1, %c2_i32_26 : i32
    %c0_27 = arith.constant 0 : index
    %43 = arith.index_cast %42 : i32 to index
    %c2_28 = arith.constant 2 : index
    %c0_29 = arith.constant 0 : index
    %44 = vector.load %arg2[%c0_27, %43, %c2_28, %c0_29] : memref<1x10x10x256xbf16, #tpu.memory_space<vmem>>, vector<1x8x8x256xbf16>
    %45 = vector.shape_cast %44 : vector<1x8x8x256xbf16> to vector<8x8x256xbf16>
    %46 = vector.shape_cast %45 : vector<8x8x256xbf16> to vector<64x256xbf16>
    %cst = arith.constant 0.000000e+00 : f32
    %47 = vector.broadcast %cst : f32 to vector<1x256xf32>
    %cst_30 = arith.constant 0.000000e+00 : f32
    %48 = vector.broadcast %cst_30 : f32 to vector<1x256xf32>
    %49 = tpu.concatenate %6, %11, %21, %26 in 1 : vector<64x256xbf16>, vector<64x256xbf16>, vector<64x256xbf16>, vector<64x256xbf16> -> vector<64x1024xbf16>
    %c0_31 = arith.constant 0 : index
    %c0_32 = arith.constant 0 : index
    %c0_33 = arith.constant 0 : index
    %c0_34 = arith.constant 0 : index
    %50 = vector.load %arg3[%c0_31, %c0_32, %c0_33, %c0_34] : memref<2x2x1024x128xbf16, #tpu.memory_space<vmem>>, vector<1x1x1024x128xbf16>
    %51 = vector.shape_cast %50 : vector<1x1x1024x128xbf16> to vector<1024x128xbf16>
    %cst_35 = arith.constant dense<0.000000e+00> : vector<64x128xf32>
    %52 = tpu.matmul %49, %51, %cst_35 {dimension_numbers = #tpu.dot_dimension_numbers<[1], [0], [0], [1], [0, 0, 1, 1], [], []>} : vector<64x1024xbf16>, vector<1024x128xbf16>, vector<64x128xf32> -> vector<64x128xf32>
    %53 = tpu.concatenate %11, %16, %26, %31 in 1 : vector<64x256xbf16>, vector<64x256xbf16>, vector<64x256xbf16>, vector<64x256xbf16> -> vector<64x1024xbf16>
    %c0_36 = arith.constant 0 : index
    %c1_37 = arith.constant 1 : index
    %c0_38 = arith.constant 0 : index
    %c0_39 = arith.constant 0 : index
    %54 = vector.load %arg3[%c0_36, %c1_37, %c0_38, %c0_39] : memref<2x2x1024x128xbf16, #tpu.memory_space<vmem>>, vector<1x1x1024x128xbf16>
    %55 = vector.shape_cast %54 : vector<1x1x1024x128xbf16> to vector<1024x128xbf16>
    %cst_40 = arith.constant dense<0.000000e+00> : vector<64x128xf32>
    %56 = tpu.matmul %53, %55, %cst_40 {dimension_numbers = #tpu.dot_dimension_numbers<[1], [0], [0], [1], [0, 0, 1, 1], [], []>} : vector<64x1024xbf16>, vector<1024x128xbf16>, vector<64x128xf32> -> vector<64x128xf32>
    %57 = tpu.concatenate %52, %56 in 1 : vector<64x128xf32>, vector<64x128xf32> -> vector<64x256xf32>
    %cst_41 = arith.constant dense<0.000000e+00> : vector<256xf32>
    %58 = vector.multi_reduction <add>, %57, %cst_41 [0] : vector<64x256xf32> to vector<256xf32>
    %59 = vector.shape_cast %58 : vector<256xf32> to vector<1x256xf32>
    %60 = arith.addf %47, %59 : vector<1x256xf32>
    %61 = arith.mulf %57, %57 : vector<64x256xf32>
    %cst_42 = arith.constant dense<0.000000e+00> : vector<256xf32>
    %62 = vector.multi_reduction <add>, %61, %cst_42 [0] : vector<64x256xf32> to vector<256xf32>
    %63 = vector.shape_cast %62 : vector<256xf32> to vector<1x256xf32>
    %64 = arith.addf %48, %63 : vector<1x256xf32>
    %65 = vector.shape_cast %57 : vector<64x256xf32> to vector<8x8x256xf32>
    %c0_43 = arith.constant 0 : index
    %c0_44 = arith.constant 0 : index
    %c0_45 = arith.constant 0 : index
    %c0_46 = arith.constant 0 : index
    %c0_47 = arith.constant 0 : index
    %66 = vector.load %arg4[%c0_43, %c0_44, %c0_45, %c0_46, %c0_47] : memref<1x8x2x8x256xf32, #tpu.memory_space<vmem>>, vector<1x8x1x8x256xf32>
    %67 = vector.shape_cast %66 : vector<1x8x1x8x256xf32> to vector<8x8x256xf32>
    %68 = vector.shape_cast %65 : vector<8x8x256xf32> to vector<1x8x1x8x256xf32>
    tpu.vector_store %arg4[%c0_43, %c0_44, %c0_45, %c0_46, %c0_47], %68 {strides = array<i32>} : memref<1x8x2x8x256xf32, #tpu.memory_space<vmem>>, vector<1x8x1x8x256xf32>,
    %69 = tpu.concatenate %21, %26, %36, %41 in 1 : vector<64x256xbf16>, vector<64x256xbf16>, vector<64x256xbf16>, vector<64x256xbf16> -> vector<64x1024xbf16>
    %c1_48 = arith.constant 1 : index
    %c0_49 = arith.constant 0 : index
    %c0_50 = arith.constant 0 : index
    %c0_51 = arith.constant 0 : index
    %70 = vector.load %arg3[%c1_48, %c0_49, %c0_50, %c0_51] : memref<2x2x1024x128xbf16, #tpu.memory_space<vmem>>, vector<1x1x1024x128xbf16>
    %71 = vector.shape_cast %70 : vector<1x1x1024x128xbf16> to vector<1024x128xbf16>
    %cst_52 = arith.constant dense<0.000000e+00> : vector<64x128xf32>
    %72 = tpu.matmul %69, %71, %cst_52 {dimension_numbers = #tpu.dot_dimension_numbers<[1], [0], [0], [1], [0, 0, 1, 1], [], []>} : vector<64x1024xbf16>, vector<1024x128xbf16>, vector<64x128xf32> -> vector<64x128xf32>
    %73 = tpu.concatenate %26, %31, %41, %46 in 1 : vector<64x256xbf16>, vector<64x256xbf16>, vector<64x256xbf16>, vector<64x256xbf16> -> vector<64x1024xbf16>
    %c1_53 = arith.constant 1 : index
    %c1_54 = arith.constant 1 : index
    %c0_55 = arith.constant 0 : index
    %c0_56 = arith.constant 0 : index
    %74 = vector.load %arg3[%c1_53, %c1_54, %c0_55, %c0_56] : memref<2x2x1024x128xbf16, #tpu.memory_space<vmem>>, vector<1x1x1024x128xbf16>
    %75 = vector.shape_cast %74 : vector<1x1x1024x128xbf16> to vector<1024x128xbf16>
    %cst_57 = arith.constant dense<0.000000e+00> : vector<64x128xf32>
    %76 = tpu.matmul %73, %75, %cst_57 {dimension_numbers = #tpu.dot_dimension_numbers<[1], [0], [0], [1], [0, 0, 1, 1], [], []>} : vector<64x1024xbf16>, vector<1024x128xbf16>, vector<64x128xf32> -> vector<64x128xf32>
    %77 = tpu.concatenate %72, %76 in 1 : vector<64x128xf32>, vector<64x128xf32> -> vector<64x256xf32>
    %cst_58 = arith.constant dense<0.000000e+00> : vector<256xf32>
    %78 = vector.multi_reduction <add>, %77, %cst_58 [0] : vector<64x256xf32> to vector<256xf32>
    %79 = vector.shape_cast %78 : vector<256xf32> to vector<1x256xf32>
    %80 = arith.addf %60, %79 : vector<1x256xf32>
    %81 = arith.mulf %77, %77 : vector<64x256xf32>
    %cst_59 = arith.constant dense<0.000000e+00> : vector<256xf32>
    %82 = vector.multi_reduction <add>, %81, %cst_59 [0] : vector<64x256xf32> to vector<256xf32>
    %83 = vector.shape_cast %82 : vector<256xf32> to vector<1x256xf32>
    %84 = arith.addf %64, %83 : vector<1x256xf32>
    %85 = vector.shape_cast %77 : vector<64x256xf32> to vector<8x8x256xf32>
    %c0_60 = arith.constant 0 : index
    %c0_61 = arith.constant 0 : index
    %c1_62 = arith.constant 1 : index
    %c0_63 = arith.constant 0 : index
    %c0_64 = arith.constant 0 : index
    %86 = vector.load %arg4[%c0_60, %c0_61, %c1_62, %c0_63, %c0_64] : memref<1x8x2x8x256xf32, #tpu.memory_space<vmem>>, vector<1x8x1x8x256xf32>
    %87 = vector.shape_cast %86 : vector<1x8x1x8x256xf32> to vector<8x8x256xf32>
    %88 = vector.shape_cast %85 : vector<8x8x256xf32> to vector<1x8x1x8x256xf32>
    tpu.vector_store %arg4[%c0_60, %c0_61, %c1_62, %c0_63, %c0_64], %88 {strides = array<i32>} : memref<1x8x2x8x256xf32, #tpu.memory_space<vmem>>, vector<1x8x1x8x256xf32>,
    %c0_65 = arith.constant 0 : index
    %c0_66 = arith.constant 0 : index
    %c0_67 = arith.constant 0 : index
    %c0_68 = arith.constant 0 : index
    %89 = vector.load %arg5[%c0_65, %c0_66, %c0_67, %c0_68] : memref<1x1x2x256xf32, #tpu.memory_space<vmem>>, vector<1x1x1x256xf32>
    %90 = vector.shape_cast %89 : vector<1x1x1x256xf32> to vector<1x256xf32>
    %91 = vector.shape_cast %80 : vector<1x256xf32> to vector<1x1x1x256xf32>
    tpu.vector_store %arg5[%c0_65, %c0_66, %c0_67, %c0_68], %91 {strides = array<i32>} : memref<1x1x2x256xf32, #tpu.memory_space<vmem>>, vector<1x1x1x256xf32>,
    %c0_69 = arith.constant 0 : index
    %c0_70 = arith.constant 0 : index
    %c1_71 = arith.constant 1 : index
    %c0_72 = arith.constant 0 : index
    %92 = vector.load %arg5[%c0_69, %c0_70, %c1_71, %c0_72] : memref<1x1x2x256xf32, #tpu.memory_space<vmem>>, vector<1x1x1x256xf32>
    %93 = vector.shape_cast %92 : vector<1x1x1x256xf32> to vector<1x256xf32>
    %94 = vector.shape_cast %84 : vector<1x256xf32> to vector<1x1x1x256xf32>
    tpu.vector_store %arg5[%c0_69, %c0_70, %c1_71, %c0_72], %94 {strides = array<i32>} : memref<1x1x2x256xf32, #tpu.memory_space<vmem>>, vector<1x1x1x256xf32>,
    return
  }
  func.func @transform_0(%arg0: i32, %arg1: i32) -> (i32, i32, i32, i32) {
    %c0_i32 = arith.constant 0 : i32
    %c0_i32_0 = arith.constant 0 : i32
    %c0_i32_1 = arith.constant 0 : i32
    %c0_i32_2 = arith.constant 0 : i32
    return %arg0, %c0_i32, %c0_i32_0, %c0_i32_1 : i32, i32, i32, i32
  }
  func.func @transform_1(%arg0: i32, %arg1: i32) -> (i32, i32, i32, i32) {
    %c0_i32 = arith.constant 0 : i32
    %c0_i32_0 = arith.constant 0 : i32
    %c0_i32_1 = arith.constant 0 : i32
    %c0_i32_2 = arith.constant 0 : i32
    %c0_i32_3 = arith.constant 0 : i32
    return %c0_i32, %c0_i32_0, %c0_i32_1, %c0_i32_2 : i32, i32, i32, i32
  }
  func.func @transform_2(%arg0: i32, %arg1: i32) -> (i32, i32, i32, i32, i32) {
    %c0_i32 = arith.constant 0 : i32
    %c0_i32_0 = arith.constant 0 : i32
    %c0_i32_1 = arith.constant 0 : i32
    %c0_i32_2 = arith.constant 0 : i32
    return %arg0, %arg1, %c0_i32, %c0_i32_0, %c0_i32_1 : i32, i32, i32, i32, i32
  }
  func.func @transform_3(%arg0: i32, %arg1: i32) -> (i32, i32, i32, i32) {
    %c0_i32 = arith.constant 0 : i32
    %c0_i32_0 = arith.constant 0 : i32
    %c0_i32_1 = arith.constant 0 : i32
    return %arg0, %arg1, %c0_i32, %c0_i32_0 : i32, i32, i32, i32
  }
}

module attributes {stable_mosaic.version = 11 : i64} {
  func.func @bn_relu_kernel(%arg0: i32, %arg1: memref<256x128xf32, #tpu.memory_space<vmem>>, %arg2: memref<1x128xf32, #tpu.memory_space<vmem>>, %arg3: memref<1x128xf32, #tpu.memory_space<vmem>>, %arg4: memref<256x128xf32, #tpu.memory_space<vmem>>) attributes {dimension_semantics = [#tpu.dimension_semantics<parallel>], iteration_bounds = array<i64: 2>, scalar_prefetch = 0 : i64, scratch_operands = 0 : i64, tpu.core_type = #tpu.core_type<tc>, window_params = [{transform_indices = @transform_0, window_bounds = array<i64: 256, 128>}, {pipeline_mode = #tpu.pipeline_mode<synchronous>, transform_indices = @transform_1, window_bounds = array<i64: 1, 128>}, {pipeline_mode = #tpu.pipeline_mode<synchronous>, transform_indices = @transform_2, window_bounds = array<i64: 1, 128>}, {transform_indices = @transform_3, window_bounds = array<i64: 256, 128>}]} {
    %c0 = arith.constant 0 : index
    %c0_0 = arith.constant 0 : index
    %0 = vector.load %arg1[%c0, %c0_0] : memref<256x128xf32, #tpu.memory_space<vmem>>, vector<256x128xf32>
    %c0_1 = arith.constant 0 : index
    %c0_2 = arith.constant 0 : index
    %1 = vector.load %arg2[%c0_1, %c0_2] : memref<1x128xf32, #tpu.memory_space<vmem>>, vector<1x128xf32>
    %2 = vector.broadcast %1 : vector<1x128xf32> to vector<256x128xf32>
    %3 = arith.mulf %0, %2 : vector<256x128xf32>
    %c0_3 = arith.constant 0 : index
    %c0_4 = arith.constant 0 : index
    %4 = vector.load %arg3[%c0_3, %c0_4] : memref<1x128xf32, #tpu.memory_space<vmem>>, vector<1x128xf32>
    %5 = vector.broadcast %4 : vector<1x128xf32> to vector<256x128xf32>
    %6 = arith.addf %3, %5 : vector<256x128xf32>
    %cst = arith.constant 0.000000e+00 : f32
    %7 = vector.broadcast %cst : f32 to vector<256x128xf32>
    %8 = arith.maximumf %6, %7 : vector<256x128xf32>
    %c0_5 = arith.constant 0 : index
    %c0_6 = arith.constant 0 : index
    %9 = vector.load %arg4[%c0_5, %c0_6] : memref<256x128xf32, #tpu.memory_space<vmem>>, vector<256x128xf32>
    tpu.vector_store %arg4[%c0_5, %c0_6], %8 {strides = array<i32>} : memref<256x128xf32, #tpu.memory_space<vmem>>, vector<256x128xf32>,
    return
  }
  func.func @transform_0(%arg0: i32) -> (i32, i32) {
    %c0_i32 = arith.constant 0 : i32
    %c0_i32_0 = arith.constant 0 : i32
    return %arg0, %c0_i32 : i32, i32
  }
  func.func @transform_1(%arg0: i32) -> (i32, i32) {
    %c0_i32 = arith.constant 0 : i32
    %c0_i32_0 = arith.constant 0 : i32
    %c0_i32_1 = arith.constant 0 : i32
    return %c0_i32, %c0_i32_0 : i32, i32
  }
  func.func @transform_2(%arg0: i32) -> (i32, i32) {
    %c0_i32 = arith.constant 0 : i32
    %c0_i32_0 = arith.constant 0 : i32
    %c0_i32_1 = arith.constant 0 : i32
    return %c0_i32, %c0_i32_0 : i32, i32
  }
  func.func @transform_3(%arg0: i32) -> (i32, i32) {
    %c0_i32 = arith.constant 0 : i32
    %c0_i32_0 = arith.constant 0 : i32
    return %arg0, %c0_i32 : i32, i32
  }
}

</mosaic_0001>

<llo_original>
// kernel: deconv_bn_relu.3
$region0: #{deconv_bn_relu.3}
  #allocation0 [shape = 'u32[]', space=smem, size = 0x4, offset = 0x4, fixed_abs, tag = 'smem constant byte address 0x4 - core index']
  #allocation1 [shape = 'u32[144,128]{1,0:T(1,128)}', space=vmem, size = 0x12000, scoped, tag = 'internal scratch']
  %s0 = inlined_call_operand.vmem [shape: f32[512,128], index: 0, kind: input, shape index: {}]
  %s1 = inlined_call_operand.vmem [shape: f32[1,128], index: 1, kind: input, shape index: {}]
  %s2 = inlined_call_operand.vmem [shape: f32[1,128], index: 2, kind: input, shape index: {}]
  %s3 = inlined_call_operand.hbm [shape: f32[512,128], index: 3, kind: output, shape index: {}]
  %s4 = sld [smem:[#allocation0]]
  $region45: #{deconv_bn_relu.3} parent=0
    _
  %s6 = ssub.s32 1, %s4
  %s7 = scalar_select 0, %s6, %s4
  $region1: #{deconv_bn_relu.3} parent=0
    #allocation2 [shape = 'u8[262144]{0}', space=vmem, size = 0x40000, scoped, tag = 'output window, operand 0']
    #allocation3 [shape = 's32[2]{0}', space=sflag, size = 0x8, scoped, tag = 'scoped memory for deconv_bn_relu.3']
    %8 = vsyncpa [#allocation3], 0
    %s9 = scalar_lea.sflag [#allocation3], 1
    %10 = vsyncpa %s9, 0
    loop: start=0, step=1, limit=4
    $region2: #{deconv_bn_relu.3} parent=1 // loop_pre_header
      _
    $region3: #{deconv_bn_relu.3} parent=1 // loop_header
      %s12 = sphi 0, %s16
      %p13 = scmp.ge.s32.totalorder %s12, 4
      %s22 = sphi 0, %s24
      %s25 = sphi 0, %s22
      %s26 = sphi 0, %s25
      %s42 = sphi 0, %s26
      %s46 = sphi 0, %s46
      %s48 = sphi 0, %s46
      %s49 = sphi 0, %s48
      %s63 = sphi 0, %s49
      %s67 = sphi 0, %s67
      %s69 = sphi 0, %s67
      %s70 = sphi 0, %s69
      %s84 = sphi 0, %s70
      %s90 = sphi 0, %s92
      %s93 = sphi 0, %s90
      %s94 = sphi 0, %s93
      %s110 = sphi 0, %s94
    $region4: #{deconv_bn_relu.3} parent=1 // loop_header_branch
      %15 = sbr.rel (%p13) target = $region8
    $region5: #{deconv_bn_relu.3} parent=1 // loop_body
      %s17 = ssub.s32 %s12, 1
      %s18 = ssub.s32 %s12, 2
      %s19 = sadd.s32 %s12, 1
      %s20 = ssub.s32 %s12, %s19
      %p21 = scmp.eq.s32.totalorder %s20, 0
      %s23 = sadd.s32 %s22, 1
      %s24 = scalar_select %p21, %s22, %s23
      %p27 = pneg %p21
      %p28 = scmp.eq.s32.totalorder %s12, 1
      %p29 = por %p27, %p28
      %p30 = scmp.ne.s32.totalorder %s22, %s25
      %p31 = scmp.eq.s32.totalorder %s12, 0
      %p32 = por %p30, %p31
      %p33 = scmp.ne.s32.totalorder %s22, %s25
      %p34 = scmp.eq.s32.totalorder %s17, 1
      %p35 = por %p33, %p34
      %p36 = scmp.ne.s32.totalorder %s25, %s26
      %p37 = scmp.eq.s32.totalorder %s17, 0
      %p38 = por %p36, %p37
      %p39 = scmp.ne.s32.totalorder %s25, %s26
      %p40 = scmp.eq.s32.totalorder %s18, 1
      %p41 = por %p39, %p40
      %p43 = scmp.ne.s32.totalorder %s26, %s42
      %p44 = scmp.eq.s32.totalorder %s18, 0
      %p45 = por %p43, %p44
      %s47 = sadd.s32 %s46, 1
      %p50 = scmp.eq.s32.totalorder %s12, 1
      %p51 = scmp.ne.s32.totalorder %s46, %s48
      %p52 = scmp.eq.s32.totalorder %s12, 0
      %p53 = por %p51, %p52
      %p54 = scmp.ne.s32.totalorder %s46, %s48
      %p55 = scmp.eq.s32.totalorder %s17, 1
      %p56 = por %p54, %p55
      %p57 = scmp.ne.s32.totalorder %s48, %s49
      %p58 = scmp.eq.s32.totalorder %s17, 0
      %p59 = por %p57, %p58
      %p60 = scmp.ne.s32.totalorder %s48, %s49
      %p61 = scmp.eq.s32.totalorder %s18, 1
      %p62 = por %p60, %p61
      %p64 = scmp.ne.s32.totalorder %s49, %s63
      %p65 = scmp.eq.s32.totalorder %s18, 0
      %p66 = por %p64, %p65
      %s68 = sadd.s32 %s67, 1
      %p71 = scmp.eq.s32.totalorder %s12, 1
      %p72 = scmp.ne.s32.totalorder %s67, %s69
      %p73 = scmp.eq.s32.totalorder %s12, 0
      %p74 = por %p72, %p73
      %p75 = scmp.ne.s32.totalorder %s67, %s69
      %p76 = scmp.eq.s32.totalorder %s17, 1
      %p77 = por %p75, %p76
      %p78 = scmp.ne.s32.totalorder %s69, %s70
      %p79 = scmp.eq.s32.totalorder %s17, 0
      %p80 = por %p78, %p79
      %p81 = scmp.ne.s32.totalorder %s69, %s70
      %p82 = scmp.eq.s32.totalorder %s18, 1
      %p83 = por %p81, %p82
      %p85 = scmp.ne.s32.totalorder %s70, %s84
      %p86 = scmp.eq.s32.totalorder %s18, 0
      %p87 = por %p85, %p86
      %s88 = ssub.s32 %s12, %s19
      %p89 = scmp.eq.s32.totalorder %s88, 0
      %s91 = sadd.s32 %s90, 1
      %s92 = scalar_select %p89, %s90, %s91
      %p95 = pneg %p89
      %p96 = scmp.eq.s32.totalorder %s12, 1
      %p97 = por %p95, %p96
      %p98 = scmp.ne.s32.totalorder %s90, %s93
      %p99 = scmp.eq.s32.totalorder %s12, 0
      %p100 = por %p98, %p99
      %p101 = scmp.ne.s32.totalorder %s90, %s93
      %p102 = scmp.eq.s32.totalorder %s17, 1
      %p103 = por %p101, %p102
      %p104 = scmp.ne.s32.totalorder %s93, %s94
      %p105 = scmp.eq.s32.totalorder %s17, 0
      %p106 = por %p104, %p105
      %p107 = scmp.ne.s32.totalorder %s93, %s94
      %p108 = scmp.eq.s32.totalorder %s18, 1
      %p109 = por %p107, %p108
      %p111 = scmp.ne.s32.totalorder %s94, %s110
      %p112 = scmp.eq.s32.totalorder %s18, 0
      %p113 = por %p111, %p112
      %p114 = scmp.le.s32.totalorder 1, %s12
      %p115 = scmp.lt.s32.totalorder %s12, 3
      %p116 = pnand %p114, %p115
      %p117 = pneg %p116
      // Predicated region
      $region9: #{deconv_bn_relu.3} parent=5 // pred_check
        _
      $region10: #{deconv_bn_relu.3} parent=5 // pred_check_branch
        %119 = sbr.rel (%p116) target = $region12
      $region11: #{deconv_bn_relu.3} parent=5 // pred_region
        %s120 = ssub.s32 %s12, 1
        // Predicated region
        $region13: #{deconv_bn_relu.3} parent=11 // pred_check
          %p121 = pneg %p59
        $region14: #{deconv_bn_relu.3} parent=11 // pred_check_branch
          %123 = sbr.rel (%p121) target = $region16
        $region15: #{deconv_bn_relu.3} parent=11 // pred_region
          _
        $region16: #{deconv_bn_relu.3} parent=11 // pred_fallthru
          _
        // Predicated region
        $region17: #{deconv_bn_relu.3} parent=11 // pred_check
          %p124 = pneg %p80
        $region18: #{deconv_bn_relu.3} parent=11 // pred_check_branch
          %126 = sbr.rel (%p124) target = $region20
        $region19: #{deconv_bn_relu.3} parent=11 // pred_region
          _
        $region20: #{deconv_bn_relu.3} parent=11 // pred_fallthru
          _
      $region12: #{deconv_bn_relu.3} parent=5 // pred_fallthru
        _
      %p127 = scmp.lt.s32.totalorder %s12, 2
      // Predicated region
      $region21: #{deconv_bn_relu.3} parent=5 // pred_check
        %p128 = pneg %p127
      $region22: #{deconv_bn_relu.3} parent=5 // pred_check_branch
        %130 = sbr.rel (%p128) target = $region24
      $region23: #{deconv_bn_relu.3} parent=5 // pred_region
        // Predicated region
        $region25: #{deconv_bn_relu.3} parent=23 // pred_check
          %p131 = pneg %p32
        $region26: #{deconv_bn_relu.3} parent=23 // pred_check_branch
          %133 = sbr.rel (%p131) target = $region28
        $region27: #{deconv_bn_relu.3} parent=23 // pred_region
          %s134 = smul.u32 32, %s12
          %p135 = scmp.lt.s32.totalorder %s134, 63
          %s136 = scalar_select %p135, %s134, 63
          %s137 = smul.addr %s136, 8
          %s138 = scalar_lea.vmem %s0, %s137
          %s139 = smul.u32 32, %s12
        $region28: #{deconv_bn_relu.3} parent=23 // pred_fallthru
          _
      $region24: #{deconv_bn_relu.3} parent=5 // pred_fallthru
        _
      %p140 = scmp.le.s32.totalorder 1, %s12
      %p141 = scmp.lt.s32.totalorder %s12, 3
      %p142 = pnand %p140, %p141
      %p143 = pneg %p142
      // Predicated region
      $region29: #{deconv_bn_relu.3} parent=5 // pred_check
        _
      $region30: #{deconv_bn_relu.3} parent=5 // pred_check_branch
        %145 = sbr.rel (%p142) target = $region32
      $region31: #{deconv_bn_relu.3} parent=5 // pred_region
        %s146 = ssub.s32 %s12, 1
        %s147 = smul.u32 32, %s17
        %p148 = scmp.lt.s32.totalorder %s147, 63
        %s149 = scalar_select %p148, %s147, 63
        %s150 = smul.addr %s149, 8
        %s151 = scalar_lea.vmem %s0, %s150
        %p152 = pneg %p38
        %p153 = pneg %p35
        %p154 = pneg %p59
        %p155 = pneg %p56
        %p156 = pneg %p80
        %p157 = pneg %p77
        %p158 = pneg %p106
        %p159 = pneg %p103
        %s160 = sand.u32 %s93, 1
        %s161 = scalar_lea.sflag [#allocation3], %s160
        %s162 = sand.u32 %s93, 1
        %s163 = smul.addr %s162, 256
        %s164 = scalar_lea.vmem [#allocation2], %s163
        %s165 = smul.u32 32, %s17
        %p166 = scmp.lt.s32.totalorder %s165, 63
        %s167 = scalar_select %p166, %s165, 63
        %s168 = smul.addr %s167, 8
        %s169 = scalar_lea.vmem %s0, %s168
        %s170 = smul.u32 32, %s17
        %s171 = smul.u32 32, %s17
        %v172 = vld [vmem:[%s169] sm:$0xff]
        %v173 = vld [vmem:[%s169 + $0x8] sm:$0xff]
        %v174 = vld [vmem:[%s169 + $0x10] sm:$0xff]
        %v175 = vld [vmem:[%s169 + $0x18] sm:$0xff]
        %v176 = vld [vmem:[%s169 + $0x20] sm:$0xff]
        %v177 = vld [vmem:[%s169 + $0x28] sm:$0xff]
        %v178 = vld [vmem:[%s169 + $0x30] sm:$0xff]
        %v179 = vld [vmem:[%s169 + $0x38] sm:$0xff]
        %v180 = vld [vmem:[%s169 + $0x40] sm:$0xff]
        %v181 = vld [vmem:[%s169 + $0x48] sm:$0xff]
        %v182 = vld [vmem:[%s169 + $0x50] sm:$0xff]
        %v183 = vld [vmem:[%s169 + $0x58] sm:$0xff]
        %v184 = vld [vmem:[%s169 + $0x60] sm:$0xff]
        %v185 = vld [vmem:[%s169 + $0x68] sm:$0xff]
        %v186 = vld [vmem:[%s169 + $0x70] sm:$0xff]
        %v187 = vld [vmem:[%s169 + $0x78] sm:$0xff]
        %v188 = vld [vmem:[%s169 + $0x80] sm:$0xff]
        %v189 = vld [vmem:[%s169 + $0x88] sm:$0xff]
        %v190 = vld [vmem:[%s169 + $0x90] sm:$0xff]
        %v191 = vld [vmem:[%s169 + $0x98] sm:$0xff]
        %v192 = vld [vmem:[%s169 + $0xa0] sm:$0xff]
        %v193 = vld [vmem:[%s169 + $0xa8] sm:$0xff]
        %v194 = vld [vmem:[%s169 + $0xb0] sm:$0xff]
        %v195 = vld [vmem:[%s169 + $0xb8] sm:$0xff]
        %v196 = vld [vmem:[%s169 + $0xc0] sm:$0xff]
        %v197 = vld [vmem:[%s169 + $0xc8] sm:$0xff]
        %v198 = vld [vmem:[%s169 + $0xd0] sm:$0xff]
        %v199 = vld [vmem:[%s169 + $0xd8] sm:$0xff]
        %v200 = vld [vmem:[%s169 + $0xe0] sm:$0xff]
        %v201 = vld [vmem:[%s169 + $0xe8] sm:$0xff]
        %v202 = vld [vmem:[%s169 + $0xf0] sm:$0xff]
        %v203 = vld [vmem:[%s169 + $0xf8] sm:$0xff]
        %v204 = vld [vmem:[%s1] sm:$0x1]
        %v206 = vlaneseq
        %v207 = vshrl.u32 %v206, 7
        %v208 = vsub.s32 0, %v207
        %v209 = vrot.slane %v204, %v208
        %v211 = vmul.f32 %v172, %v209
        %v212 = vmul.f32 %v173, %v209
        %v213 = vmul.f32 %v174, %v209
        %v214 = vmul.f32 %v175, %v209
        %v215 = vmul.f32 %v176, %v209
        %v216 = vmul.f32 %v177, %v209
        %v217 = vmul.f32 %v178, %v209
        %v218 = vmul.f32 %v179, %v209
        %v219 = vmul.f32 %v180, %v209
        %v220 = vmul.f32 %v181, %v209
        %v221 = vmul.f32 %v182, %v209
        %v222 = vmul.f32 %v183, %v209
        %v223 = vmul.f32 %v184, %v209
        %v224 = vmul.f32 %v185, %v209
        %v225 = vmul.f32 %v186, %v209
        %v226 = vmul.f32 %v187, %v209
        %v227 = vmul.f32 %v188, %v209
        %v228 = vmul.f32 %v189, %v209
        %v229 = vmul.f32 %v190, %v209
        %v230 = vmul.f32 %v191, %v209
        %v231 = vmul.f32 %v192, %v209
        %v232 = vmul.f32 %v193, %v209
        %v233 = vmul.f32 %v194, %v209
        %v234 = vmul.f32 %v195, %v209
        %v235 = vmul.f32 %v196, %v209
        %v236 = vmul.f32 %v197, %v209
        %v237 = vmul.f32 %v198, %v209
        %v238 = vmul.f32 %v199, %v209
        %v239 = vmul.f32 %v200, %v209
        %v240 = vmul.f32 %v201, %v209
        %v241 = vmul.f32 %v202, %v209
        %v242 = vmul.f32 %v203, %v209
        %v243 = vld [vmem:[%s2] sm:$0x1]
        %v245 = vlaneseq
        %v246 = vshrl.u32 %v245, 7
        %v247 = vsub.s32 0, %v246
        %v248 = vrot.slane %v243, %v247
        %v250 = vadd.f32 %v211, %v248
        %v251 = vadd.f32 %v212, %v248
        %v252 = vadd.f32 %v213, %v248
        %v253 = vadd.f32 %v214, %v248
        %v254 = vadd.f32 %v215, %v248
        %v255 = vadd.f32 %v216, %v248
        %v256 = vadd.f32 %v217, %v248
        %v257 = vadd.f32 %v218, %v248
        %v258 = vadd.f32 %v219, %v248
        %v259 = vadd.f32 %v220, %v248
        %v260 = vadd.f32 %v221, %v248
        %v261 = vadd.f32 %v222, %v248
        %v262 = vadd.f32 %v223, %v248
        %v263 = vadd.f32 %v224, %v248
        %v264 = vadd.f32 %v225, %v248
        %v265 = vadd.f32 %v226, %v248
        %v266 = vadd.f32 %v227, %v248
        %v267 = vadd.f32 %v228, %v248
        %v268 = vadd.f32 %v229, %v248
        %v269 = vadd.f32 %v230, %v248
        %v270 = vadd.f32 %v231, %v248
        %v271 = vadd.f32 %v232, %v248
        %v272 = vadd.f32 %v233, %v248
        %v273 = vadd.f32 %v234, %v248
        %v274 = vadd.f32 %v235, %v248
        %v275 = vadd.f32 %v236, %v248
        %v276 = vadd.f32 %v237, %v248
        %v277 = vadd.f32 %v238, %v248
        %v278 = vadd.f32 %v239, %v248
        %v279 = vadd.f32 %v240, %v248
        %v280 = vadd.f32 %v241, %v248
        %v281 = vadd.f32 %v242, %v248
        %v282 = vmax.f32 %v250, 0.0
        %v283 = vmax.f32 %v251, 0.0
        %v284 = vmax.f32 %v252, 0.0
        %v285 = vmax.f32 %v253, 0.0
        %v286 = vmax.f32 %v254, 0.0
        %v287 = vmax.f32 %v255, 0.0
        %v288 = vmax.f32 %v256, 0.0
        %v289 = vmax.f32 %v257, 0.0
        %v290 = vmax.f32 %v258, 0.0
        %v291 = vmax.f32 %v259, 0.0
        %v292 = vmax.f32 %v260, 0.0
        %v293 = vmax.f32 %v261, 0.0
        %v294 = vmax.f32 %v262, 0.0
        %v295 = vmax.f32 %v263, 0.0
        %v296 = vmax.f32 %v264, 0.0
        %v297 = vmax.f32 %v265, 0.0
        %v298 = vmax.f32 %v266, 0.0
        %v299 = vmax.f32 %v267, 0.0
        %v300 = vmax.f32 %v268, 0.0
        %v301 = vmax.f32 %v269, 0.0
        %v302 = vmax.f32 %v270, 0.0
        %v303 = vmax.f32 %v271, 0.0
        %v304 = vmax.f32 %v272, 0.0
        %v305 = vmax.f32 %v273, 0.0
        %v306 = vmax.f32 %v274, 0.0
        %v307 = vmax.f32 %v275, 0.0
        %v308 = vmax.f32 %v276, 0.0
        %v309 = vmax.f32 %v277, 0.0
        %v310 = vmax.f32 %v278, 0.0
        %v311 = vmax.f32 %v279, 0.0
        %v312 = vmax.f32 %v280, 0.0
        %v313 = vmax.f32 %v281, 0.0
        %314 = vst [vmem:[%s164] sm:$0xff] %v282
        %315 = vst [vmem:[%s164 + $0x8] sm:$0xff] %v283
        %316 = vst [vmem:[%s164 + $0x10] sm:$0xff] %v284
        %317 = vst [vmem:[%s164 + $0x18] sm:$0xff] %v285
        %318 = vst [vmem:[%s164 + $0x20] sm:$0xff] %v286
        %319 = vst [vmem:[%s164 + $0x28] sm:$0xff] %v287
        %320 = vst [vmem:[%s164 + $0x30] sm:$0xff] %v288
        %321 = vst [vmem:[%s164 + $0x38] sm:$0xff] %v289
        %322 = vst [vmem:[%s164 + $0x40] sm:$0xff] %v290
        %323 = vst [vmem:[%s164 + $0x48] sm:$0xff] %v291
        %324 = vst [vmem:[%s164 + $0x50] sm:$0xff] %v292
        %325 = vst [vmem:[%s164 + $0x58] sm:$0xff] %v293
        %326 = vst [vmem:[%s164 + $0x60] sm:$0xff] %v294
        %327 = vst [vmem:[%s164 + $0x68] sm:$0xff] %v295
        %328 = vst [vmem:[%s164 + $0x70] sm:$0xff] %v296
        %329 = vst [vmem:[%s164 + $0x78] sm:$0xff] %v297
        %330 = vst [vmem:[%s164 + $0x80] sm:$0xff] %v298
        %331 = vst [vmem:[%s164 + $0x88] sm:$0xff] %v299
        %332 = vst [vmem:[%s164 + $0x90] sm:$0xff] %v300
        %333 = vst [vmem:[%s164 + $0x98] sm:$0xff] %v301
        %334 = vst [vmem:[%s164 + $0xa0] sm:$0xff] %v302
        %335 = vst [vmem:[%s164 + $0xa8] sm:$0xff] %v303
        %336 = vst [vmem:[%s164 + $0xb0] sm:$0xff] %v304
        %337 = vst [vmem:[%s164 + $0xb8] sm:$0xff] %v305
        %338 = vst [vmem:[%s164 + $0xc0] sm:$0xff] %v306
        %339 = vst [vmem:[%s164 + $0xc8] sm:$0xff] %v307
        %340 = vst [vmem:[%s164 + $0xd0] sm:$0xff] %v308
        %341 = vst [vmem:[%s164 + $0xd8] sm:$0xff] %v309
        %342 = vst [vmem:[%s164 + $0xe0] sm:$0xff] %v310
        %343 = vst [vmem:[%s164 + $0xe8] sm:$0xff] %v311
        %344 = vst [vmem:[%s164 + $0xf0] sm:$0xff] %v312
        %345 = vst [vmem:[%s164 + $0xf8] sm:$0xff] %v313
        %s346 = sand.u32 %s93, 1
        %s347 = scalar_lea.sflag [#allocation3], %s346
        %s348 = sand.u32 %s93, 1
        %s349 = smul.addr %s348, 256
        %s350 = scalar_lea.vmem [#allocation2], %s349
        // Predicated region
        $region33: #{deconv_bn_relu.3} parent=31 // pred_check
          %p351 = pneg %p103
        $region34: #{deconv_bn_relu.3} parent=31 // pred_check_branch
          %353 = sbr.rel (%p351) target = $region36
        $region35: #{deconv_bn_relu.3} parent=31 // pred_region
          %s354 = smul.u32 32, %s17
          %s356 = ssub.s32 4096, 4096
          %357 = vsyncadd %s347, %s356
          %s358 = smul.addr %s354, 128
          %s359 = scalar_lea.hbm %s3, %s358
          %s360 = sshll.u32 %s350, 4
          %s361 = int_to_ptr.vmem [resolvable:$true] %s360
          %366 = dma.vmem_to_hbm [thread:$0]  %s361, 4096, %s359, %s347, 128, 128, 8
        $region36: #{deconv_bn_relu.3} parent=31 // pred_fallthru
          _
      $region32: #{deconv_bn_relu.3} parent=5 // pred_fallthru
        _
      %p367 = scmp.le.s32.totalorder 2, %s12
      // Predicated region
      $region37: #{deconv_bn_relu.3} parent=5 // pred_check
        %p368 = pneg %p367
      $region38: #{deconv_bn_relu.3} parent=5 // pred_check_branch
        %370 = sbr.rel (%p368) target = $region40
      $region39: #{deconv_bn_relu.3} parent=5 // pred_region
        %s371 = ssub.s32 %s12, 2
        // Predicated region
        $region41: #{deconv_bn_relu.3} parent=39 // pred_check
          %p372 = pneg %p109
        $region42: #{deconv_bn_relu.3} parent=39 // pred_check_branch
          %374 = sbr.rel (%p372) target = $region44
        $region43: #{deconv_bn_relu.3} parent=39 // pred_region
          %s375 = sand.u32 %s94, 1
          %s376 = scalar_lea.sflag [#allocation3], %s375
          %s377 = sand.u32 %s94, 1
          %s378 = smul.addr %s377, 256
          %s379 = scalar_lea.vmem [#allocation2], %s378
          %380 = dma.done %s376, 4096
        $region44: #{deconv_bn_relu.3} parent=39 // pred_fallthru
          _
      $region40: #{deconv_bn_relu.3} parent=5 // pred_fallthru
        _
    $region6: #{deconv_bn_relu.3} parent=1 // loop_footer
      %s16 = sadd.s32 1, %s12
    $region7: #{deconv_bn_relu.3} parent=1 // loop_footer_branch
      %11 = sbr.rel target = $region3
    $region8: #{deconv_bn_relu.3} parent=1 // loop_exit
      _
    %381 = vsyncpa [#allocation3], 1
    %s382 = scalar_lea.sflag [#allocation3], 1
    %383 = vsyncpa %s382, 1

// kernel: deconv_bn_relu.2
$region0: #{deconv_bn_relu.2}
  #allocation0 [shape = 'u32[]', space=smem, size = 0x4, offset = 0x4, fixed_abs, tag = 'smem constant byte address 0x4 - core index']
  #allocation1 [shape = 'u32[144,128]{1,0:T(1,128)}', space=vmem, size = 0x12000, scoped, tag = 'internal scratch']
  %s0 = inlined_call_operand.vmem [shape: bf16[2,10,10,256], index: 0, kind: input, shape index: {}]
  %s1 = inlined_call_operand.vmem [shape: bf16[2,2,1024,128], index: 1, kind: input, shape index: {}]
  %s2 = inlined_call_operand.vmem [shape: f32[2,8,2,8,256], index: 2, kind: output, shape index: {0}]
  %s3 = inlined_call_operand.vmem [shape: f32[2,1,2,256], index: 3, kind: output, shape index: {1}]
  %4 = xla_tuple %s2, %s3
  %s5 = sld [smem:[#allocation0]]
  $region49: #{deconv_bn_relu.2} parent=0
    _
  %s7 = ssub.s32 1, %s5
  %s8 = scalar_select 0, %s7, %s5
  loop: start=0, step=1, limit=4
  $region2: #{deconv_bn_relu.2} parent=0 // loop_pre_header
    _
  $region3: #{deconv_bn_relu.2} parent=0 // loop_header
    %s10 = sphi 0, %s14
    %p11 = scmp.ge.s32.totalorder %s10, 4
    %s17 = sphi 0, %s29
    %s18 = sphi 0, %s25
    %s19 = sphi 0, %s17
    %s20 = sphi 0, %s18
    %s21 = sphi 0, %s19
    %s22 = sphi 0, %s20
    %s32 = sphi 0, %s34
    %s35 = sphi 0, %s32
    %s36 = sphi 0, %s35
    %s52 = sphi 0, %s36
    %s56 = sphi 0, %s56
    %s58 = sphi 0, %s56
    %s59 = sphi 0, %s58
    %s73 = sphi 0, %s59
    %s81 = sphi 0, %s83
    %s84 = sphi 0, %s81
    %s85 = sphi 0, %s84
    %s101 = sphi 0, %s85
    %s109 = sphi 0, %s111
    %s112 = sphi 0, %s109
    %s113 = sphi 0, %s112
    %s129 = sphi 0, %s113
  $region4: #{deconv_bn_relu.2} parent=0 // loop_header_branch
    %13 = sbr.rel (%p11) target = $region8
  $region5: #{deconv_bn_relu.2} parent=0 // loop_body
    %s15 = ssub.s32 %s10, 1
    %s16 = ssub.s32 %s10, 2
    %s23 = sadd.s32 1, %s18
    %p24 = scmp.ge.s32.totalorder %s23, 1
    %s25 = scalar_select %p24, 0, %s23
    %s26 = sadd.s32 1, %s17
    %s27 = scalar_select %p24, %s26, %s17
    %p28 = scmp.ge.s32.totalorder %s27, 2
    %s29 = scalar_select %p28, 0, %s27
    %s30 = ssub.s32 %s17, %s29
    %p31 = scmp.eq.s32.totalorder %s30, 0
    %s33 = sadd.s32 %s32, 1
    %s34 = scalar_select %p31, %s32, %s33
    %p37 = pneg %p31
    %p38 = scmp.eq.s32.totalorder %s10, 1
    %p39 = por %p37, %p38
    %p40 = scmp.ne.s32.totalorder %s32, %s35
    %p41 = scmp.eq.s32.totalorder %s10, 0
    %p42 = por %p40, %p41
    %p43 = scmp.ne.s32.totalorder %s32, %s35
    %p44 = scmp.eq.s32.totalorder %s15, 1
    %p45 = por %p43, %p44
    %p46 = scmp.ne.s32.totalorder %s35, %s36
    %p47 = scmp.eq.s32.totalorder %s15, 0
    %p48 = por %p46, %p47
    %p49 = scmp.ne.s32.totalorder %s35, %s36
    %p50 = scmp.eq.s32.totalorder %s16, 1
    %p51 = por %p49, %p50
    %p53 = scmp.ne.s32.totalorder %s36, %s52
    %p54 = scmp.eq.s32.totalorder %s16, 0
    %p55 = por %p53, %p54
    %s57 = sadd.s32 %s56, 1
    %p60 = scmp.eq.s32.totalorder %s10, 1
    %p61 = scmp.ne.s32.totalorder %s56, %s58
    %p62 = scmp.eq.s32.totalorder %s10, 0
    %p63 = por %p61, %p62
    %p64 = scmp.ne.s32.totalorder %s56, %s58
    %p65 = scmp.eq.s32.totalorder %s15, 1
    %p66 = por %p64, %p65
    %p67 = scmp.ne.s32.totalorder %s58, %s59
    %p68 = scmp.eq.s32.totalorder %s15, 0
    %p69 = por %p67, %p68
    %p70 = scmp.ne.s32.totalorder %s58, %s59
    %p71 = scmp.eq.s32.totalorder %s16, 1
    %p72 = por %p70, %p71
    %p74 = scmp.ne.s32.totalorder %s59, %s73
    %p75 = scmp.eq.s32.totalorder %s16, 0
    %p76 = por %p74, %p75
    %s77 = ssub.s32 %s17, %s29
    %s78 = ssub.s32 %s18, %s25
    %s79 = sor.u32 %s77, %s78
    %p80 = scmp.eq.s32.totalorder %s79, 0
    %s82 = sadd.s32 %s81, 1
    %s83 = scalar_select %p80, %s81, %s82
    %p86 = pneg %p80
    %p87 = scmp.eq.s32.totalorder %s10, 1
    %p88 = por %p86, %p87
    %p89 = scmp.ne.s32.totalorder %s81, %s84
    %p90 = scmp.eq.s32.totalorder %s10, 0
    %p91 = por %p89, %p90
    %p92 = scmp.ne.s32.totalorder %s81, %s84
    %p93 = scmp.eq.s32.totalorder %s15, 1
    %p94 = por %p92, %p93
    %p95 = scmp.ne.s32.totalorder %s84, %s85
    %p96 = scmp.eq.s32.totalorder %s15, 0
    %p97 = por %p95, %p96
    %p98 = scmp.ne.s32.totalorder %s84, %s85
    %p99 = scmp.eq.s32.totalorder %s16, 1
    %p100 = por %p98, %p99
    %p102 = scmp.ne.s32.totalorder %s85, %s101
    %p103 = scmp.eq.s32.totalorder %s16, 0
    %p104 = por %p102, %p103
    %s105 = ssub.s32 %s17, %s29
    %s106 = ssub.s32 %s18, %s25
    %s107 = sor.u32 %s105, %s106
    %p108 = scmp.eq.s32.totalorder %s107, 0
    %s110 = sadd.s32 %s109, 1
    %s111 = scalar_select %p108, %s109, %s110
    %p114 = pneg %p108
    %p115 = scmp.eq.s32.totalorder %s10, 1
    %p116 = por %p114, %p115
    %p117 = scmp.ne.s32.totalorder %s109, %s112
    %p118 = scmp.eq.s32.totalorder %s10, 0
    %p119 = por %p117, %p118
    %p120 = scmp.ne.s32.totalorder %s109, %s112
    %p121 = scmp.eq.s32.totalorder %s15, 1
    %p122 = por %p120, %p121
    %p123 = scmp.ne.s32.totalorder %s112, %s113
    %p124 = scmp.eq.s32.totalorder %s15, 0
    %p125 = por %p123, %p124
    %p126 = scmp.ne.s32.totalorder %s112, %s113
    %p127 = scmp.eq.s32.totalorder %s16, 1
    %p128 = por %p126, %p127
    %p130 = scmp.ne.s32.totalorder %s113, %s129
    %p131 = scmp.eq.s32.totalorder %s16, 0
    %p132 = por %p130, %p131
    %p133 = scmp.le.s32.totalorder 1, %s10
    %p134 = scmp.lt.s32.totalorder %s10, 3
    %p135 = pnand %p133, %p134
    %p136 = pneg %p135
    // Predicated region
    $region9: #{deconv_bn_relu.2} parent=5 // pred_check
      _
    $region10: #{deconv_bn_relu.2} parent=5 // pred_check_branch
      %138 = sbr.rel (%p135) target = $region12
    $region11: #{deconv_bn_relu.2} parent=5 // pred_region
      %s139 = ssub.s32 %s10, 1
      // Predicated region
      $region13: #{deconv_bn_relu.2} parent=11 // pred_check
        %p140 = pneg %p69
      $region14: #{deconv_bn_relu.2} parent=11 // pred_check_branch
        %142 = sbr.rel (%p140) target = $region16
      $region15: #{deconv_bn_relu.2} parent=11 // pred_region
        _
      $region16: #{deconv_bn_relu.2} parent=11 // pred_fallthru
        _
    $region12: #{deconv_bn_relu.2} parent=5 // pred_fallthru
      _
    %p143 = scmp.lt.s32.totalorder %s10, 2
    // Predicated region
    $region17: #{deconv_bn_relu.2} parent=5 // pred_check
      %p144 = pneg %p143
    $region18: #{deconv_bn_relu.2} parent=5 // pred_check_branch
      %146 = sbr.rel (%p144) target = $region20
    $region19: #{deconv_bn_relu.2} parent=5 // pred_region
      // Predicated region
      $region21: #{deconv_bn_relu.2} parent=19 // pred_check
        %p147 = pneg %p42
      $region22: #{deconv_bn_relu.2} parent=19 // pred_check_branch
        %149 = sbr.rel (%p147) target = $region24
      $region23: #{deconv_bn_relu.2} parent=19 // pred_region
        %p150 = scmp.lt.s32.totalorder %s17, 1
        %s151 = scalar_select %p150, %s17, 1
        %s152 = smul.addr %s151, 40
        %s153 = smul.addr %s152, 4
        %s154 = scalar_lea.vmem %s0, %s153
      $region24: #{deconv_bn_relu.2} parent=19 // pred_fallthru
        _
    $region20: #{deconv_bn_relu.2} parent=5 // pred_fallthru
      _
    %p155 = scmp.le.s32.totalorder 1, %s10
    %p156 = scmp.lt.s32.totalorder %s10, 3
    %p157 = pnand %p155, %p156
    %p158 = pneg %p157
    // Predicated region
    $region25: #{deconv_bn_relu.2} parent=5 // pred_check
      _
    $region26: #{deconv_bn_relu.2} parent=5 // pred_check_branch
      %160 = sbr.rel (%p157) target = $region28
    $region27: #{deconv_bn_relu.2} parent=5 // pred_region
      %s161 = ssub.s32 %s10, 1
      %p162 = scmp.lt.s32.totalorder %s19, 1
      %s163 = scalar_select %p162, %s19, 1
      %s164 = smul.addr %s163, 40
      %s165 = smul.addr %s164, 4
      %s166 = scalar_lea.vmem %s0, %s165
      %p167 = pneg %p48
      %p168 = pneg %p45
      %p169 = pneg %p69
      %p170 = pneg %p66
      %p171 = pneg %p97
      %p172 = pneg %p94
      %s173 = smul.u32 8, %s20
      %p174 = scmp.lt.s32.totalorder %s19, 1
      %s175 = scalar_select %p174, %s19, 1
      %p176 = scmp.lt.s32.totalorder %s173, 7
      %s177 = scalar_select %p176, %s173, 7
      %s178 = smul.addr %s177, 4
      %s179 = smul.addr %s175, 32
      %s180 = sadd.s32 %s178, %s179
      %s181 = smul.addr %s180, 8
      %s182 = scalar_lea.vmem %s2, %s181
      %p183 = pneg %p125
      %p184 = pneg %p122
      %p185 = scmp.lt.s32.totalorder %s19, 1
      %s186 = scalar_select %p185, %s19, 1
      %p187 = scmp.lt.s32.totalorder %s20, 0
      %s188 = scalar_select %p187, %s20, 0
      %s189 = smul.addr %s188, 2
      %s190 = smul.addr %s186, 2
      %s191 = sadd.s32 %s189, %s190
      %s192 = smul.addr %s191, 2
      %s193 = scalar_lea.vmem %s3, %s192
      %p194 = scmp.lt.s32.totalorder %s19, 1
      %s195 = scalar_select %p194, %s19, 1
      %s196 = smul.addr %s195, 40
      %s197 = smul.addr %s196, 4
      %s198 = scalar_lea.vmem %s0, %s197
      %s199 = smul.u32 8, %s20
      %p200 = scmp.lt.s32.totalorder %s19, 1
      %s201 = scalar_select %p200, %s19, 1
      %p202 = scmp.lt.s32.totalorder %s199, 7
      %s203 = scalar_select %p202, %s199, 7
      %s204 = smul.addr %s203, 4
      %s205 = smul.addr %s201, 32
      %s206 = sadd.s32 %s204, %s205
      %s207 = smul.addr %s206, 8
      %s208 = scalar_lea.vmem %s2, %s207
      %s209 = smul.u32 8, %s20
      %p210 = scmp.lt.s32.totalorder %s19, 1
      %s211 = scalar_select %p210, %s19, 1
      %p212 = scmp.lt.s32.totalorder %s20, 0
      %s213 = scalar_select %p212, %s20, 0
      %s214 = smul.addr %s213, 2
      %s215 = smul.addr %s211, 2
      %s216 = sadd.s32 %s214, %s215
      %s217 = smul.addr %s216, 2
      %s218 = scalar_lea.vmem %s3, %s217
      %s220 = smul.u32 %s20, 8
      %s221 = smul.u32 %s220, 4
      %s222 = smul.addr %s221, 4
      %s223 = scalar_lea.vmem %s198, %s222
      %v224 = vld [vmem:[%s223] sm:$0xff]
      %v225 = vld [vmem:[%s223 + $0x10] sm:$0xff]
      %v226 = vld [vmem:[%s223 + $0x20] sm:$0xff]
      %v227 = vld [vmem:[%s223 + $0x30] sm:$0xff]
      %v228 = vld [vmem:[%s223 + $0x40] sm:$0xff]
      %v229 = vld [vmem:[%s223 + $0x50] sm:$0xff]
      %v230 = vld [vmem:[%s223 + $0x60] sm:$0xff]
      %v231 = vld [vmem:[%s223 + $0x70] sm:$0xff]
      %v232 = vld [vmem:[%s223 + $0x8] sm:$0x11]
      %v233 = vld [vmem:[%s223 + $0x18] sm:$0x11]
      %v234 = vld [vmem:[%s223 + $0x28] sm:$0x11]
      %v235 = vld [vmem:[%s223 + $0x38] sm:$0x11]
      %v236 = vld [vmem:[%s223 + $0x48] sm:$0x11]
      %v237 = vld [vmem:[%s223 + $0x58] sm:$0x11]
      %v238 = vld [vmem:[%s223 + $0x68] sm:$0x11]
      %v239 = vld [vmem:[%s223 + $0x78] sm:$0x11]
      %vm240 = vsmask.f32 3328
      %vm241 = vsmask.f32 7440
      %vm242 = vmor %vm240, %vm241
      %v244 = vshrl.u32 %v224, 16
      %v246 = vrot.slane %v244, 4
      %v247 = vshll.u32 %v224, 16
      %v249 = vrot.slane %v247, 5
      %v250 = vor.u32 %v246, %v249
      %v251 = vrot.slane %v250, 4
      %v253 = vshll.u32 %v232, 16
      %v255 = vrot.slane %v253, 5
      %v256 = vsel %vm242, %v251, %v255
      %v258 = vshrl.u32 %v225, 16
      %v260 = vrot.slane %v258, 4
      %v261 = vshll.u32 %v225, 16
      %v263 = vrot.slane %v261, 5
      %v264 = vor.u32 %v260, %v263
      %v265 = vrot.slane %v264, 4
      %v267 = vshll.u32 %v233, 16
      %v269 = vrot.slane %v267, 5
      %v270 = vsel %vm242, %v265, %v269
      %v272 = vshrl.u32 %v226, 16
      %v274 = vrot.slane %v272, 4
      %v275 = vshll.u32 %v226, 16
      %v277 = vrot.slane %v275, 5
      %v278 = vor.u32 %v274, %v277
      %v279 = vrot.slane %v278, 4
      %v281 = vshll.u32 %v234, 16
      %v283 = vrot.slane %v281, 5
      %v284 = vsel %vm242, %v279, %v283
      %v286 = vshrl.u32 %v227, 16
      %v288 = vrot.slane %v286, 4
      %v289 = vshll.u32 %v227, 16
      %v291 = vrot.slane %v289, 5
      %v292 = vor.u32 %v288, %v291
      %v293 = vrot.slane %v292, 4
      %v295 = vshll.u32 %v235, 16
      %v297 = vrot.slane %v295, 5
      %v298 = vsel %vm242, %v293, %v297
      %v300 = vshrl.u32 %v228, 16
      %v302 = vrot.slane %v300, 4
      %v303 = vshll.u32 %v228, 16
      %v305 = vrot.slane %v303, 5
      %v306 = vor.u32 %v302, %v305
      %v307 = vrot.slane %v306, 4
      %v309 = vshll.u32 %v236, 16
      %v311 = vrot.slane %v309, 5
      %v312 = vsel %vm242, %v307, %v311
      %v314 = vshrl.u32 %v229, 16
      %v316 = vrot.slane %v314, 4
      %v317 = vshll.u32 %v229, 16
      %v319 = vrot.slane %v317, 5
      %v320 = vor.u32 %v316, %v319
      %v321 = vrot.slane %v320, 4
      %v323 = vshll.u32 %v237, 16
      %v325 = vrot.slane %v323, 5
      %v326 = vsel %vm242, %v321, %v325
      %v328 = vshrl.u32 %v230, 16
      %v330 = vrot.slane %v328, 4
      %v331 = vshll.u32 %v230, 16
      %v333 = vrot.slane %v331, 5
      %v334 = vor.u32 %v330, %v333
      %v335 = vrot.slane %v334, 4
      %v337 = vshll.u32 %v238, 16
      %v339 = vrot.slane %v337, 5
      %v340 = vsel %vm242, %v335, %v339
      %v342 = vshrl.u32 %v231, 16
      %v344 = vrot.slane %v342, 4
      %v345 = vshll.u32 %v231, 16
      %v347 = vrot.slane %v345, 5
      %v348 = vor.u32 %v344, %v347
      %v349 = vrot.slane %v348, 4
      %v351 = vshll.u32 %v239, 16
      %v353 = vrot.slane %v351, 5
      %v354 = vsel %vm242, %v349, %v353
      %v355 = vld [vmem:[%s223] sm:$0xee]
      %v356 = vld [vmem:[%s223 + $0x10] sm:$0xee]
      %v357 = vld [vmem:[%s223 + $0x20] sm:$0xee]
      %v358 = vld [vmem:[%s223 + $0x30] sm:$0xee]
      %v359 = vld [vmem:[%s223 + $0x40] sm:$0xee]
      %v360 = vld [vmem:[%s223 + $0x50] sm:$0xee]
      %v361 = vld [vmem:[%s223 + $0x60] sm:$0xee]
      %v362 = vld [vmem:[%s223 + $0x70] sm:$0xee]
      %vm379 = vcmask 1042432
      %vm380 = vcmask 1046532
      %vm381 = vmor %vm379, %vm380
      %v382 = vrot.slane %v355, 5
      %v383 = vrot.slane %v382, 4
      %v384 = vrot.slane %v232, 5
      %v385 = vsel %vm381, %v383, %v384
      %v386 = vrot.slane %v356, 5
      %v387 = vrot.slane %v386, 4
      %v388 = vrot.slane %v233, 5
      %v389 = vsel %vm381, %v387, %v388
      %v390 = vrot.slane %v357, 5
      %v391 = vrot.slane %v390, 4
      %v392 = vrot.slane %v234, 5
      %v393 = vsel %vm381, %v391, %v392
      %v394 = vrot.slane %v358, 5
      %v395 = vrot.slane %v394, 4
      %v396 = vrot.slane %v235, 5
      %v397 = vsel %vm381, %v395, %v396
      %v398 = vrot.slane %v359, 5
      %v399 = vrot.slane %v398, 4
      %v400 = vrot.slane %v236, 5
      %v401 = vsel %vm381, %v399, %v400
      %v402 = vrot.slane %v360, 5
      %v403 = vrot.slane %v402, 4
      %v404 = vrot.slane %v237, 5
      %v405 = vsel %vm381, %v403, %v404
      %v406 = vrot.slane %v361, 5
      %v407 = vrot.slane %v406, 4
      %v408 = vrot.slane %v238, 5
      %v409 = vsel %vm381, %v407, %v408
      %v410 = vrot.slane %v362, 5
      %v411 = vrot.slane %v410, 4
      %v412 = vrot.slane %v239, 5
      %v413 = vsel %vm381, %v411, %v412
      %s414 = sadd.s32 %s220, 1
      %s415 = smul.u32 %s414, 4
      %s416 = smul.addr %s415, 4
      %s417 = scalar_lea.vmem %s198, %s416
      %v418 = vld [vmem:[%s417] sm:$0xff]
      %v419 = vld [vmem:[%s417 + $0x10] sm:$0xff]
      %v420 = vld [vmem:[%s417 + $0x20] sm:$0xff]
      %v421 = vld [vmem:[%s417 + $0x30] sm:$0xff]
      %v422 = vld [vmem:[%s417 + $0x40] sm:$0xff]
      %v423 = vld [vmem:[%s417 + $0x50] sm:$0xff]
      %v424 = vld [vmem:[%s417 + $0x60] sm:$0xff]
      %v425 = vld [vmem:[%s417 + $0x70] sm:$0xff]
      %v426 = vld [vmem:[%s417 + $0x8] sm:$0x11]
      %v427 = vld [vmem:[%s417 + $0x18] sm:$0x11]
      %v428 = vld [vmem:[%s417 + $0x28] sm:$0x11]
      %v429 = vld [vmem:[%s417 + $0x38] sm:$0x11]
      %v430 = vld [vmem:[%s417 + $0x48] sm:$0x11]
      %v431 = vld [vmem:[%s417 + $0x58] sm:$0x11]
      %v432 = vld [vmem:[%s417 + $0x68] sm:$0x11]
      %v433 = vld [vmem:[%s417 + $0x78] sm:$0x11]
      %v435 = vshrl.u32 %v418, 16
      %v437 = vrot.slane %v435, 4
      %v438 = vshll.u32 %v418, 16
      %v440 = vrot.slane %v438, 5
      %v441 = vor.u32 %v437, %v440
      %v442 = vrot.slane %v441, 4
      %v444 = vshll.u32 %v426, 16
      %v446 = vrot.slane %v444, 5
      %v447 = vsel %vm242, %v442, %v446
      %v449 = vshrl.u32 %v419, 16
      %v451 = vrot.slane %v449, 4
      %v452 = vshll.u32 %v419, 16
      %v454 = vrot.slane %v452, 5
      %v455 = vor.u32 %v451, %v454
      %v456 = vrot.slane %v455, 4
      %v458 = vshll.u32 %v427, 16
      %v460 = vrot.slane %v458, 5
      %v461 = vsel %vm242, %v456, %v460
      %v463 = vshrl.u32 %v420, 16
      %v465 = vrot.slane %v463, 4
      %v466 = vshll.u32 %v420, 16
      %v468 = vrot.slane %v466, 5
      %v469 = vor.u32 %v465, %v468
      %v470 = vrot.slane %v469, 4
      %v472 = vshll.u32 %v428, 16
      %v474 = vrot.slane %v472, 5
      %v475 = vsel %vm242, %v470, %v474
      %v477 = vshrl.u32 %v421, 16
      %v479 = vrot.slane %v477, 4
      %v480 = vshll.u32 %v421, 16
      %v482 = vrot.slane %v480, 5
      %v483 = vor.u32 %v479, %v482
      %v484 = vrot.slane %v483, 4
      %v486 = vshll.u32 %v429, 16
      %v488 = vrot.slane %v486, 5
      %v489 = vsel %vm242, %v484, %v488
      %v491 = vshrl.u32 %v422, 16
      %v493 = vrot.slane %v491, 4
      %v494 = vshll.u32 %v422, 16
      %v496 = vrot.slane %v494, 5
      %v497 = vor.u32 %v493, %v496
      %v498 = vrot.slane %v497, 4
      %v500 = vshll.u32 %v430, 16
      %v502 = vrot.slane %v500, 5
      %v503 = vsel %vm242, %v498, %v502
      %v505 = vshrl.u32 %v423, 16
      %v507 = vrot.slane %v505, 4
      %v508 = vshll.u32 %v423, 16
      %v510 = vrot.slane %v508, 5
      %v511 = vor.u32 %v507, %v510
      %v512 = vrot.slane %v511, 4
      %v514 = vshll.u32 %v431, 16
      %v516 = vrot.slane %v514, 5
      %v517 = vsel %vm242, %v512, %v516
      %v519 = vshrl.u32 %v424, 16
      %v521 = vrot.slane %v519, 4
      %v522 = vshll.u32 %v424, 16
      %v524 = vrot.slane %v522, 5
      %v525 = vor.u32 %v521, %v524
      %v526 = vrot.slane %v525, 4
      %v528 = vshll.u32 %v432, 16
      %v530 = vrot.slane %v528, 5
      %v531 = vsel %vm242, %v526, %v530
      %v533 = vshrl.u32 %v425, 16
      %v535 = vrot.slane %v533, 4
      %v536 = vshll.u32 %v425, 16
      %v538 = vrot.slane %v536, 5
      %v539 = vor.u32 %v535, %v538
      %v540 = vrot.slane %v539, 4
      %v542 = vshll.u32 %v433, 16
      %v544 = vrot.slane %v542, 5
      %v545 = vsel %vm242, %v540, %v544
      %v546 = vld [vmem:[%s417] sm:$0xee]
      %v547 = vld [vmem:[%s417 + $0x10] sm:$0xee]
      %v548 = vld [vmem:[%s417 + $0x20] sm:$0xee]
      %v549 = vld [vmem:[%s417 + $0x30] sm:$0xee]
      %v550 = vld [vmem:[%s417 + $0x40] sm:$0xee]
      %v551 = vld [vmem:[%s417 + $0x50] sm:$0xee]
      %v552 = vld [vmem:[%s417 + $0x60] sm:$0xee]
      %v553 = vld [vmem:[%s417 + $0x70] sm:$0xee]
      %v570 = vrot.slane %v546, 5
      %v571 = vrot.slane %v570, 4
      %v572 = vrot.slane %v426, 5
      %v573 = vsel %vm381, %v571, %v572
      %v574 = vrot.slane %v547, 5
      %v575 = vrot.slane %v574, 4
      %v576 = vrot.slane %v427, 5
      %v577 = vsel %vm381, %v575, %v576
      %v578 = vrot.slane %v548, 5
      %v579 = vrot.slane %v578, 4
      %v580 = vrot.slane %v428, 5
      %v581 = vsel %vm381, %v579, %v580
      %v582 = vrot.slane %v549, 5
      %v583 = vrot.slane %v582, 4
      %v584 = vrot.slane %v429, 5
      %v585 = vsel %vm381, %v583, %v584
      %v586 = vrot.slane %v550, 5
      %v587 = vrot.slane %v586, 4
      %v588 = vrot.slane %v430, 5
      %v589 = vsel %vm381, %v587, %v588
      %v590 = vrot.slane %v551, 5
      %v591 = vrot.slane %v590, 4
      %v592 = vrot.slane %v431, 5
      %v593 = vsel %vm381, %v591, %v592
      %v594 = vrot.slane %v552, 5
      %v595 = vrot.slane %v594, 4
      %v596 = vrot.slane %v432, 5
      %v597 = vsel %vm381, %v595, %v596
      %v598 = vrot.slane %v553, 5
      %v599 = vrot.slane %v598, 4
      %v600 = vrot.slane %v433, 5
      %v601 = vsel %vm381, %v599, %v600
      %s602 = sadd.s32 %s220, 2
      %s603 = smul.u32 %s602, 4
      %s604 = smul.addr %s603, 4
      %s605 = scalar_lea.vmem %s198, %s604
      %v606 = vld [vmem:[%s605] sm:$0xff]
      %v607 = vld [vmem:[%s605 + $0x10] sm:$0xff]
      %v608 = vld [vmem:[%s605 + $0x20] sm:$0xff]
      %v609 = vld [vmem:[%s605 + $0x30] sm:$0xff]
      %v610 = vld [vmem:[%s605 + $0x40] sm:$0xff]
      %v611 = vld [vmem:[%s605 + $0x50] sm:$0xff]
      %v612 = vld [vmem:[%s605 + $0x60] sm:$0xff]
      %v613 = vld [vmem:[%s605 + $0x70] sm:$0xff]
      %v614 = vld [vmem:[%s605 + $0x8] sm:$0x11]
      %v615 = vld [vmem:[%s605 + $0x18] sm:$0x11]
      %v616 = vld [vmem:[%s605 + $0x28] sm:$0x11]
      %v617 = vld [vmem:[%s605 + $0x38] sm:$0x11]
      %v618 = vld [vmem:[%s605 + $0x48] sm:$0x11]
      %v619 = vld [vmem:[%s605 + $0x58] sm:$0x11]
      %v620 = vld [vmem:[%s605 + $0x68] sm:$0x11]
      %v621 = vld [vmem:[%s605 + $0x78] sm:$0x11]
      %v623 = vshrl.u32 %v606, 16
      %v625 = vrot.slane %v623, 4
      %v626 = vshll.u32 %v606, 16
      %v628 = vrot.slane %v626, 5
      %v629 = vor.u32 %v625, %v628
      %v630 = vrot.slane %v629, 4
      %v632 = vshll.u32 %v614, 16
      %v634 = vrot.slane %v632, 5
      %v635 = vsel %vm242, %v630, %v634
      %v637 = vshrl.u32 %v607, 16
      %v639 = vrot.slane %v637, 4
      %v640 = vshll.u32 %v607, 16
      %v642 = vrot.slane %v640, 5
      %v643 = vor.u32 %v639, %v642
      %v644 = vrot.slane %v643, 4
      %v646 = vshll.u32 %v615, 16
      %v648 = vrot.slane %v646, 5
      %v649 = vsel %vm242, %v644, %v648
      %v651 = vshrl.u32 %v608, 16
      %v653 = vrot.slane %v651, 4
      %v654 = vshll.u32 %v608, 16
      %v656 = vrot.slane %v654, 5
      %v657 = vor.u32 %v653, %v656
      %v658 = vrot.slane %v657, 4
      %v660 = vshll.u32 %v616, 16
      %v662 = vrot.slane %v660, 5
      %v663 = vsel %vm242, %v658, %v662
      %v665 = vshrl.u32 %v609, 16
      %v667 = vrot.slane %v665, 4
      %v668 = vshll.u32 %v609, 16
      %v670 = vrot.slane %v668, 5
      %v671 = vor.u32 %v667, %v670
      %v672 = vrot.slane %v671, 4
      %v674 = vshll.u32 %v617, 16
      %v676 = vrot.slane %v674, 5
      %v677 = vsel %vm242, %v672, %v676
      %v679 = vshrl.u32 %v610, 16
      %v681 = vrot.slane %v679, 4
      %v682 = vshll.u32 %v610, 16
      %v684 = vrot.slane %v682, 5
      %v685 = vor.u32 %v681, %v684
      %v686 = vrot.slane %v685, 4
      %v688 = vshll.u32 %v618, 16
      %v690 = vrot.slane %v688, 5
      %v691 = vsel %vm242, %v686, %v690
      %v693 = vshrl.u32 %v611, 16
      %v695 = vrot.slane %v693, 4
      %v696 = vshll.u32 %v611, 16
      %v698 = vrot.slane %v696, 5
      %v699 = vor.u32 %v695, %v698
      %v700 = vrot.slane %v699, 4
      %v702 = vshll.u32 %v619, 16
      %v704 = vrot.slane %v702, 5
      %v705 = vsel %vm242, %v700, %v704
      %v707 = vshrl.u32 %v612, 16
      %v709 = vrot.slane %v707, 4
      %v710 = vshll.u32 %v612, 16
      %v712 = vrot.slane %v710, 5
      %v713 = vor.u32 %v709, %v712
      %v714 = vrot.slane %v713, 4
      %v716 = vshll.u32 %v620, 16
      %v718 = vrot.slane %v716, 5
      %v719 = vsel %vm242, %v714, %v718
      %v721 = vshrl.u32 %v613, 16
      %v723 = vrot.slane %v721, 4
      %v724 = vshll.u32 %v613, 16
      %v726 = vrot.slane %v724, 5
      %v727 = vor.u32 %v723, %v726
      %v728 = vrot.slane %v727, 4
      %v730 = vshll.u32 %v621, 16
      %v732 = vrot.slane %v730, 5
      %v733 = vsel %vm242, %v728, %v732
      %v734 = vld [vmem:[%s605] sm:$0xee]
      %v735 = vld [vmem:[%s605 + $0x10] sm:$0xee]
      %v736 = vld [vmem:[%s605 + $0x20] sm:$0xee]
      %v737 = vld [vmem:[%s605 + $0x30] sm:$0xee]
      %v738 = vld [vmem:[%s605 + $0x40] sm:$0xee]
      %v739 = vld [vmem:[%s605 + $0x50] sm:$0xee]
      %v740 = vld [vmem:[%s605 + $0x60] sm:$0xee]
      %v741 = vld [vmem:[%s605 + $0x70] sm:$0xee]
      %v758 = vrot.slane %v734, 5
      %v759 = vrot.slane %v758, 4
      %v760 = vrot.slane %v614, 5
      %v761 = vsel %vm381, %v759, %v760
      %v762 = vrot.slane %v735, 5
      %v763 = vrot.slane %v762, 4
      %v764 = vrot.slane %v615, 5
      %v765 = vsel %vm381, %v763, %v764
      %v766 = vrot.slane %v736, 5
      %v767 = vrot.slane %v766, 4
      %v768 = vrot.slane %v616, 5
      %v769 = vsel %vm381, %v767, %v768
      %v770 = vrot.slane %v737, 5
      %v771 = vrot.slane %v770, 4
      %v772 = vrot.slane %v617, 5
      %v773 = vsel %vm381, %v771, %v772
      %v774 = vrot.slane %v738, 5
      %v775 = vrot.slane %v774, 4
      %v776 = vrot.slane %v618, 5
      %v777 = vsel %vm381, %v775, %v776
      %v778 = vrot.slane %v739, 5
      %v779 = vrot.slane %v778, 4
      %v780 = vrot.slane %v619, 5
      %v781 = vsel %vm381, %v779, %v780
      %v782 = vrot.slane %v740, 5
      %v783 = vrot.slane %v782, 4
      %v784 = vrot.slane %v620, 5
      %v785 = vsel %vm381, %v783, %v784
      %v786 = vrot.slane %v741, 5
      %v787 = vrot.slane %v786, 4
      %v788 = vrot.slane %v621, 5
      %v789 = vsel %vm381, %v787, %v788
      %v798 = vunpack.c.l.b16 %v224
      %v799 = vunpack.c.h.b16 %v224
      %v800 = vunpack.c.l.b16 %v225
      %v801 = vunpack.c.h.b16 %v225
      %v802 = vunpack.c.l.b16 %v226
      %v803 = vunpack.c.h.b16 %v226
      %v804 = vunpack.c.l.b16 %v227
      %v805 = vunpack.c.h.b16 %v227
      %v806 = vunpack.c.l.b16 %v228
      %v807 = vunpack.c.h.b16 %v228
      %v808 = vunpack.c.l.b16 %v229
      %v809 = vunpack.c.h.b16 %v229
      %v810 = vunpack.c.l.b16 %v230
      %v811 = vunpack.c.h.b16 %v230
      %v812 = vunpack.c.l.b16 %v231
      %v813 = vunpack.c.h.b16 %v231
      %v814 = vpack.c.b16 %v800, %v798
      %v815 = vpack.c.b16 %v801, %v799
      %v816 = vpack.c.b16 %v804, %v802
      %v817 = vpack.c.b16 %v805, %v803
      %v818 = vpack.c.b16 %v808, %v806
      %v819 = vpack.c.b16 %v809, %v807
      %v820 = vpack.c.b16 %v812, %v810
      %v821 = vpack.c.b16 %v813, %v811
      %v830 = vunpack.c.l.b16 %v256
      %v831 = vunpack.c.h.b16 %v256
      %v832 = vunpack.c.l.b16 %v270
      %v833 = vunpack.c.h.b16 %v270
      %v834 = vunpack.c.l.b16 %v284
      %v835 = vunpack.c.h.b16 %v284
      %v836 = vunpack.c.l.b16 %v298
      %v837 = vunpack.c.h.b16 %v298
      %v838 = vunpack.c.l.b16 %v312
      %v839 = vunpack.c.h.b16 %v312
      %v840 = vunpack.c.l.b16 %v326
      %v841 = vunpack.c.h.b16 %v326
      %v842 = vunpack.c.l.b16 %v340
      %v843 = vunpack.c.h.b16 %v340
      %v844 = vunpack.c.l.b16 %v354
      %v845 = vunpack.c.h.b16 %v354
      %v846 = vpack.c.b16 %v832, %v830
      %v847 = vpack.c.b16 %v833, %v831
      %v848 = vpack.c.b16 %v836, %v834
      %v849 = vpack.c.b16 %v837, %v835
      %v850 = vpack.c.b16 %v840, %v838
      %v851 = vpack.c.b16 %v841, %v839
      %v852 = vpack.c.b16 %v844, %v842
      %v853 = vpack.c.b16 %v845, %v843
      %v870 = vunpack.c.l.b16 %v418
      %v871 = vunpack.c.h.b16 %v418
      %v872 = vunpack.c.l.b16 %v419
      %v873 = vunpack.c.h.b16 %v419
      %v874 = vunpack.c.l.b16 %v420
      %v875 = vunpack.c.h.b16 %v420
      %v876 = vunpack.c.l.b16 %v421
      %v877 = vunpack.c.h.b16 %v421
      %v878 = vunpack.c.l.b16 %v422
      %v879 = vunpack.c.h.b16 %v422
      %v880 = vunpack.c.l.b16 %v423
      %v881 = vunpack.c.h.b16 %v423
      %v882 = vunpack.c.l.b16 %v424
      %v883 = vunpack.c.h.b16 %v424
      %v884 = vunpack.c.l.b16 %v425
      %v885 = vunpack.c.h.b16 %v425
      %v886 = vpack.c.b16 %v872, %v870
      %v887 = vpack.c.b16 %v873, %v871
      %v888 = vpack.c.b16 %v876, %v874
      %v889 = vpack.c.b16 %v877, %v875
      %v890 = vpack.c.b16 %v880, %v878
      %v891 = vpack.c.b16 %v881, %v879
      %v892 = vpack.c.b16 %v884, %v882
      %v893 = vpack.c.b16 %v885, %v883
      %v902 = vunpack.c.l.b16 %v447
      %v903 = vunpack.c.h.b16 %v447
      %v904 = vunpack.c.l.b16 %v461
      %v905 = vunpack.c.h.b16 %v461
      %v906 = vunpack.c.l.b16 %v475
      %v907 = vunpack.c.h.b16 %v475
      %v908 = vunpack.c.l.b16 %v489
      %v909 = vunpack.c.h.b16 %v489
      %v910 = vunpack.c.l.b16 %v503
      %v911 = vunpack.c.h.b16 %v503
      %v912 = vunpack.c.l.b16 %v517
      %v913 = vunpack.c.h.b16 %v517
      %v914 = vunpack.c.l.b16 %v531
      %v915 = vunpack.c.h.b16 %v531
      %v916 = vunpack.c.l.b16 %v545
      %v917 = vunpack.c.h.b16 %v545
      %v918 = vpack.c.b16 %v904, %v902
      %v919 = vpack.c.b16 %v905, %v903
      %v920 = vpack.c.b16 %v908, %v906
      %v921 = vpack.c.b16 %v909, %v907
      %v922 = vpack.c.b16 %v912, %v910
      %v923 = vpack.c.b16 %v913, %v911
      %v924 = vpack.c.b16 %v916, %v914
      %v925 = vpack.c.b16 %v917, %v915
      %v934 = vld [vmem:[%s1] sm:$0xf]
      %v935 = vld [vmem:[%s1 + $0x4] sm:$0xf]
      %v936 = vld [vmem:[%s1 + $0x8] sm:$0xf]
      %v937 = vld [vmem:[%s1 + $0xc] sm:$0xf]
      %v938 = vld [vmem:[%s1 + $0x10] sm:$0xf]
      %v939 = vld [vmem:[%s1 + $0x14] sm:$0xf]
      %v940 = vld [vmem:[%s1 + $0x18] sm:$0xf]
      %v941 = vld [vmem:[%s1 + $0x1c] sm:$0xf]
      %v942 = vld [vmem:[%s1 + $0x20] sm:$0xf]
      %v943 = vld [vmem:[%s1 + $0x24] sm:$0xf]
      %v944 = vld [vmem:[%s1 + $0x28] sm:$0xf]
      %v945 = vld [vmem:[%s1 + $0x2c] sm:$0xf]
      %v946 = vld [vmem:[%s1 + $0x30] sm:$0xf]
      %v947 = vld [vmem:[%s1 + $0x34] sm:$0xf]
      %v948 = vld [vmem:[%s1 + $0x38] sm:$0xf]
      %v949 = vld [vmem:[%s1 + $0x3c] sm:$0xf]
      %v950 = vld [vmem:[%s1 + $0x40] sm:$0xf]
      %v951 = vld [vmem:[%s1 + $0x44] sm:$0xf]
      %v952 = vld [vmem:[%s1 + $0x48] sm:$0xf]
      %v953 = vld [vmem:[%s1 + $0x4c] sm:$0xf]
      %v954 = vld [vmem:[%s1 + $0x50] sm:$0xf]
      %v955 = vld [vmem:[%s1 + $0x54] sm:$0xf]
      %v956 = vld [vmem:[%s1 + $0x58] sm:$0xf]
      %v957 = vld [vmem:[%s1 + $0x5c] sm:$0xf]
      %v958 = vld [vmem:[%s1 + $0x60] sm:$0xf]
      %v959 = vld [vmem:[%s1 + $0x64] sm:$0xf]
      %v960 = vld [vmem:[%s1 + $0x68] sm:$0xf]
      %v961 = vld [vmem:[%s1 + $0x6c] sm:$0xf]
      %v962 = vld [vmem:[%s1 + $0x70] sm:$0xf]
      %v963 = vld [vmem:[%s1 + $0x74] sm:$0xf]
      %v964 = vld [vmem:[%s1 + $0x78] sm:$0xf]
      %v965 = vld [vmem:[%s1 + $0x7c] sm:$0xf]
      %v966 = vld [vmem:[%s1 + $0x80] sm:$0xf]
      %v967 = vld [vmem:[%s1 + $0x84] sm:$0xf]
      %v968 = vld [vmem:[%s1 + $0x88] sm:$0xf]
      %v969 = vld [vmem:[%s1 + $0x8c] sm:$0xf]
      %v970 = vld [vmem:[%s1 + $0x90] sm:$0xf]
      %v971 = vld [vmem:[%s1 + $0x94] sm:$0xf]
      %v972 = vld [vmem:[%s1 + $0x98] sm:$0xf]
      %v973 = vld [vmem:[%s1 + $0x9c] sm:$0xf]
      %v974 = vld [vmem:[%s1 + $0xa0] sm:$0xf]
      %v975 = vld [vmem:[%s1 + $0xa4] sm:$0xf]
      %v976 = vld [vmem:[%s1 + $0xa8] sm:$0xf]
      %v977 = vld [vmem:[%s1 + $0xac] sm:$0xf]
      %v978 = vld [vmem:[%s1 + $0xb0] sm:$0xf]
      %v979 = vld [vmem:[%s1 + $0xb4] sm:$0xf]
      %v980 = vld [vmem:[%s1 + $0xb8] sm:$0xf]
      %v981 = vld [vmem:[%s1 + $0xbc] sm:$0xf]
      %v982 = vld [vmem:[%s1 + $0xc0] sm:$0xf]
      %v983 = vld [vmem:[%s1 + $0xc4] sm:$0xf]
      %v984 = vld [vmem:[%s1 + $0xc8] sm:$0xf]
      %v985 = vld [vmem:[%s1 + $0xcc] sm:$0xf]
      %v986 = vld [vmem:[%s1 + $0xd0] sm:$0xf]
      %v987 = vld [vmem:[%s1 + $0xd4] sm:$0xf]
      %v988 = vld [vmem:[%s1 + $0xd8] sm:$0xf]
      %v989 = vld [vmem:[%s1 + $0xdc] sm:$0xf]
      %v990 = vld [vmem:[%s1 + $0xe0] sm:$0xf]
      %v991 = vld [vmem:[%s1 + $0xe4] sm:$0xf]
      %v992 = vld [vmem:[%s1 + $0xe8] sm:$0xf]
      %v993 = vld [vmem:[%s1 + $0xec] sm:$0xf]
      %v994 = vld [vmem:[%s1 + $0xf0] sm:$0xf]
      %v995 = vld [vmem:[%s1 + $0xf4] sm:$0xf]
      %v996 = vld [vmem:[%s1 + $0xf8] sm:$0xf]
      %v997 = vld [vmem:[%s1 + $0xfc] sm:$0xf]
      %v998 = vld [vmem:[%s1 + $0x100] sm:$0xf]
      %v999 = vld [vmem:[%s1 + $0x104] sm:$0xf]
      %v1000 = vld [vmem:[%s1 + $0x108] sm:$0xf]
      %v1001 = vld [vmem:[%s1 + $0x10c] sm:$0xf]
      %v1002 = vld [vmem:[%s1 + $0x110] sm:$0xf]
      %v1003 = vld [vmem:[%s1 + $0x114] sm:$0xf]
      %v1004 = vld [vmem:[%s1 + $0x118] sm:$0xf]
      %v1005 = vld [vmem:[%s1 + $0x11c] sm:$0xf]
      %v1006 = vld [vmem:[%s1 + $0x120] sm:$0xf]
      %v1007 = vld [vmem:[%s1 + $0x124] sm:$0xf]
      %v1008 = vld [vmem:[%s1 + $0x128] sm:$0xf]
      %v1009 = vld [vmem:[%s1 + $0x12c] sm:$0xf]
      %v1010 = vld [vmem:[%s1 + $0x130] sm:$0xf]
      %v1011 = vld [vmem:[%s1 + $0x134] sm:$0xf]
      %v1012 = vld [vmem:[%s1 + $0x138] sm:$0xf]
      %v1013 = vld [vmem:[%s1 + $0x13c] sm:$0xf]
      %v1014 = vld [vmem:[%s1 + $0x140] sm:$0xf]
      %v1015 = vld [vmem:[%s1 + $0x144] sm:$0xf]
      %v1016 = vld [vmem:[%s1 + $0x148] sm:$0xf]
      %v1017 = vld [vmem:[%s1 + $0x14c] sm:$0xf]
      %v1018 = vld [vmem:[%s1 + $0x150] sm:$0xf]
      %v1019 = vld [vmem:[%s1 + $0x154] sm:$0xf]
      %v1020 = vld [vmem:[%s1 + $0x158] sm:$0xf]
      %v1021 = vld [vmem:[%s1 + $0x15c] sm:$0xf]
      %v1022 = vld [vmem:[%s1 + $0x160] sm:$0xf]
      %v1023 = vld [vmem:[%s1 + $0x164] sm:$0xf]
      %v1024 = vld [vmem:[%s1 + $0x168] sm:$0xf]
      %v1025 = vld [vmem:[%s1 + $0x16c] sm:$0xf]
      %v1026 = vld [vmem:[%s1 + $0x170] sm:$0xf]
      %v1027 = vld [vmem:[%s1 + $0x174] sm:$0xf]
      %v1028 = vld [vmem:[%s1 + $0x178] sm:$0xf]
      %v1029 = vld [vmem:[%s1 + $0x17c] sm:$0xf]
      %v1030 = vld [vmem:[%s1 + $0x180] sm:$0xf]
      %v1031 = vld [vmem:[%s1 + $0x184] sm:$0xf]
      %v1032 = vld [vmem:[%s1 + $0x188] sm:$0xf]
      %v1033 = vld [vmem:[%s1 + $0x18c] sm:$0xf]
      %v1034 = vld [vmem:[%s1 + $0x190] sm:$0xf]
      %v1035 = vld [vmem:[%s1 + $0x194] sm:$0xf]
      %v1036 = vld [vmem:[%s1 + $0x198] sm:$0xf]
      %v1037 = vld [vmem:[%s1 + $0x19c] sm:$0xf]
      %v1038 = vld [vmem:[%s1 + $0x1a0] sm:$0xf]
      %v1039 = vld [vmem:[%s1 + $0x1a4] sm:$0xf]
      %v1040 = vld [vmem:[%s1 + $0x1a8] sm:$0xf]
      %v1041 = vld [vmem:[%s1 + $0x1ac] sm:$0xf]
      %v1042 = vld [vmem:[%s1 + $0x1b0] sm:$0xf]
      %v1043 = vld [vmem:[%s1 + $0x1b4] sm:$0xf]
      %v1044 = vld [vmem:[%s1 + $0x1b8] sm:$0xf]
      %v1045 = vld [vmem:[%s1 + $0x1bc] sm:$0xf]
      %v1046 = vld [vmem:[%s1 + $0x1c0] sm:$0xf]
      %v1047 = vld [vmem:[%s1 + $0x1c4] sm:$0xf]
      %v1048 = vld [vmem:[%s1 + $0x1c8] sm:$0xf]
      %v1049 = vld [vmem:[%s1 + $0x1cc] sm:$0xf]
      %v1050 = vld [vmem:[%s1 + $0x1d0] sm:$0xf]
      %v1051 = vld [vmem:[%s1 + $0x1d4] sm:$0xf]
      %v1052 = vld [vmem:[%s1 + $0x1d8] sm:$0xf]
      %v1053 = vld [vmem:[%s1 + $0x1dc] sm:$0xf]
      %v1054 = vld [vmem:[%s1 + $0x1e0] sm:$0xf]
      %v1055 = vld [vmem:[%s1 + $0x1e4] sm:$0xf]
      %v1056 = vld [vmem:[%s1 + $0x1e8] sm:$0xf]
      %v1057 = vld [vmem:[%s1 + $0x1ec] sm:$0xf]
      %v1058 = vld [vmem:[%s1 + $0x1f0] sm:$0xf]
      %v1059 = vld [vmem:[%s1 + $0x1f4] sm:$0xf]
      %v1060 = vld [vmem:[%s1 + $0x1f8] sm:$0xf]
      %v1061 = vld [vmem:[%s1 + $0x1fc] sm:$0xf]
      %v1190 = vunpack.c.l.b16 %v934
      %v1191 = vunpack.c.l.b16 %v935
      %v1192 = vunpack.c.l.b16 %v936
      %v1193 = vunpack.c.l.b16 %v937
      %v1194 = vunpack.c.l.b16 %v938
      %v1195 = vunpack.c.l.b16 %v939
      %v1196 = vunpack.c.l.b16 %v940
      %v1197 = vunpack.c.l.b16 %v941
      %v1198 = vunpack.c.l.b16 %v942
      %v1199 = vunpack.c.l.b16 %v943
      %v1200 = vunpack.c.l.b16 %v944
      %v1201 = vunpack.c.l.b16 %v945
      %v1202 = vunpack.c.l.b16 %v946
      %v1203 = vunpack.c.l.b16 %v947
      %v1204 = vunpack.c.l.b16 %v948
      %v1205 = vunpack.c.l.b16 %v949
      %v1206 = vunpack.c.l.b16 %v950
      %v1207 = vunpack.c.l.b16 %v951
      %v1208 = vunpack.c.l.b16 %v952
      %v1209 = vunpack.c.l.b16 %v953
      %v1210 = vunpack.c.l.b16 %v954
      %v1211 = vunpack.c.l.b16 %v955
      %v1212 = vunpack.c.l.b16 %v956
      %v1213 = vunpack.c.l.b16 %v957
      %v1214 = vunpack.c.l.b16 %v958
      %v1215 = vunpack.c.l.b16 %v959
      %v1216 = vunpack.c.l.b16 %v960
      %v1217 = vunpack.c.l.b16 %v961
      %v1218 = vunpack.c.l.b16 %v962
      %v1219 = vunpack.c.l.b16 %v963
      %v1220 = vunpack.c.l.b16 %v964
      %v1221 = vunpack.c.l.b16 %v965
      %v1222 = vunpack.c.l.b16 %v966
      %v1223 = vunpack.c.l.b16 %v967
      %v1224 = vunpack.c.l.b16 %v968
      %v1225 = vunpack.c.l.b16 %v969
      %v1226 = vunpack.c.l.b16 %v970
      %v1227 = vunpack.c.l.b16 %v971
      %v1228 = vunpack.c.l.b16 %v972
      %v1229 = vunpack.c.l.b16 %v973
      %v1230 = vunpack.c.l.b16 %v974
      %v1231 = vunpack.c.l.b16 %v975
      %v1232 = vunpack.c.l.b16 %v976
      %v1233 = vunpack.c.l.b16 %v977
      %v1234 = vunpack.c.l.b16 %v978
      %v1235 = vunpack.c.l.b16 %v979
      %v1236 = vunpack.c.l.b16 %v980
      %v1237 = vunpack.c.l.b16 %v981
      %v1238 = vunpack.c.l.b16 %v982
      %v1239 = vunpack.c.l.b16 %v983
      %v1240 = vunpack.c.l.b16 %v984
      %v1241 = vunpack.c.l.b16 %v985
      %v1242 = vunpack.c.l.b16 %v986
      %v1243 = vunpack.c.l.b16 %v987
      %v1244 = vunpack.c.l.b16 %v988
      %v1245 = vunpack.c.l.b16 %v989
      %v1246 = vunpack.c.l.b16 %v990
      %v1247 = vunpack.c.l.b16 %v991
      %v1248 = vunpack.c.l.b16 %v992
      %v1249 = vunpack.c.l.b16 %v993
      %v1250 = vunpack.c.l.b16 %v994
      %v1251 = vunpack.c.l.b16 %v995
      %v1252 = vunpack.c.l.b16 %v996
      %v1253 = vunpack.c.l.b16 %v997
      %v1254 = vunpack.c.l.b16 %v998
      %v1255 = vunpack.c.l.b16 %v999
      %v1256 = vunpack.c.l.b16 %v1000
      %v1257 = vunpack.c.l.b16 %v1001
      %v1258 = vunpack.c.l.b16 %v1002
      %v1259 = vunpack.c.l.b16 %v1003
      %v1260 = vunpack.c.l.b16 %v1004
      %v1261 = vunpack.c.l.b16 %v1005
      %v1262 = vunpack.c.l.b16 %v1006
      %v1263 = vunpack.c.l.b16 %v1007
      %v1264 = vunpack.c.l.b16 %v1008
      %v1265 = vunpack.c.l.b16 %v1009
      %v1266 = vunpack.c.l.b16 %v1010
      %v1267 = vunpack.c.l.b16 %v1011
      %v1268 = vunpack.c.l.b16 %v1012
      %v1269 = vunpack.c.l.b16 %v1013
      %v1270 = vunpack.c.l.b16 %v1014
      %v1271 = vunpack.c.l.b16 %v1015
      %v1272 = vunpack.c.l.b16 %v1016
      %v1273 = vunpack.c.l.b16 %v1017
      %v1274 = vunpack.c.l.b16 %v1018
      %v1275 = vunpack.c.l.b16 %v1019
      %v1276 = vunpack.c.l.b16 %v1020
      %v1277 = vunpack.c.l.b16 %v1021
      %v1278 = vunpack.c.l.b16 %v1022
      %v1279 = vunpack.c.l.b16 %v1023
      %v1280 = vunpack.c.l.b16 %v1024
      %v1281 = vunpack.c.l.b16 %v1025
      %v1282 = vunpack.c.l.b16 %v1026
      %v1283 = vunpack.c.l.b16 %v1027
      %v1284 = vunpack.c.l.b16 %v1028
      %v1285 = vunpack.c.l.b16 %v1029
      %v1286 = vunpack.c.l.b16 %v1030
      %v1287 = vunpack.c.l.b16 %v1031
      %v1288 = vunpack.c.l.b16 %v1032
      %v1289 = vunpack.c.l.b16 %v1033
      %v1290 = vunpack.c.l.b16 %v1034
      %v1291 = vunpack.c.l.b16 %v1035
      %v1292 = vunpack.c.l.b16 %v1036
      %v1293 = vunpack.c.l.b16 %v1037
      %v1294 = vunpack.c.l.b16 %v1038
      %v1295 = vunpack.c.l.b16 %v1039
      %v1296 = vunpack.c.l.b16 %v1040
      %v1297 = vunpack.c.l.b16 %v1041
      %v1298 = vunpack.c.l.b16 %v1042
      %v1299 = vunpack.c.l.b16 %v1043
      %v1300 = vunpack.c.l.b16 %v1044
      %v1301 = vunpack.c.l.b16 %v1045
      %v1302 = vunpack.c.l.b16 %v1046
      %v1303 = vunpack.c.l.b16 %v1047
      %v1304 = vunpack.c.l.b16 %v1048
      %v1305 = vunpack.c.l.b16 %v1049
      %v1306 = vunpack.c.l.b16 %v1050
      %v1307 = vunpack.c.l.b16 %v1051
      %v1308 = vunpack.c.l.b16 %v1052
      %v1309 = vunpack.c.l.b16 %v1053
      %v1310 = vunpack.c.l.b16 %v1054
      %v1311 = vunpack.c.l.b16 %v1055
      %v1312 = vunpack.c.l.b16 %v1056
      %v1313 = vunpack.c.l.b16 %v1057
      %v1314 = vunpack.c.l.b16 %v1058
      %v1315 = vunpack.c.l.b16 %v1059
      %v1316 = vunpack.c.l.b16 %v1060
      %v1317 = vunpack.c.l.b16 %v1061
      %v1318 = vpack.c.b16 %v1191, %v1190
      %v1319 = vpack.c.b16 %v1193, %v1192
      %v1320 = vpack.c.b16 %v1195, %v1194
      %v1321 = vpack.c.b16 %v1197, %v1196
      %v1322 = vpack.c.b16 %v1199, %v1198
      %v1323 = vpack.c.b16 %v1201, %v1200
      %v1324 = vpack.c.b16 %v1203, %v1202
      %v1325 = vpack.c.b16 %v1205, %v1204
      %v1326 = vpack.c.b16 %v1207, %v1206
      %v1327 = vpack.c.b16 %v1209, %v1208
      %v1328 = vpack.c.b16 %v1211, %v1210
      %v1329 = vpack.c.b16 %v1213, %v1212
      %v1330 = vpack.c.b16 %v1215, %v1214
      %v1331 = vpack.c.b16 %v1217, %v1216
      %v1332 = vpack.c.b16 %v1219, %v1218
      %v1333 = vpack.c.b16 %v1221, %v1220
      %v1334 = vpack.c.b16 %v1223, %v1222
      %v1335 = vpack.c.b16 %v1225, %v1224
      %v1336 = vpack.c.b16 %v1227, %v1226
      %v1337 = vpack.c.b16 %v1229, %v1228
      %v1338 = vpack.c.b16 %v1231, %v1230
      %v1339 = vpack.c.b16 %v1233, %v1232
      %v1340 = vpack.c.b16 %v1235, %v1234
      %v1341 = vpack.c.b16 %v1237, %v1236
      %v1342 = vpack.c.b16 %v1239, %v1238
      %v1343 = vpack.c.b16 %v1241, %v1240
      %v1344 = vpack.c.b16 %v1243, %v1242
      %v1345 = vpack.c.b16 %v1245, %v1244
      %v1346 = vpack.c.b16 %v1247, %v1246
      %v1347 = vpack.c.b16 %v1249, %v1248
      %v1348 = vpack.c.b16 %v1251, %v1250
      %v1349 = vpack.c.b16 %v1253, %v1252
      %v1350 = vpack.c.b16 %v1255, %v1254
      %v1351 = vpack.c.b16 %v1257, %v1256
      %v1352 = vpack.c.b16 %v1259, %v1258
      %v1353 = vpack.c.b16 %v1261, %v1260
      %v1354 = vpack.c.b16 %v1263, %v1262
      %v1355 = vpack.c.b16 %v1265, %v1264
      %v1356 = vpack.c.b16 %v1267, %v1266
      %v1357 = vpack.c.b16 %v1269, %v1268
      %v1358 = vpack.c.b16 %v1271, %v1270
      %v1359 = vpack.c.b16 %v1273, %v1272
      %v1360 = vpack.c.b16 %v1275, %v1274
      %v1361 = vpack.c.b16 %v1277, %v1276
      %v1362 = vpack.c.b16 %v1279, %v1278
      %v1363 = vpack.c.b16 %v1281, %v1280
      %v1364 = vpack.c.b16 %v1283, %v1282
      %v1365 = vpack.c.b16 %v1285, %v1284
      %v1366 = vpack.c.b16 %v1287, %v1286
      %v1367 = vpack.c.b16 %v1289, %v1288
      %v1368 = vpack.c.b16 %v1291, %v1290
      %v1369 = vpack.c.b16 %v1293, %v1292
      %v1370 = vpack.c.b16 %v1295, %v1294
      %v1371 = vpack.c.b16 %v1297, %v1296
      %v1372 = vpack.c.b16 %v1299, %v1298
      %v1373 = vpack.c.b16 %v1301, %v1300
      %v1374 = vpack.c.b16 %v1303, %v1302
      %v1375 = vpack.c.b16 %v1305, %v1304
      %v1376 = vpack.c.b16 %v1307, %v1306
      %v1377 = vpack.c.b16 %v1309, %v1308
      %v1378 = vpack.c.b16 %v1311, %v1310
      %v1379 = vpack.c.b16 %v1313, %v1312
      %v1380 = vpack.c.b16 %v1315, %v1314
      %v1381 = vpack.c.b16 %v1317, %v1316
      %1446 = vmatprep.subr.bf16.mxu0 0
      %1447 = vmatpush1.bf16.msra.mxu0 %v1318
      %1448 = vmatprep.subr.bf16.mxu0 0
      %1449 = vmatpush1.bf16.msra.mxu0 %v1319
      %1450 = vmatprep.subr.bf16.mxu0 0
      %1451 = vmatpush1.bf16.msra.mxu0 %v1320
      %1452 = vmatprep.subr.bf16.mxu0 0
      %1453 = vmatpush1.bf16.msra.mxu0 %v1321
      %1454 = vmatprep.subr.bf16.mxu0 0
      %1455 = vmatpush1.bf16.msra.mxu0 %v1322
      %1456 = vmatprep.subr.bf16.mxu0 0
      %1457 = vmatpush1.bf16.msra.mxu0 %v1323
      %1458 = vmatprep.subr.bf16.mxu0 0
      %1459 = vmatpush1.bf16.msra.mxu0 %v1324
      %1460 = vmatprep.subr.bf16.mxu0 0
      %1461 = vmatpush1.bf16.msra.mxu0 %v1325
      %1462 = vmatprep.subr.bf16.mxu0 0
      %1463 = vmatpush1.bf16.msra.mxu0 %v1326
      %1464 = vmatprep.subr.bf16.mxu0 0
      %1465 = vmatpush1.bf16.msra.mxu0 %v1327
      %1466 = vmatprep.subr.bf16.mxu0 0
      %1467 = vmatpush1.bf16.msra.mxu0 %v1328
      %1468 = vmatprep.subr.bf16.mxu0 0
      %1469 = vmatpush1.bf16.msra.mxu0 %v1329
      %1470 = vmatprep.subr.bf16.mxu0 0
      %1471 = vmatpush1.bf16.msra.mxu0 %v1330
      %1472 = vmatprep.subr.bf16.mxu0 0
      %1473 = vmatpush1.bf16.msra.mxu0 %v1331
      %1474 = vmatprep.subr.bf16.mxu0 0
      %1475 = vmatpush1.bf16.msra.mxu0 %v1332
      %1476 = vmatprep.subr.bf16.mxu0 0
      %1477 = vmatpush1.bf16.msra.mxu0 %v1333
      %1478 = vmatprep.mubr.bf16.mxu0 %v815
      %1479 = vmatmul.mubr.bf16.gmra.mrb[0].mxu0 %v814
      %v1480 = vpop.f32.mrb[0].mxu0
      %v1481 = vadd.f32 0.0, %v1480
      %v1482 = vpop.f32.mrb[0].mxu0
      %v1483 = vpop.f32.mrb[0].mxu0
      %v1484 = vadd.f32 0.0, %v1483
      %v1485 = vpop.f32.mrb[0].mxu0
      %1486 = vmatprep.mubr.bf16.mxu0 %v817
      %1487 = vmatmul.mubr.bf16.gmra.mrb[0].mxu0 %v816
      %v1488 = vpop.f32.mrb[0].mxu0
      %v1489 = vadd.f32 0.0, %v1488
      %v1490 = vpop.f32.mrb[0].mxu0
      %v1491 = vpop.f32.mrb[0].mxu0
      %v1492 = vadd.f32 0.0, %v1491
      %v1493 = vpop.f32.mrb[0].mxu0
      %1494 = vmatprep.mubr.bf16.mxu0 %v819
      %1495 = vmatmul.mubr.bf16.gmra.mrb[0].mxu0 %v818
      %v1496 = vpop.f32.mrb[0].mxu0
      %v1497 = vadd.f32 0.0, %v1496
      %v1498 = vpop.f32.mrb[0].mxu0
      %v1499 = vpop.f32.mrb[0].mxu0
      %v1500 = vadd.f32 0.0, %v1499
      %v1501 = vpop.f32.mrb[0].mxu0
      %1502 = vmatprep.mubr.bf16.mxu0 %v821
      %1503 = vmatmul.mubr.bf16.gmra.mrb[0].mxu0 %v820
      %v1504 = vpop.f32.mrb[0].mxu0
      %v1505 = vadd.f32 0.0, %v1504
      %v1506 = vpop.f32.mrb[0].mxu0
      %v1507 = vpop.f32.mrb[0].mxu0
      %v1508 = vadd.f32 0.0, %v1507
      %v1509 = vpop.f32.mrb[0].mxu0
      %1510 = vdwg.mxu0
      %1511 = vmatprep.subr.bf16.mxu0 0
      %1512 = vmatpush1.bf16.msra.mxu0 %v1334
      %1513 = vmatprep.subr.bf16.mxu0 0
      %1514 = vmatpush1.bf16.msra.mxu0 %v1335
      %1515 = vmatprep.subr.bf16.mxu0 0
      %1516 = vmatpush1.bf16.msra.mxu0 %v1336
      %1517 = vmatprep.subr.bf16.mxu0 0
      %1518 = vmatpush1.bf16.msra.mxu0 %v1337
      %1519 = vmatprep.subr.bf16.mxu0 0
      %1520 = vmatpush1.bf16.msra.mxu0 %v1338
      %1521 = vmatprep.subr.bf16.mxu0 0
      %1522 = vmatpush1.bf16.msra.mxu0 %v1339
      %1523 = vmatprep.subr.bf16.mxu0 0
      %1524 = vmatpush1.bf16.msra.mxu0 %v1340
      %1525 = vmatprep.subr.bf16.mxu0 0
      %1526 = vmatpush1.bf16.msra.mxu0 %v1341
      %1527 = vmatprep.subr.bf16.mxu0 0
      %1528 = vmatpush1.bf16.msra.mxu0 %v1342
      %1529 = vmatprep.subr.bf16.mxu0 0
      %1530 = vmatpush1.bf16.msra.mxu0 %v1343
      %1531 = vmatprep.subr.bf16.mxu0 0
      %1532 = vmatpush1.bf16.msra.mxu0 %v1344
      %1533 = vmatprep.subr.bf16.mxu0 0
      %1534 = vmatpush1.bf16.msra.mxu0 %v1345
      %1535 = vmatprep.subr.bf16.mxu0 0
      %1536 = vmatpush1.bf16.msra.mxu0 %v1346
      %1537 = vmatprep.subr.bf16.mxu0 0
      %1538 = vmatpush1.bf16.msra.mxu0 %v1347
      %1539 = vmatprep.subr.bf16.mxu0 0
      %1540 = vmatpush1.bf16.msra.mxu0 %v1348
      %1541 = vmatprep.subr.bf16.mxu0 0
      %1542 = vmatpush1.bf16.msra.mxu0 %v1349
      %1543 = vmatprep.mubr.bf16.mxu0 %v847
      %1544 = vmatmul.mubr.bf16.gmra.mrb[0].mxu0 %v846
      %v1545 = vpop.f32.mrb[0].mxu0
      %v1546 = vadd.f32 %v1481, %v1545
      %v1547 = vpop.f32.mrb[0].mxu0
      %v1548 = vpop.f32.mrb[0].mxu0
      %v1549 = vadd.f32 %v1484, %v1548
      %v1550 = vpop.f32.mrb[0].mxu0
      %1551 = vmatprep.mubr.bf16.mxu0 %v849
      %1552 = vmatmul.mubr.bf16.gmra.mrb[0].mxu0 %v848
      %v1553 = vpop.f32.mrb[0].mxu0
      %v1554 = vadd.f32 %v1489, %v1553
      %v1555 = vpop.f32.mrb[0].mxu0
      %v1556 = vpop.f32.mrb[0].mxu0
      %v1557 = vadd.f32 %v1492, %v1556
      %v1558 = vpop.f32.mrb[0].mxu0
      %1559 = vmatprep.mubr.bf16.mxu0 %v851
      %1560 = vmatmul.mubr.bf16.gmra.mrb[0].mxu0 %v850
      %v1561 = vpop.f32.mrb[0].mxu0
      %v1562 = vadd.f32 %v1497, %v1561
      %v1563 = vpop.f32.mrb[0].mxu0
      %v1564 = vpop.f32.mrb[0].mxu0
      %v1565 = vadd.f32 %v1500, %v1564
      %v1566 = vpop.f32.mrb[0].mxu0
      %1567 = vmatprep.mubr.bf16.mxu0 %v853
      %1568 = vmatmul.mubr.bf16.gmra.mrb[0].mxu0 %v852
      %v1569 = vpop.f32.mrb[0].mxu0
      %v1570 = vadd.f32 %v1505, %v1569
      %v1571 = vpop.f32.mrb[0].mxu0
      %v1572 = vpop.f32.mrb[0].mxu0
      %v1573 = vadd.f32 %v1508, %v1572
      %v1574 = vpop.f32.mrb[0].mxu0
      %1575 = vdwg.mxu0
      %1576 = vmatprep.subr.bf16.mxu0 0
      %1577 = vmatpush1.bf16.msra.mxu0 %v1350
      %1578 = vmatprep.subr.bf16.mxu0 0
      %1579 = vmatpush1.bf16.msra.mxu0 %v1351
      %1580 = vmatprep.subr.bf16.mxu0 0
      %1581 = vmatpush1.bf16.msra.mxu0 %v1352
      %1582 = vmatprep.subr.bf16.mxu0 0
      %1583 = vmatpush1.bf16.msra.mxu0 %v1353
      %1584 = vmatprep.subr.bf16.mxu0 0
      %1585 = vmatpush1.bf16.msra.mxu0 %v1354
      %1586 = vmatprep.subr.bf16.mxu0 0
      %1587 = vmatpush1.bf16.msra.mxu0 %v1355
      %1588 = vmatprep.subr.bf16.mxu0 0
      %1589 = vmatpush1.bf16.msra.mxu0 %v1356
      %1590 = vmatprep.subr.bf16.mxu0 0
      %1591 = vmatpush1.bf16.msra.mxu0 %v1357
      %1592 = vmatprep.subr.bf16.mxu0 0
      %1593 = vmatpush1.bf16.msra.mxu0 %v1358
      %1594 = vmatprep.subr.bf16.mxu0 0
      %1595 = vmatpush1.bf16.msra.mxu0 %v1359
      %1596 = vmatprep.subr.bf16.mxu0 0
      %1597 = vmatpush1.bf16.msra.mxu0 %v1360
      %1598 = vmatprep.subr.bf16.mxu0 0
      %1599 = vmatpush1.bf16.msra.mxu0 %v1361
      %1600 = vmatprep.subr.bf16.mxu0 0
      %1601 = vmatpush1.bf16.msra.mxu0 %v1362
      %1602 = vmatprep.subr.bf16.mxu0 0
      %1603 = vmatpush1.bf16.msra.mxu0 %v1363
      %1604 = vmatprep.subr.bf16.mxu0 0
      %1605 = vmatpush1.bf16.msra.mxu0 %v1364
      %1606 = vmatprep.subr.bf16.mxu0 0
      %1607 = vmatpush1.bf16.msra.mxu0 %v1365
      %1608 = vmatprep.mubr.bf16.mxu0 %v887
      %1609 = vmatmul.mubr.bf16.gmra.mrb[0].mxu0 %v886
      %v1610 = vpop.f32.mrb[0].mxu0
      %v1611 = vadd.f32 %v1546, %v1610
      %v1612 = vpop.f32.mrb[0].mxu0
      %v1613 = vpop.f32.mrb[0].mxu0
      %v1614 = vadd.f32 %v1549, %v1613
      %v1615 = vpop.f32.mrb[0].mxu0
      %1616 = vmatprep.mubr.bf16.mxu0 %v889
      %1617 = vmatmul.mubr.bf16.gmra.mrb[0].mxu0 %v888
      %v1618 = vpop.f32.mrb[0].mxu0
      %v1619 = vadd.f32 %v1554, %v1618
      %v1620 = vpop.f32.mrb[0].mxu0
      %v1621 = vpop.f32.mrb[0].mxu0
      %v1622 = vadd.f32 %v1557, %v1621
      %v1623 = vpop.f32.mrb[0].mxu0
      %1624 = vmatprep.mubr.bf16.mxu0 %v891
      %1625 = vmatmul.mubr.bf16.gmra.mrb[0].mxu0 %v890
      %v1626 = vpop.f32.mrb[0].mxu0
      %v1627 = vadd.f32 %v1562, %v1626
      %v1628 = vpop.f32.mrb[0].mxu0
      %v1629 = vpop.f32.mrb[0].mxu0
      %v1630 = vadd.f32 %v1565, %v1629
      %v1631 = vpop.f32.mrb[0].mxu0
      %1632 = vmatprep.mubr.bf16.mxu0 %v893
      %1633 = vmatmul.mubr.bf16.gmra.mrb[0].mxu0 %v892
      %v1634 = vpop.f32.mrb[0].mxu0
      %v1635 = vadd.f32 %v1570, %v1634
      %v1636 = vpop.f32.mrb[0].mxu0
      %v1637 = vpop.f32.mrb[0].mxu0
      %v1638 = vadd.f32 %v1573, %v1637
      %v1639 = vpop.f32.mrb[0].mxu0
      %1640 = vdwg.mxu0
      %1641 = vmatprep.subr.bf16.mxu0 0
      %1642 = vmatpush1.bf16.msra.mxu0 %v1366
      %1643 = vmatprep.subr.bf16.mxu0 0
      %1644 = vmatpush1.bf16.msra.mxu0 %v1367
      %1645 = vmatprep.subr.bf16.mxu0 0
      %1646 = vmatpush1.bf16.msra.mxu0 %v1368
      %1647 = vmatprep.subr.bf16.mxu0 0
      %1648 = vmatpush1.bf16.msra.mxu0 %v1369
      %1649 = vmatprep.subr.bf16.mxu0 0
      %1650 = vmatpush1.bf16.msra.mxu0 %v1370
      %1651 = vmatprep.subr.bf16.mxu0 0
      %1652 = vmatpush1.bf16.msra.mxu0 %v1371
      %1653 = vmatprep.subr.bf16.mxu0 0
      %1654 = vmatpush1.bf16.msra.mxu0 %v1372
      %1655 = vmatprep.subr.bf16.mxu0 0
      %1656 = vmatpush1.bf16.msra.mxu0 %v1373
      %1657 = vmatprep.subr.bf16.mxu0 0
      %1658 = vmatpush1.bf16.msra.mxu0 %v1374
      %1659 = vmatprep.subr.bf16.mxu0 0
      %1660 = vmatpush1.bf16.msra.mxu0 %v1375
      %1661 = vmatprep.subr.bf16.mxu0 0
      %1662 = vmatpush1.bf16.msra.mxu0 %v1376
      %1663 = vmatprep.subr.bf16.mxu0 0
      %1664 = vmatpush1.bf16.msra.mxu0 %v1377
      %1665 = vmatprep.subr.bf16.mxu0 0
      %1666 = vmatpush1.bf16.msra.mxu0 %v1378
      %1667 = vmatprep.subr.bf16.mxu0 0
      %1668 = vmatpush1.bf16.msra.mxu0 %v1379
      %1669 = vmatprep.subr.bf16.mxu0 0
      %1670 = vmatpush1.bf16.msra.mxu0 %v1380
      %1671 = vmatprep.subr.bf16.mxu0 0
      %1672 = vmatpush1.bf16.msra.mxu0 %v1381
      %1673 = vmatprep.mubr.bf16.mxu0 %v919
      %1674 = vmatmul.mubr.bf16.gmra.mrb[0].mxu0 %v918
      %v1675 = vpop.f32.mrb[0].mxu0
      %v1676 = vadd.f32 %v1611, %v1675
      %v1677 = vpop.f32.mrb[0].mxu0
      %v1678 = vpop.f32.mrb[0].mxu0
      %v1679 = vadd.f32 %v1614, %v1678
      %v1680 = vpop.f32.mrb[0].mxu0
      %1681 = vmatprep.mubr.bf16.mxu0 %v921
      %1682 = vmatmul.mubr.bf16.gmra.mrb[0].mxu0 %v920
      %v1683 = vpop.f32.mrb[0].mxu0
      %v1684 = vadd.f32 %v1619, %v1683
      %v1685 = vpop.f32.mrb[0].mxu0
      %v1686 = vpop.f32.mrb[0].mxu0
      %v1687 = vadd.f32 %v1622, %v1686
      %v1688 = vpop.f32.mrb[0].mxu0
      %1689 = vmatprep.mubr.bf16.mxu0 %v923
      %1690 = vmatmul.mubr.bf16.gmra.mrb[0].mxu0 %v922
      %v1691 = vpop.f32.mrb[0].mxu0
      %v1692 = vadd.f32 %v1627, %v1691
      %v1693 = vpop.f32.mrb[0].mxu0
      %v1694 = vpop.f32.mrb[0].mxu0
      %v1695 = vadd.f32 %v1630, %v1694
      %v1696 = vpop.f32.mrb[0].mxu0
      %1697 = vmatprep.mubr.bf16.mxu0 %v925
      %1698 = vmatmul.mubr.bf16.gmra.mrb[0].mxu0 %v924
      %v1699 = vpop.f32.mrb[0].mxu0
      %v1700 = vadd.f32 %v1635, %v1699
      %v1701 = vpop.f32.mrb[0].mxu0
      %v1702 = vpop.f32.mrb[0].mxu0
      %v1703 = vadd.f32 %v1638, %v1702
      %v1704 = vpop.f32.mrb[0].mxu0
      %1705 = vdwg.mxu0
      %v1706 = vunpack.c.l.b16 %v385
      %v1707 = vunpack.c.h.b16 %v385
      %v1708 = vunpack.c.l.b16 %v389
      %v1709 = vunpack.c.h.b16 %v389
      %v1710 = vunpack.c.l.b16 %v393
      %v1711 = vunpack.c.h.b16 %v393
      %v1712 = vunpack.c.l.b16 %v397
      %v1713 = vunpack.c.h.b16 %v397
      %v1714 = vunpack.c.l.b16 %v401
      %v1715 = vunpack.c.h.b16 %v401
      %v1716 = vunpack.c.l.b16 %v405
      %v1717 = vunpack.c.h.b16 %v405
      %v1718 = vunpack.c.l.b16 %v409
      %v1719 = vunpack.c.h.b16 %v409
      %v1720 = vunpack.c.l.b16 %v413
      %v1721 = vunpack.c.h.b16 %v413
      %v1722 = vpack.c.b16 %v1708, %v1706
      %v1723 = vpack.c.b16 %v1709, %v1707
      %v1724 = vpack.c.b16 %v1712, %v1710
      %v1725 = vpack.c.b16 %v1713, %v1711
      %v1726 = vpack.c.b16 %v1716, %v1714
      %v1727 = vpack.c.b16 %v1717, %v1715
      %v1728 = vpack.c.b16 %v1720, %v1718
      %v1729 = vpack.c.b16 %v1721, %v1719
      %v1738 = vunpack.c.l.b16 %v573
      %v1739 = vunpack.c.h.b16 %v573
      %v1740 = vunpack.c.l.b16 %v577
      %v1741 = vunpack.c.h.b16 %v577
      %v1742 = vunpack.c.l.b16 %v581
      %v1743 = vunpack.c.h.b16 %v581
      %v1744 = vunpack.c.l.b16 %v585
      %v1745 = vunpack.c.h.b16 %v585
      %v1746 = vunpack.c.l.b16 %v589
      %v1747 = vunpack.c.h.b16 %v589
      %v1748 = vunpack.c.l.b16 %v593
      %v1749 = vunpack.c.h.b16 %v593
      %v1750 = vunpack.c.l.b16 %v597
      %v1751 = vunpack.c.h.b16 %v597
      %v1752 = vunpack.c.l.b16 %v601
      %v1753 = vunpack.c.h.b16 %v601
      %v1754 = vpack.c.b16 %v1740, %v1738
      %v1755 = vpack.c.b16 %v1741, %v1739
      %v1756 = vpack.c.b16 %v1744, %v1742
      %v1757 = vpack.c.b16 %v1745, %v1743
      %v1758 = vpack.c.b16 %v1748, %v1746
      %v1759 = vpack.c.b16 %v1749, %v1747
      %v1760 = vpack.c.b16 %v1752, %v1750
      %v1761 = vpack.c.b16 %v1753, %v1751
      %s1770 = scalar_lea.vmem %s1, 512
      %v1771 = vld [vmem:[%s1770] sm:$0xf]
      %v1772 = vld [vmem:[%s1770 + $0x4] sm:$0xf]
      %v1773 = vld [vmem:[%s1770 + $0x8] sm:$0xf]
      %v1774 = vld [vmem:[%s1770 + $0xc] sm:$0xf]
      %v1775 = vld [vmem:[%s1770 + $0x10] sm:$0xf]
      %v1776 = vld [vmem:[%s1770 + $0x14] sm:$0xf]
      %v1777 = vld [vmem:[%s1770 + $0x18] sm:$0xf]
      %v1778 = vld [vmem:[%s1770 + $0x1c] sm:$0xf]
      %v1779 = vld [vmem:[%s1770 + $0x20] sm:$0xf]
      %v1780 = vld [vmem:[%s1770 + $0x24] sm:$0xf]
      %v1781 = vld [vmem:[%s1770 + $0x28] sm:$0xf]
      %v1782 = vld [vmem:[%s1770 + $0x2c] sm:$0xf]
      %v1783 = vld [vmem:[%s1770 + $0x30] sm:$0xf]
      %v1784 = vld [vmem:[%s1770 + $0x34] sm:$0xf]
      %v1785 = vld [vmem:[%s1770 + $0x38] sm:$0xf]
      %v1786 = vld [vmem:[%s1770 + $0x3c] sm:$0xf]
      %v1787 = vld [vmem:[%s1770 + $0x40] sm:$0xf]
      %v1788 = vld [vmem:[%s1770 + $0x44] sm:$0xf]
      %v1789 = vld [vmem:[%s1770 + $0x48] sm:$0xf]
      %v1790 = vld [vmem:[%s1770 + $0x4c] sm:$0xf]
      %v1791 = vld [vmem:[%s1770 + $0x50] sm:$0xf]
      %v1792 = vld [vmem:[%s1770 + $0x54] sm:$0xf]
      %v1793 = vld [vmem:[%s1770 + $0x58] sm:$0xf]
      %v1794 = vld [vmem:[%s1770 + $0x5c] sm:$0xf]
      %v1795 = vld [vmem:[%s1770 + $0x60] sm:$0xf]
      %v1796 = vld [vmem:[%s1770 + $0x64] sm:$0xf]
      %v1797 = vld [vmem:[%s1770 + $0x68] sm:$0xf]
      %v1798 = vld [vmem:[%s1770 + $0x6c] sm:$0xf]
      %v1799 = vld [vmem:[%s1770 + $0x70] sm:$0xf]
      %v1800 = vld [vmem:[%s1770 + $0x74] sm:$0xf]
      %v1801 = vld [vmem:[%s1770 + $0x78] sm:$0xf]
      %v1802 = vld [vmem:[%s1770 + $0x7c] sm:$0xf]
      %v1803 = vld [vmem:[%s1770 + $0x80] sm:$0xf]
      %v1804 = vld [vmem:[%s1770 + $0x84] sm:$0xf]
      %v1805 = vld [vmem:[%s1770 + $0x88] sm:$0xf]
      %v1806 = vld [vmem:[%s1770 + $0x8c] sm:$0xf]
      %v1807 = vld [vmem:[%s1770 + $0x90] sm:$0xf]
      %v1808 = vld [vmem:[%s1770 + $0x94] sm:$0xf]
      %v1809 = vld [vmem:[%s1770 + $0x98] sm:$0xf]
      %v1810 = vld [vmem:[%s1770 + $0x9c] sm:$0xf]
      %v1811 = vld [vmem:[%s1770 + $0xa0] sm:$0xf]
      %v1812 = vld [vmem:[%s1770 + $0xa4] sm:$0xf]
      %v1813 = vld [vmem:[%s1770 + $0xa8] sm:$0xf]
      %v1814 = vld [vmem:[%s1770 + $0xac] sm:$0xf]
      %v1815 = vld [vmem:[%s1770 + $0xb0] sm:$0xf]
      %v1816 = vld [vmem:[%s1770 + $0xb4] sm:$0xf]
      %v1817 = vld [vmem:[%s1770 + $0xb8] sm:$0xf]
      %v1818 = vld [vmem:[%s1770 + $0xbc] sm:$0xf]
      %v1819 = vld [vmem:[%s1770 + $0xc0] sm:$0xf]
      %v1820 = vld [vmem:[%s1770 + $0xc4] sm:$0xf]
      %v1821 = vld [vmem:[%s1770 + $0xc8] sm:$0xf]
      %v1822 = vld [vmem:[%s1770 + $0xcc] sm:$0xf]
      %v1823 = vld [vmem:[%s1770 + $0xd0] sm:$0xf]
      %v1824 = vld [vmem:[%s1770 + $0xd4] sm:$0xf]
      %v1825 = vld [vmem:[%s1770 + $0xd8] sm:$0xf]
      %v1826 = vld [vmem:[%s1770 + $0xdc] sm:$0xf]
      %v1827 = vld [vmem:[%s1770 + $0xe0] sm:$0xf]
      %v1828 = vld [vmem:[%s1770 + $0xe4] sm:$0xf]
      %v1829 = vld [vmem:[%s1770 + $0xe8] sm:$0xf]
      %v1830 = vld [vmem:[%s1770 + $0xec] sm:$0xf]
      %v1831 = vld [vmem:[%s1770 + $0xf0] sm:$0xf]
      %v1832 = vld [vmem:[%s1770 + $0xf4] sm:$0xf]
      %v1833 = vld [vmem:[%s1770 + $0xf8] sm:$0xf]
      %v1834 = vld [vmem:[%s1770 + $0xfc] sm:$0xf]
      %v1835 = vld [vmem:[%s1770 + $0x100] sm:$0xf]
      %v1836 = vld [vmem:[%s1770 + $0x104] sm:$0xf]
      %v1837 = vld [vmem:[%s1770 + $0x108] sm:$0xf]
      %v1838 = vld [vmem:[%s1770 + $0x10c] sm:$0xf]
      %v1839 = vld [vmem:[%s1770 + $0x110] sm:$0xf]
      %v1840 = vld [vmem:[%s1770 + $0x114] sm:$0xf]
      %v1841 = vld [vmem:[%s1770 + $0x118] sm:$0xf]
      %v1842 = vld [vmem:[%s1770 + $0x11c] sm:$0xf]
      %v1843 = vld [vmem:[%s1770 + $0x120] sm:$0xf]
      %v1844 = vld [vmem:[%s1770 + $0x124] sm:$0xf]
      %v1845 = vld [vmem:[%s1770 + $0x128] sm:$0xf]
      %v1846 = vld [vmem:[%s1770 + $0x12c] sm:$0xf]
      %v1847 = vld [vmem:[%s1770 + $0x130] sm:$0xf]
      %v1848 = vld [vmem:[%s1770 + $0x134] sm:$0xf]
      %v1849 = vld [vmem:[%s1770 + $0x138] sm:$0xf]
      %v1850 = vld [vmem:[%s1770 + $0x13c] sm:$0xf]
      %v1851 = vld [vmem:[%s1770 + $0x140] sm:$0xf]
      %v1852 = vld [vmem:[%s1770 + $0x144] sm:$0xf]
      %v1853 = vld [vmem:[%s1770 + $0x148] sm:$0xf]
      %v1854 = vld [vmem:[%s1770 + $0x14c] sm:$0xf]
      %v1855 = vld [vmem:[%s1770 + $0x150] sm:$0xf]
      %v1856 = vld [vmem:[%s1770 + $0x154] sm:$0xf]
      %v1857 = vld [vmem:[%s1770 + $0x158] sm:$0xf]
      %v1858 = vld [vmem:[%s1770 + $0x15c] sm:$0xf]
      %v1859 = vld [vmem:[%s1770 + $0x160] sm:$0xf]
      %v1860 = vld [vmem:[%s1770 + $0x164] sm:$0xf]
      %v1861 = vld [vmem:[%s1770 + $0x168] sm:$0xf]
      %v1862 = vld [vmem:[%s1770 + $0x16c] sm:$0xf]
      %v1863 = vld [vmem:[%s1770 + $0x170] sm:$0xf]
      %v1864 = vld [vmem:[%s1770 + $0x174] sm:$0xf]
      %v1865 = vld [vmem:[%s1770 + $0x178] sm:$0xf]
      %v1866 = vld [vmem:[%s1770 + $0x17c] sm:$0xf]
      %v1867 = vld [vmem:[%s1770 + $0x180] sm:$0xf]
      %v1868 = vld [vmem:[%s1770 + $0x184] sm:$0xf]
      %v1869 = vld [vmem:[%s1770 + $0x188] sm:$0xf]
      %v1870 = vld [vmem:[%s1770 + $0x18c] sm:$0xf]
      %v1871 = vld [vmem:[%s1770 + $0x190] sm:$0xf]
      %v1872 = vld [vmem:[%s1770 + $0x194] sm:$0xf]
      %v1873 = vld [vmem:[%s1770 + $0x198] sm:$0xf]
      %v1874 = vld [vmem:[%s1770 + $0x19c] sm:$0xf]
      %v1875 = vld [vmem:[%s1770 + $0x1a0] sm:$0xf]
      %v1876 = vld [vmem:[%s1770 + $0x1a4] sm:$0xf]
      %v1877 = vld [vmem:[%s1770 + $0x1a8] sm:$0xf]
      %v1878 = vld [vmem:[%s1770 + $0x1ac] sm:$0xf]
      %v1879 = vld [vmem:[%s1770 + $0x1b0] sm:$0xf]
      %v1880 = vld [vmem:[%s1770 + $0x1b4] sm:$0xf]
      %v1881 = vld [vmem:[%s1770 + $0x1b8] sm:$0xf]
      %v1882 = vld [vmem:[%s1770 + $0x1bc] sm:$0xf]
      %v1883 = vld [vmem:[%s1770 + $0x1c0] sm:$0xf]
      %v1884 = vld [vmem:[%s1770 + $0x1c4] sm:$0xf]
      %v1885 = vld [vmem:[%s1770 + $0x1c8] sm:$0xf]
      %v1886 = vld [vmem:[%s1770 + $0x1cc] sm:$0xf]
      %v1887 = vld [vmem:[%s1770 + $0x1d0] sm:$0xf]
      %v1888 = vld [vmem:[%s1770 + $0x1d4] sm:$0xf]
      %v1889 = vld [vmem:[%s1770 + $0x1d8] sm:$0xf]
      %v1890 = vld [vmem:[%s1770 + $0x1dc] sm:$0xf]
      %v1891 = vld [vmem:[%s1770 + $0x1e0] sm:$0xf]
      %v1892 = vld [vmem:[%s1770 + $0x1e4] sm:$0xf]
      %v1893 = vld [vmem:[%s1770 + $0x1e8] sm:$0xf]
      %v1894 = vld [vmem:[%s1770 + $0x1ec] sm:$0xf]
      %v1895 = vld [vmem:[%s1770 + $0x1f0] sm:$0xf]
      %v1896 = vld [vmem:[%s1770 + $0x1f4] sm:$0xf]
      %v1897 = vld [vmem:[%s1770 + $0x1f8] sm:$0xf]
      %v1898 = vld [vmem:[%s1770 + $0x1fc] sm:$0xf]
      %v2027 = vunpack.c.l.b16 %v1771
      %v2028 = vunpack.c.l.b16 %v1772
      %v2029 = vunpack.c.l.b16 %v1773
      %v2030 = vunpack.c.l.b16 %v1774
      %v2031 = vunpack.c.l.b16 %v1775
      %v2032 = vunpack.c.l.b16 %v1776
      %v2033 = vunpack.c.l.b16 %v1777
      %v2034 = vunpack.c.l.b16 %v1778
      %v2035 = vunpack.c.l.b16 %v1779
      %v2036 = vunpack.c.l.b16 %v1780
      %v2037 = vunpack.c.l.b16 %v1781
      %v2038 = vunpack.c.l.b16 %v1782
      %v2039 = vunpack.c.l.b16 %v1783
      %v2040 = vunpack.c.l.b16 %v1784
      %v2041 = vunpack.c.l.b16 %v1785
      %v2042 = vunpack.c.l.b16 %v1786
      %v2043 = vunpack.c.l.b16 %v1787
      %v2044 = vunpack.c.l.b16 %v1788
      %v2045 = vunpack.c.l.b16 %v1789
      %v2046 = vunpack.c.l.b16 %v1790
      %v2047 = vunpack.c.l.b16 %v1791
      %v2048 = vunpack.c.l.b16 %v1792
      %v2049 = vunpack.c.l.b16 %v1793
      %v2050 = vunpack.c.l.b16 %v1794
      %v2051 = vunpack.c.l.b16 %v1795
      %v2052 = vunpack.c.l.b16 %v1796
      %v2053 = vunpack.c.l.b16 %v1797
      %v2054 = vunpack.c.l.b16 %v1798
      %v2055 = vunpack.c.l.b16 %v1799
      %v2056 = vunpack.c.l.b16 %v1800
      %v2057 = vunpack.c.l.b16 %v1801
      %v2058 = vunpack.c.l.b16 %v1802
      %v2059 = vunpack.c.l.b16 %v1803
      %v2060 = vunpack.c.l.b16 %v1804
      %v2061 = vunpack.c.l.b16 %v1805
      %v2062 = vunpack.c.l.b16 %v1806
      %v2063 = vunpack.c.l.b16 %v1807
      %v2064 = vunpack.c.l.b16 %v1808
      %v2065 = vunpack.c.l.b16 %v1809
      %v2066 = vunpack.c.l.b16 %v1810
      %v2067 = vunpack.c.l.b16 %v1811
      %v2068 = vunpack.c.l.b16 %v1812
      %v2069 = vunpack.c.l.b16 %v1813
      %v2070 = vunpack.c.l.b16 %v1814
      %v2071 = vunpack.c.l.b16 %v1815
      %v2072 = vunpack.c.l.b16 %v1816
      %v2073 = vunpack.c.l.b16 %v1817
      %v2074 = vunpack.c.l.b16 %v1818
      %v2075 = vunpack.c.l.b16 %v1819
      %v2076 = vunpack.c.l.b16 %v1820
      %v2077 = vunpack.c.l.b16 %v1821
      %v2078 = vunpack.c.l.b16 %v1822
      %v2079 = vunpack.c.l.b16 %v1823
      %v2080 = vunpack.c.l.b16 %v1824
      %v2081 = vunpack.c.l.b16 %v1825
      %v2082 = vunpack.c.l.b16 %v1826
      %v2083 = vunpack.c.l.b16 %v1827
      %v2084 = vunpack.c.l.b16 %v1828
      %v2085 = vunpack.c.l.b16 %v1829
      %v2086 = vunpack.c.l.b16 %v1830
      %v2087 = vunpack.c.l.b16 %v1831
      %v2088 = vunpack.c.l.b16 %v1832
      %v2089 = vunpack.c.l.b16 %v1833
      %v2090 = vunpack.c.l.b16 %v1834
      %v2091 = vunpack.c.l.b16 %v1835
      %v2092 = vunpack.c.l.b16 %v1836
      %v2093 = vunpack.c.l.b16 %v1837
      %v2094 = vunpack.c.l.b16 %v1838
      %v2095 = vunpack.c.l.b16 %v1839
      %v2096 = vunpack.c.l.b16 %v1840
      %v2097 = vunpack.c.l.b16 %v1841
      %v2098 = vunpack.c.l.b16 %v1842
      %v2099 = vunpack.c.l.b16 %v1843
      %v2100 = vunpack.c.l.b16 %v1844
      %v2101 = vunpack.c.l.b16 %v1845
      %v2102 = vunpack.c.l.b16 %v1846
      %v2103 = vunpack.c.l.b16 %v1847
      %v2104 = vunpack.c.l.b16 %v1848
      %v2105 = vunpack.c.l.b16 %v1849
      %v2106 = vunpack.c.l.b16 %v1850
      %v2107 = vunpack.c.l.b16 %v1851
      %v2108 = vunpack.c.l.b16 %v1852
      %v2109 = vunpack.c.l.b16 %v1853
      %v2110 = vunpack.c.l.b16 %v1854
      %v2111 = vunpack.c.l.b16 %v1855
      %v2112 = vunpack.c.l.b16 %v1856
      %v2113 = vunpack.c.l.b16 %v1857
      %v2114 = vunpack.c.l.b16 %v1858
      %v2115 = vunpack.c.l.b16 %v1859
      %v2116 = vunpack.c.l.b16 %v1860
      %v2117 = vunpack.c.l.b16 %v1861
      %v2118 = vunpack.c.l.b16 %v1862
      %v2119 = vunpack.c.l.b16 %v1863
      %v2120 = vunpack.c.l.b16 %v1864
      %v2121 = vunpack.c.l.b16 %v1865
      %v2122 = vunpack.c.l.b16 %v1866
      %v2123 = vunpack.c.l.b16 %v1867
      %v2124 = vunpack.c.l.b16 %v1868
      %v2125 = vunpack.c.l.b16 %v1869
      %v2126 = vunpack.c.l.b16 %v1870
      %v2127 = vunpack.c.l.b16 %v1871
      %v2128 = vunpack.c.l.b16 %v1872
      %v2129 = vunpack.c.l.b16 %v1873
      %v2130 = vunpack.c.l.b16 %v1874
      %v2131 = vunpack.c.l.b16 %v1875
      %v2132 = vunpack.c.l.b16 %v1876
      %v2133 = vunpack.c.l.b16 %v1877
      %v2134 = vunpack.c.l.b16 %v1878
      %v2135 = vunpack.c.l.b16 %v1879
      %v2136 = vunpack.c.l.b16 %v1880
      %v2137 = vunpack.c.l.b16 %v1881
      %v2138 = vunpack.c.l.b16 %v1882
      %v2139 = vunpack.c.l.b16 %v1883
      %v2140 = vunpack.c.l.b16 %v1884
      %v2141 = vunpack.c.l.b16 %v1885
      %v2142 = vunpack.c.l.b16 %v1886
      %v2143 = vunpack.c.l.b16 %v1887
      %v2144 = vunpack.c.l.b16 %v1888
      %v2145 = vunpack.c.l.b16 %v1889
      %v2146 = vunpack.c.l.b16 %v1890
      %v2147 = vunpack.c.l.b16 %v1891
      %v2148 = vunpack.c.l.b16 %v1892
      %v2149 = vunpack.c.l.b16 %v1893
      %v2150 = vunpack.c.l.b16 %v1894
      %v2151 = vunpack.c.l.b16 %v1895
      %v2152 = vunpack.c.l.b16 %v1896
      %v2153 = vunpack.c.l.b16 %v1897
      %v2154 = vunpack.c.l.b16 %v1898
      %v2155 = vpack.c.b16 %v2028, %v2027
      %v2156 = vpack.c.b16 %v2030, %v2029
      %v2157 = vpack.c.b16 %v2032, %v2031
      %v2158 = vpack.c.b16 %v2034, %v2033
      %v2159 = vpack.c.b16 %v2036, %v2035
      %v2160 = vpack.c.b16 %v2038, %v2037
      %v2161 = vpack.c.b16 %v2040, %v2039
      %v2162 = vpack.c.b16 %v2042, %v2041
      %v2163 = vpack.c.b16 %v2044, %v2043
      %v2164 = vpack.c.b16 %v2046, %v2045
      %v2165 = vpack.c.b16 %v2048, %v2047
      %v2166 = vpack.c.b16 %v2050, %v2049
      %v2167 = vpack.c.b16 %v2052, %v2051
      %v2168 = vpack.c.b16 %v2054, %v2053
      %v2169 = vpack.c.b16 %v2056, %v2055
      %v2170 = vpack.c.b16 %v2058, %v2057
      %v2171 = vpack.c.b16 %v2060, %v2059
      %v2172 = vpack.c.b16 %v2062, %v2061
      %v2173 = vpack.c.b16 %v2064, %v2063
      %v2174 = vpack.c.b16 %v2066, %v2065
      %v2175 = vpack.c.b16 %v2068, %v2067
      %v2176 = vpack.c.b16 %v2070, %v2069
      %v2177 = vpack.c.b16 %v2072, %v2071
      %v2178 = vpack.c.b16 %v2074, %v2073
      %v2179 = vpack.c.b16 %v2076, %v2075
      %v2180 = vpack.c.b16 %v2078, %v2077
      %v2181 = vpack.c.b16 %v2080, %v2079
      %v2182 = vpack.c.b16 %v2082, %v2081
      %v2183 = vpack.c.b16 %v2084, %v2083
      %v2184 = vpack.c.b16 %v2086, %v2085
      %v2185 = vpack.c.b16 %v2088, %v2087
      %v2186 = vpack.c.b16 %v2090, %v2089
      %v2187 = vpack.c.b16 %v2092, %v2091
      %v2188 = vpack.c.b16 %v2094, %v2093
      %v2189 = vpack.c.b16 %v2096, %v2095
      %v2190 = vpack.c.b16 %v2098, %v2097
      %v2191 = vpack.c.b16 %v2100, %v2099
      %v2192 = vpack.c.b16 %v2102, %v2101
      %v2193 = vpack.c.b16 %v2104, %v2103
      %v2194 = vpack.c.b16 %v2106, %v2105
      %v2195 = vpack.c.b16 %v2108, %v2107
      %v2196 = vpack.c.b16 %v2110, %v2109
      %v2197 = vpack.c.b16 %v2112, %v2111
      %v2198 = vpack.c.b16 %v2114, %v2113
      %v2199 = vpack.c.b16 %v2116, %v2115
      %v2200 = vpack.c.b16 %v2118, %v2117
      %v2201 = vpack.c.b16 %v2120, %v2119
      %v2202 = vpack.c.b16 %v2122, %v2121
      %v2203 = vpack.c.b16 %v2124, %v2123
      %v2204 = vpack.c.b16 %v2126, %v2125
      %v2205 = vpack.c.b16 %v2128, %v2127
      %v2206 = vpack.c.b16 %v2130, %v2129
      %v2207 = vpack.c.b16 %v2132, %v2131
      %v2208 = vpack.c.b16 %v2134, %v2133
      %v2209 = vpack.c.b16 %v2136, %v2135
      %v2210 = vpack.c.b16 %v2138, %v2137
      %v2211 = vpack.c.b16 %v2140, %v2139
      %v2212 = vpack.c.b16 %v2142, %v2141
      %v2213 = vpack.c.b16 %v2144, %v2143
      %v2214 = vpack.c.b16 %v2146, %v2145
      %v2215 = vpack.c.b16 %v2148, %v2147
      %v2216 = vpack.c.b16 %v2150, %v2149
      %v2217 = vpack.c.b16 %v2152, %v2151
      %v2218 = vpack.c.b16 %v2154, %v2153
      %2283 = vmatprep.subr.bf16.mxu0 0
      %2284 = vmatpush1.bf16.msra.mxu0 %v2155
      %2285 = vmatprep.subr.bf16.mxu0 0
      %2286 = vmatpush1.bf16.msra.mxu0 %v2156
      %2287 = vmatprep.subr.bf16.mxu0 0
      %2288 = vmatpush1.bf16.msra.mxu0 %v2157
      %2289 = vmatprep.subr.bf16.mxu0 0
      %2290 = vmatpush1.bf16.msra.mxu0 %v2158
      %2291 = vmatprep.subr.bf16.mxu0 0
      %2292 = vmatpush1.bf16.msra.mxu0 %v2159
      %2293 = vmatprep.subr.bf16.mxu0 0
      %2294 = vmatpush1.bf16.msra.mxu0 %v2160
      %2295 = vmatprep.subr.bf16.mxu0 0
      %2296 = vmatpush1.bf16.msra.mxu0 %v2161
      %2297 = vmatprep.subr.bf16.mxu0 0
      %2298 = vmatpush1.bf16.msra.mxu0 %v2162
      %2299 = vmatprep.subr.bf16.mxu0 0
      %2300 = vmatpush1.bf16.msra.mxu0 %v2163
      %2301 = vmatprep.subr.bf16.mxu0 0
      %2302 = vmatpush1.bf16.msra.mxu0 %v2164
      %2303 = vmatprep.subr.bf16.mxu0 0
      %2304 = vmatpush1.bf16.msra.mxu0 %v2165
      %2305 = vmatprep.subr.bf16.mxu0 0
      %2306 = vmatpush1.bf16.msra.mxu0 %v2166
      %2307 = vmatprep.subr.bf16.mxu0 0
      %2308 = vmatpush1.bf16.msra.mxu0 %v2167
      %2309 = vmatprep.subr.bf16.mxu0 0
      %2310 = vmatpush1.bf16.msra.mxu0 %v2168
      %2311 = vmatprep.subr.bf16.mxu0 0
      %2312 = vmatpush1.bf16.msra.mxu0 %v2169
      %2313 = vmatprep.subr.bf16.mxu0 0
      %2314 = vmatpush1.bf16.msra.mxu0 %v2170
      %2315 = vmatprep.mubr.bf16.mxu0 %v847
      %2316 = vmatmul.mubr.bf16.gmra.mrb[0].mxu0 %v846
      %v2317 = vpop.f32.mrb[0].mxu0
      %v2318 = vadd.f32 0.0, %v2317
      %v2319 = vpop.f32.mrb[0].mxu0
      %v2320 = vpop.f32.mrb[0].mxu0
      %v2321 = vadd.f32 0.0, %v2320
      %v2322 = vpop.f32.mrb[0].mxu0
      %2323 = vmatprep.mubr.bf16.mxu0 %v849
      %2324 = vmatmul.mubr.bf16.gmra.mrb[0].mxu0 %v848
      %v2325 = vpop.f32.mrb[0].mxu0
      %v2326 = vadd.f32 0.0, %v2325
      %v2327 = vpop.f32.mrb[0].mxu0
      %v2328 = vpop.f32.mrb[0].mxu0
      %v2329 = vadd.f32 0.0, %v2328
      %v2330 = vpop.f32.mrb[0].mxu0
      %2331 = vmatprep.mubr.bf16.mxu0 %v851
      %2332 = vmatmul.mubr.bf16.gmra.mrb[0].mxu0 %v850
      %v2333 = vpop.f32.mrb[0].mxu0
      %v2334 = vadd.f32 0.0, %v2333
      %v2335 = vpop.f32.mrb[0].mxu0
      %v2336 = vpop.f32.mrb[0].mxu0
      %v2337 = vadd.f32 0.0, %v2336
      %v2338 = vpop.f32.mrb[0].mxu0
      %2339 = vmatprep.mubr.bf16.mxu0 %v853
      %2340 = vmatmul.mubr.bf16.gmra.mrb[0].mxu0 %v852
      %v2341 = vpop.f32.mrb[0].mxu0
      %v2342 = vadd.f32 0.0, %v2341
      %v2343 = vpop.f32.mrb[0].mxu0
      %v2344 = vpop.f32.mrb[0].mxu0
      %v2345 = vadd.f32 0.0, %v2344
      %v2346 = vpop.f32.mrb[0].mxu0
      %2347 = vdwg.mxu0
      %2348 = vmatprep.subr.bf16.mxu0 0
      %2349 = vmatpush1.bf16.msra.mxu0 %v2171
      %2350 = vmatprep.subr.bf16.mxu0 0
      %2351 = vmatpush1.bf16.msra.mxu0 %v2172
      %2352 = vmatprep.subr.bf16.mxu0 0
      %2353 = vmatpush1.bf16.msra.mxu0 %v2173
      %2354 = vmatprep.subr.bf16.mxu0 0
      %2355 = vmatpush1.bf16.msra.mxu0 %v2174
      %2356 = vmatprep.subr.bf16.mxu0 0
      %2357 = vmatpush1.bf16.msra.mxu0 %v2175
      %2358 = vmatprep.subr.bf16.mxu0 0
      %2359 = vmatpush1.bf16.msra.mxu0 %v2176
      %2360 = vmatprep.subr.bf16.mxu0 0
      %2361 = vmatpush1.bf16.msra.mxu0 %v2177
      %2362 = vmatprep.subr.bf16.mxu0 0
      %2363 = vmatpush1.bf16.msra.mxu0 %v2178
      %2364 = vmatprep.subr.bf16.mxu0 0
      %2365 = vmatpush1.bf16.msra.mxu0 %v2179
      %2366 = vmatprep.subr.bf16.mxu0 0
      %2367 = vmatpush1.bf16.msra.mxu0 %v2180
      %2368 = vmatprep.subr.bf16.mxu0 0
      %2369 = vmatpush1.bf16.msra.mxu0 %v2181
      %2370 = vmatprep.subr.bf16.mxu0 0
      %2371 = vmatpush1.bf16.msra.mxu0 %v2182
      %2372 = vmatprep.subr.bf16.mxu0 0
      %2373 = vmatpush1.bf16.msra.mxu0 %v2183
      %2374 = vmatprep.subr.bf16.mxu0 0
      %2375 = vmatpush1.bf16.msra.mxu0 %v2184
      %2376 = vmatprep.subr.bf16.mxu0 0
      %2377 = vmatpush1.bf16.msra.mxu0 %v2185
      %2378 = vmatprep.subr.bf16.mxu0 0
      %2379 = vmatpush1.bf16.msra.mxu0 %v2186
      %2380 = vmatprep.mubr.bf16.mxu0 %v1723
      %2381 = vmatmul.mubr.bf16.gmra.mrb[0].mxu0 %v1722
      %v2382 = vpop.f32.mrb[0].mxu0
      %v2383 = vadd.f32 %v2318, %v2382
      %v2384 = vpop.f32.mrb[0].mxu0
      %v2385 = vpop.f32.mrb[0].mxu0
      %v2386 = vadd.f32 %v2321, %v2385
      %v2387 = vpop.f32.mrb[0].mxu0
      %2388 = vmatprep.mubr.bf16.mxu0 %v1725
      %2389 = vmatmul.mubr.bf16.gmra.mrb[0].mxu0 %v1724
      %v2390 = vpop.f32.mrb[0].mxu0
      %v2391 = vadd.f32 %v2326, %v2390
      %v2392 = vpop.f32.mrb[0].mxu0
      %v2393 = vpop.f32.mrb[0].mxu0
      %v2394 = vadd.f32 %v2329, %v2393
      %v2395 = vpop.f32.mrb[0].mxu0
      %2396 = vmatprep.mubr.bf16.mxu0 %v1727
      %2397 = vmatmul.mubr.bf16.gmra.mrb[0].mxu0 %v1726
      %v2398 = vpop.f32.mrb[0].mxu0
      %v2399 = vadd.f32 %v2334, %v2398
      %v2400 = vpop.f32.mrb[0].mxu0
      %v2401 = vpop.f32.mrb[0].mxu0
      %v2402 = vadd.f32 %v2337, %v2401
      %v2403 = vpop.f32.mrb[0].mxu0
      %2404 = vmatprep.mubr.bf16.mxu0 %v1729
      %2405 = vmatmul.mubr.bf16.gmra.mrb[0].mxu0 %v1728
      %v2406 = vpop.f32.mrb[0].mxu0
      %v2407 = vadd.f32 %v2342, %v2406
      %v2408 = vpop.f32.mrb[0].mxu0
      %v2409 = vpop.f32.mrb[0].mxu0
      %v2410 = vadd.f32 %v2345, %v2409
      %v2411 = vpop.f32.mrb[0].mxu0
      %2412 = vdwg.mxu0
      %2413 = vmatprep.subr.bf16.mxu0 0
      %2414 = vmatpush1.bf16.msra.mxu0 %v2187
      %2415 = vmatprep.subr.bf16.mxu0 0
      %2416 = vmatpush1.bf16.msra.mxu0 %v2188
      %2417 = vmatprep.subr.bf16.mxu0 0
      %2418 = vmatpush1.bf16.msra.mxu0 %v2189
      %2419 = vmatprep.subr.bf16.mxu0 0
      %2420 = vmatpush1.bf16.msra.mxu0 %v2190
      %2421 = vmatprep.subr.bf16.mxu0 0
      %2422 = vmatpush1.bf16.msra.mxu0 %v2191
      %2423 = vmatprep.subr.bf16.mxu0 0
      %2424 = vmatpush1.bf16.msra.mxu0 %v2192
      %2425 = vmatprep.subr.bf16.mxu0 0
      %2426 = vmatpush1.bf16.msra.mxu0 %v2193
      %2427 = vmatprep.subr.bf16.mxu0 0
      %2428 = vmatpush1.bf16.msra.mxu0 %v2194
      %2429 = vmatprep.subr.bf16.mxu0 0
      %2430 = vmatpush1.bf16.msra.mxu0 %v2195
      %2431 = vmatprep.subr.bf16.mxu0 0
      %2432 = vmatpush1.bf16.msra.mxu0 %v2196
      %2433 = vmatprep.subr.bf16.mxu0 0
      %2434 = vmatpush1.bf16.msra.mxu0 %v2197
      %2435 = vmatprep.subr.bf16.mxu0 0
      %2436 = vmatpush1.bf16.msra.mxu0 %v2198
      %2437 = vmatprep.subr.bf16.mxu0 0
      %2438 = vmatpush1.bf16.msra.mxu0 %v2199
      %2439 = vmatprep.subr.bf16.mxu0 0
      %2440 = vmatpush1.bf16.msra.mxu0 %v2200
      %2441 = vmatprep.subr.bf16.mxu0 0
      %2442 = vmatpush1.bf16.msra.mxu0 %v2201
      %2443 = vmatprep.subr.bf16.mxu0 0
      %2444 = vmatpush1.bf16.msra.mxu0 %v2202
      %2445 = vmatprep.mubr.bf16.mxu0 %v919
      %2446 = vmatmul.mubr.bf16.gmra.mrb[0].mxu0 %v918
      %v2447 = vpop.f32.mrb[0].mxu0
      %v2448 = vadd.f32 %v2383, %v2447
      %v2449 = vpop.f32.mrb[0].mxu0
      %v2450 = vpop.f32.mrb[0].mxu0
      %v2451 = vadd.f32 %v2386, %v2450
      %v2452 = vpop.f32.mrb[0].mxu0
      %2453 = vmatprep.mubr.bf16.mxu0 %v921
      %2454 = vmatmul.mubr.bf16.gmra.mrb[0].mxu0 %v920
      %v2455 = vpop.f32.mrb[0].mxu0
      %v2456 = vadd.f32 %v2391, %v2455
      %v2457 = vpop.f32.mrb[0].mxu0
      %v2458 = vpop.f32.mrb[0].mxu0
      %v2459 = vadd.f32 %v2394, %v2458
      %v2460 = vpop.f32.mrb[0].mxu0
      %2461 = vmatprep.mubr.bf16.mxu0 %v923
      %2462 = vmatmul.mubr.bf16.gmra.mrb[0].mxu0 %v922
      %v2463 = vpop.f32.mrb[0].mxu0
      %v2464 = vadd.f32 %v2399, %v2463
      %v2465 = vpop.f32.mrb[0].mxu0
      %v2466 = vpop.f32.mrb[0].mxu0
      %v2467 = vadd.f32 %v2402, %v2466
      %v2468 = vpop.f32.mrb[0].mxu0
      %2469 = vmatprep.mubr.bf16.mxu0 %v925
      %2470 = vmatmul.mubr.bf16.gmra.mrb[0].mxu0 %v924
      %v2471 = vpop.f32.mrb[0].mxu0
      %v2472 = vadd.f32 %v2407, %v2471
      %v2473 = vpop.f32.mrb[0].mxu0
      %v2474 = vpop.f32.mrb[0].mxu0
      %v2475 = vadd.f32 %v2410, %v2474
      %v2476 = vpop.f32.mrb[0].mxu0
      %2477 = vdwg.mxu0
      %2478 = vmatprep.subr.bf16.mxu0 0
      %2479 = vmatpush1.bf16.msra.mxu0 %v2203
      %2480 = vmatprep.subr.bf16.mxu0 0
      %2481 = vmatpush1.bf16.msra.mxu0 %v2204
      %2482 = vmatprep.subr.bf16.mxu0 0
      %2483 = vmatpush1.bf16.msra.mxu0 %v2205
      %2484 = vmatprep.subr.bf16.mxu0 0
      %2485 = vmatpush1.bf16.msra.mxu0 %v2206
      %2486 = vmatprep.subr.bf16.mxu0 0
      %2487 = vmatpush1.bf16.msra.mxu0 %v2207
      %2488 = vmatprep.subr.bf16.mxu0 0
      %2489 = vmatpush1.bf16.msra.mxu0 %v2208
      %2490 = vmatprep.subr.bf16.mxu0 0
      %2491 = vmatpush1.bf16.msra.mxu0 %v2209
      %2492 = vmatprep.subr.bf16.mxu0 0
      %2493 = vmatpush1.bf16.msra.mxu0 %v2210
      %2494 = vmatprep.subr.bf16.mxu0 0
      %2495 = vmatpush1.bf16.msra.mxu0 %v2211
      %2496 = vmatprep.subr.bf16.mxu0 0
      %2497 = vmatpush1.bf16.msra.mxu0 %v2212
      %2498 = vmatprep.subr.bf16.mxu0 0
      %2499 = vmatpush1.bf16.msra.mxu0 %v2213
      %2500 = vmatprep.subr.bf16.mxu0 0
      %2501 = vmatpush1.bf16.msra.mxu0 %v2214
      %2502 = vmatprep.subr.bf16.mxu0 0
      %2503 = vmatpush1.bf16.msra.mxu0 %v2215
      %2504 = vmatprep.subr.bf16.mxu0 0
      %2505 = vmatpush1.bf16.msra.mxu0 %v2216
      %2506 = vmatprep.subr.bf16.mxu0 0
      %2507 = vmatpush1.bf16.msra.mxu0 %v2217
      %2508 = vmatprep.subr.bf16.mxu0 0
      %2509 = vmatpush1.bf16.msra.mxu0 %v2218
      %2510 = vmatprep.mubr.bf16.mxu0 %v1755
      %2511 = vmatmul.mubr.bf16.gmra.mrb[0].mxu0 %v1754
      %v2512 = vpop.f32.mrb[0].mxu0
      %v2513 = vadd.f32 %v2448, %v2512
      %v2514 = vpop.f32.mrb[0].mxu0
      %v2515 = vpop.f32.mrb[0].mxu0
      %v2516 = vadd.f32 %v2451, %v2515
      %v2517 = vpop.f32.mrb[0].mxu0
      %2518 = vmatprep.mubr.bf16.mxu0 %v1757
      %2519 = vmatmul.mubr.bf16.gmra.mrb[0].mxu0 %v1756
      %v2520 = vpop.f32.mrb[0].mxu0
      %v2521 = vadd.f32 %v2456, %v2520
      %v2522 = vpop.f32.mrb[0].mxu0
      %v2523 = vpop.f32.mrb[0].mxu0
      %v2524 = vadd.f32 %v2459, %v2523
      %v2525 = vpop.f32.mrb[0].mxu0
      %2526 = vmatprep.mubr.bf16.mxu0 %v1759
      %2527 = vmatmul.mubr.bf16.gmra.mrb[0].mxu0 %v1758
      %v2528 = vpop.f32.mrb[0].mxu0
      %v2529 = vadd.f32 %v2464, %v2528
      %v2530 = vpop.f32.mrb[0].mxu0
      %v2531 = vpop.f32.mrb[0].mxu0
      %v2532 = vadd.f32 %v2467, %v2531
      %v2533 = vpop.f32.mrb[0].mxu0
      %2534 = vmatprep.mubr.bf16.mxu0 %v1761
      %2535 = vmatmul.mubr.bf16.gmra.mrb[0].mxu0 %v1760
      %v2536 = vpop.f32.mrb[0].mxu0
      %v2537 = vadd.f32 %v2472, %v2536
      %v2538 = vpop.f32.mrb[0].mxu0
      %v2539 = vpop.f32.mrb[0].mxu0
      %v2540 = vadd.f32 %v2475, %v2539
      %v2541 = vpop.f32.mrb[0].mxu0
      %2542 = vdwg.mxu0
      %v2543 = vadd.f32 %v1676, %v1679
      %v2544 = vadd.f32 %v2543, %v1684
      %v2545 = vadd.f32 %v2544, %v1687
      %v2546 = vadd.f32 %v2545, %v1692
      %v2547 = vadd.f32 %v2546, %v1695
      %v2548 = vadd.f32 %v2547, %v1700
      %v2549 = vadd.f32 %v2548, %v1703
      %v2550 = vrot.slane %v2549, 4
      %v2551 = vadd.f32 %v2549, %v2550
      %v2552 = vrot.slane %v2551, 2
      %v2553 = vadd.f32 %v2551, %v2552
      %v2554 = vrot.slane %v2553, 1
      %v2555 = vadd.f32 %v2553, %v2554
      %v2556 = vadd.f32 %v2513, %v2516
      %v2557 = vadd.f32 %v2556, %v2521
      %v2558 = vadd.f32 %v2557, %v2524
      %v2559 = vadd.f32 %v2558, %v2529
      %v2560 = vadd.f32 %v2559, %v2532
      %v2561 = vadd.f32 %v2560, %v2537
      %v2562 = vadd.f32 %v2561, %v2540
      %v2563 = vrot.slane %v2562, 4
      %v2564 = vadd.f32 %v2562, %v2563
      %v2565 = vrot.slane %v2564, 2
      %v2566 = vadd.f32 %v2564, %v2565
      %v2567 = vrot.slane %v2566, 1
      %v2568 = vadd.f32 %v2566, %v2567
      %v2569 = vadd.f32 %v2555, 0.0
      %v2570 = vadd.f32 %v2568, 0.0
      %v2571 = vmul.f32 %v1676, %v1676
      %v2572 = vmul.f32 %v2513, %v2513
      %v2573 = vmul.f32 %v1679, %v1679
      %v2574 = vmul.f32 %v2516, %v2516
      %v2575 = vmul.f32 %v1684, %v1684
      %v2576 = vmul.f32 %v2521, %v2521
      %v2577 = vmul.f32 %v1687, %v1687
      %v2578 = vmul.f32 %v2524, %v2524
      %v2579 = vmul.f32 %v1692, %v1692
      %v2580 = vmul.f32 %v2529, %v2529
      %v2581 = vmul.f32 %v1695, %v1695
      %v2582 = vmul.f32 %v2532, %v2532
      %v2583 = vmul.f32 %v1700, %v1700
      %v2584 = vmul.f32 %v2537, %v2537
      %v2585 = vmul.f32 %v1703, %v1703
      %v2586 = vmul.f32 %v2540, %v2540
      %v2587 = vadd.f32 %v2571, %v2573
      %v2588 = vadd.f32 %v2587, %v2575
      %v2589 = vadd.f32 %v2588, %v2577
      %v2590 = vadd.f32 %v2589, %v2579
      %v2591 = vadd.f32 %v2590, %v2581
      %v2592 = vadd.f32 %v2591, %v2583
      %v2593 = vadd.f32 %v2592, %v2585
      %v2594 = vrot.slane %v2593, 4
      %v2595 = vadd.f32 %v2593, %v2594
      %v2596 = vrot.slane %v2595, 2
      %v2597 = vadd.f32 %v2595, %v2596
      %v2598 = vrot.slane %v2597, 1
      %v2599 = vadd.f32 %v2597, %v2598
      %v2600 = vadd.f32 %v2572, %v2574
      %v2601 = vadd.f32 %v2600, %v2576
      %v2602 = vadd.f32 %v2601, %v2578
      %v2603 = vadd.f32 %v2602, %v2580
      %v2604 = vadd.f32 %v2603, %v2582
      %v2605 = vadd.f32 %v2604, %v2584
      %v2606 = vadd.f32 %v2605, %v2586
      %v2607 = vrot.slane %v2606, 4
      %v2608 = vadd.f32 %v2606, %v2607
      %v2609 = vrot.slane %v2608, 2
      %v2610 = vadd.f32 %v2608, %v2609
      %v2611 = vrot.slane %v2610, 1
      %v2612 = vadd.f32 %v2610, %v2611
      %v2613 = vadd.f32 %v2599, 0.0
      %v2614 = vadd.f32 %v2612, 0.0
      %2615 = vst [vmem:[%s208] sm:$0xff] %v1676
      %2616 = vst [vmem:[%s208 + $0x8] sm:$0xff] %v2513
      %2617 = vst [vmem:[%s208 + $0x20] sm:$0xff] %v1679
      %2618 = vst [vmem:[%s208 + $0x28] sm:$0xff] %v2516
      %2619 = vst [vmem:[%s208 + $0x40] sm:$0xff] %v1684
      %2620 = vst [vmem:[%s208 + $0x48] sm:$0xff] %v2521
      %2621 = vst [vmem:[%s208 + $0x60] sm:$0xff] %v1687
      %2622 = vst [vmem:[%s208 + $0x68] sm:$0xff] %v2524
      %2623 = vst [vmem:[%s208 + $0x80] sm:$0xff] %v1692
      %2624 = vst [vmem:[%s208 + $0x88] sm:$0xff] %v2529
      %2625 = vst [vmem:[%s208 + $0xa0] sm:$0xff] %v1695
      %2626 = vst [vmem:[%s208 + $0xa8] sm:$0xff] %v2532
      %2627 = vst [vmem:[%s208 + $0xc0] sm:$0xff] %v1700
      %2628 = vst [vmem:[%s208 + $0xc8] sm:$0xff] %v2537
      %2629 = vst [vmem:[%s208 + $0xe0] sm:$0xff] %v1703
      %2630 = vst [vmem:[%s208 + $0xe8] sm:$0xff] %v2540
      %v2639 = vunpack.c.l.b16 %v606
      %v2640 = vunpack.c.h.b16 %v606
      %v2641 = vunpack.c.l.b16 %v607
      %v2642 = vunpack.c.h.b16 %v607
      %v2643 = vunpack.c.l.b16 %v608
      %v2644 = vunpack.c.h.b16 %v608
      %v2645 = vunpack.c.l.b16 %v609
      %v2646 = vunpack.c.h.b16 %v609
      %v2647 = vunpack.c.l.b16 %v610
      %v2648 = vunpack.c.h.b16 %v610
      %v2649 = vunpack.c.l.b16 %v611
      %v2650 = vunpack.c.h.b16 %v611
      %v2651 = vunpack.c.l.b16 %v612
      %v2652 = vunpack.c.h.b16 %v612
      %v2653 = vunpack.c.l.b16 %v613
      %v2654 = vunpack.c.h.b16 %v613
      %v2655 = vpack.c.b16 %v2641, %v2639
      %v2656 = vpack.c.b16 %v2642, %v2640
      %v2657 = vpack.c.b16 %v2645, %v2643
      %v2658 = vpack.c.b16 %v2646, %v2644
      %v2659 = vpack.c.b16 %v2649, %v2647
      %v2660 = vpack.c.b16 %v2650, %v2648
      %v2661 = vpack.c.b16 %v2653, %v2651
      %v2662 = vpack.c.b16 %v2654, %v2652
      %v2671 = vunpack.c.l.b16 %v635
      %v2672 = vunpack.c.h.b16 %v635
      %v2673 = vunpack.c.l.b16 %v649
      %v2674 = vunpack.c.h.b16 %v649
      %v2675 = vunpack.c.l.b16 %v663
      %v2676 = vunpack.c.h.b16 %v663
      %v2677 = vunpack.c.l.b16 %v677
      %v2678 = vunpack.c.h.b16 %v677
      %v2679 = vunpack.c.l.b16 %v691
      %v2680 = vunpack.c.h.b16 %v691
      %v2681 = vunpack.c.l.b16 %v705
      %v2682 = vunpack.c.h.b16 %v705
      %v2683 = vunpack.c.l.b16 %v719
      %v2684 = vunpack.c.h.b16 %v719
      %v2685 = vunpack.c.l.b16 %v733
      %v2686 = vunpack.c.h.b16 %v733
      %v2687 = vpack.c.b16 %v2673, %v2671
      %v2688 = vpack.c.b16 %v2674, %v2672
      %v2689 = vpack.c.b16 %v2677, %v2675
      %v2690 = vpack.c.b16 %v2678, %v2676
      %v2691 = vpack.c.b16 %v2681, %v2679
      %v2692 = vpack.c.b16 %v2682, %v2680
      %v2693 = vpack.c.b16 %v2685, %v2683
      %v2694 = vpack.c.b16 %v2686, %v2684
      %s2703 = scalar_lea.vmem %s1, 1024
      %v2704 = vld [vmem:[%s2703] sm:$0xf]
      %v2705 = vld [vmem:[%s2703 + $0x4] sm:$0xf]
      %v2706 = vld [vmem:[%s2703 + $0x8] sm:$0xf]
      %v2707 = vld [vmem:[%s2703 + $0xc] sm:$0xf]
      %v2708 = vld [vmem:[%s2703 + $0x10] sm:$0xf]
      %v2709 = vld [vmem:[%s2703 + $0x14] sm:$0xf]
      %v2710 = vld [vmem:[%s2703 + $0x18] sm:$0xf]
      %v2711 = vld [vmem:[%s2703 + $0x1c] sm:$0xf]
      %v2712 = vld [vmem:[%s2703 + $0x20] sm:$0xf]
      %v2713 = vld [vmem:[%s2703 + $0x24] sm:$0xf]
      %v2714 = vld [vmem:[%s2703 + $0x28] sm:$0xf]
      %v2715 = vld [vmem:[%s2703 + $0x2c] sm:$0xf]
      %v2716 = vld [vmem:[%s2703 + $0x30] sm:$0xf]
      %v2717 = vld [vmem:[%s2703 + $0x34] sm:$0xf]
      %v2718 = vld [vmem:[%s2703 + $0x38] sm:$0xf]
      %v2719 = vld [vmem:[%s2703 + $0x3c] sm:$0xf]
      %v2720 = vld [vmem:[%s2703 + $0x40] sm:$0xf]
      %v2721 = vld [vmem:[%s2703 + $0x44] sm:$0xf]
      %v2722 = vld [vmem:[%s2703 + $0x48] sm:$0xf]
      %v2723 = vld [vmem:[%s2703 + $0x4c] sm:$0xf]
      %v2724 = vld [vmem:[%s2703 + $0x50] sm:$0xf]
      %v2725 = vld [vmem:[%s2703 + $0x54] sm:$0xf]
      %v2726 = vld [vmem:[%s2703 + $0x58] sm:$0xf]
      %v2727 = vld [vmem:[%s2703 + $0x5c] sm:$0xf]
      %v2728 = vld [vmem:[%s2703 + $0x60] sm:$0xf]
      %v2729 = vld [vmem:[%s2703 + $0x64] sm:$0xf]
      %v2730 = vld [vmem:[%s2703 + $0x68] sm:$0xf]
      %v2731 = vld [vmem:[%s2703 + $0x6c] sm:$0xf]
      %v2732 = vld [vmem:[%s2703 + $0x70] sm:$0xf]
      %v2733 = vld [vmem:[%s2703 + $0x74] sm:$0xf]
      %v2734 = vld [vmem:[%s2703 + $0x78] sm:$0xf]
      %v2735 = vld [vmem:[%s2703 + $0x7c] sm:$0xf]
      %v2736 = vld [vmem:[%s2703 + $0x80] sm:$0xf]
      %v2737 = vld [vmem:[%s2703 + $0x84] sm:$0xf]
      %v2738 = vld [vmem:[%s2703 + $0x88] sm:$0xf]
      %v2739 = vld [vmem:[%s2703 + $0x8c] sm:$0xf]
      %v2740 = vld [vmem:[%s2703 + $0x90] sm:$0xf]
      %v2741 = vld [vmem:[%s2703 + $0x94] sm:$0xf]
      %v2742 = vld [vmem:[%s2703 + $0x98] sm:$0xf]
      %v2743 = vld [vmem:[%s2703 + $0x9c] sm:$0xf]
      %v2744 = vld [vmem:[%s2703 + $0xa0] sm:$0xf]
      %v2745 = vld [vmem:[%s2703 + $0xa4] sm:$0xf]
      %v2746 = vld [vmem:[%s2703 + $0xa8] sm:$0xf]
      %v2747 = vld [vmem:[%s2703 + $0xac] sm:$0xf]
      %v2748 = vld [vmem:[%s2703 + $0xb0] sm:$0xf]
      %v2749 = vld [vmem:[%s2703 + $0xb4] sm:$0xf]
      %v2750 = vld [vmem:[%s2703 + $0xb8] sm:$0xf]
      %v2751 = vld [vmem:[%s2703 + $0xbc] sm:$0xf]
      %v2752 = vld [vmem:[%s2703 + $0xc0] sm:$0xf]
      %v2753 = vld [vmem:[%s2703 + $0xc4] sm:$0xf]
      %v2754 = vld [vmem:[%s2703 + $0xc8] sm:$0xf]
      %v2755 = vld [vmem:[%s2703 + $0xcc] sm:$0xf]
      %v2756 = vld [vmem:[%s2703 + $0xd0] sm:$0xf]
      %v2757 = vld [vmem:[%s2703 + $0xd4] sm:$0xf]
      %v2758 = vld [vmem:[%s2703 + $0xd8] sm:$0xf]
      %v2759 = vld [vmem:[%s2703 + $0xdc] sm:$0xf]
      %v2760 = vld [vmem:[%s2703 + $0xe0] sm:$0xf]
      %v2761 = vld [vmem:[%s2703 + $0xe4] sm:$0xf]
      %v2762 = vld [vmem:[%s2703 + $0xe8] sm:$0xf]
      %v2763 = vld [vmem:[%s2703 + $0xec] sm:$0xf]
      %v2764 = vld [vmem:[%s2703 + $0xf0] sm:$0xf]
      %v2765 = vld [vmem:[%s2703 + $0xf4] sm:$0xf]
      %v2766 = vld [vmem:[%s2703 + $0xf8] sm:$0xf]
      %v2767 = vld [vmem:[%s2703 + $0xfc] sm:$0xf]
      %v2768 = vld [vmem:[%s2703 + $0x100] sm:$0xf]
      %v2769 = vld [vmem:[%s2703 + $0x104] sm:$0xf]
      %v2770 = vld [vmem:[%s2703 + $0x108] sm:$0xf]
      %v2771 = vld [vmem:[%s2703 + $0x10c] sm:$0xf]
      %v2772 = vld [vmem:[%s2703 + $0x110] sm:$0xf]
      %v2773 = vld [vmem:[%s2703 + $0x114] sm:$0xf]
      %v2774 = vld [vmem:[%s2703 + $0x118] sm:$0xf]
      %v2775 = vld [vmem:[%s2703 + $0x11c] sm:$0xf]
      %v2776 = vld [vmem:[%s2703 + $0x120] sm:$0xf]
      %v2777 = vld [vmem:[%s2703 + $0x124] sm:$0xf]
      %v2778 = vld [vmem:[%s2703 + $0x128] sm:$0xf]
      %v2779 = vld [vmem:[%s2703 + $0x12c] sm:$0xf]
      %v2780 = vld [vmem:[%s2703 + $0x130] sm:$0xf]
      %v2781 = vld [vmem:[%s2703 + $0x134] sm:$0xf]
      %v2782 = vld [vmem:[%s2703 + $0x138] sm:$0xf]
      %v2783 = vld [vmem:[%s2703 + $0x13c] sm:$0xf]
      %v2784 = vld [vmem:[%s2703 + $0x140] sm:$0xf]
      %v2785 = vld [vmem:[%s2703 + $0x144] sm:$0xf]
      %v2786 = vld [vmem:[%s2703 + $0x148] sm:$0xf]
      %v2787 = vld [vmem:[%s2703 + $0x14c] sm:$0xf]
      %v2788 = vld [vmem:[%s2703 + $0x150] sm:$0xf]
      %v2789 = vld [vmem:[%s2703 + $0x154] sm:$0xf]
      %v2790 = vld [vmem:[%s2703 + $0x158] sm:$0xf]
      %v2791 = vld [vmem:[%s2703 + $0x15c] sm:$0xf]
      %v2792 = vld [vmem:[%s2703 + $0x160] sm:$0xf]
      %v2793 = vld [vmem:[%s2703 + $0x164] sm:$0xf]
      %v2794 = vld [vmem:[%s2703 + $0x168] sm:$0xf]
      %v2795 = vld [vmem:[%s2703 + $0x16c] sm:$0xf]
      %v2796 = vld [vmem:[%s2703 + $0x170] sm:$0xf]
      %v2797 = vld [vmem:[%s2703 + $0x174] sm:$0xf]
      %v2798 = vld [vmem:[%s2703 + $0x178] sm:$0xf]
      %v2799 = vld [vmem:[%s2703 + $0x17c] sm:$0xf]
      %v2800 = vld [vmem:[%s2703 + $0x180] sm:$0xf]
      %v2801 = vld [vmem:[%s2703 + $0x184] sm:$0xf]
      %v2802 = vld [vmem:[%s2703 + $0x188] sm:$0xf]
      %v2803 = vld [vmem:[%s2703 + $0x18c] sm:$0xf]
      %v2804 = vld [vmem:[%s2703 + $0x190] sm:$0xf]
      %v2805 = vld [vmem:[%s2703 + $0x194] sm:$0xf]
      %v2806 = vld [vmem:[%s2703 + $0x198] sm:$0xf]
      %v2807 = vld [vmem:[%s2703 + $0x19c] sm:$0xf]
      %v2808 = vld [vmem:[%s2703 + $0x1a0] sm:$0xf]
      %v2809 = vld [vmem:[%s2703 + $0x1a4] sm:$0xf]
      %v2810 = vld [vmem:[%s2703 + $0x1a8] sm:$0xf]
      %v2811 = vld [vmem:[%s2703 + $0x1ac] sm:$0xf]
      %v2812 = vld [vmem:[%s2703 + $0x1b0] sm:$0xf]
      %v2813 = vld [vmem:[%s2703 + $0x1b4] sm:$0xf]
      %v2814 = vld [vmem:[%s2703 + $0x1b8] sm:$0xf]
      %v2815 = vld [vmem:[%s2703 + $0x1bc] sm:$0xf]
      %v2816 = vld [vmem:[%s2703 + $0x1c0] sm:$0xf]
      %v2817 = vld [vmem:[%s2703 + $0x1c4] sm:$0xf]
      %v2818 = vld [vmem:[%s2703 + $0x1c8] sm:$0xf]
      %v2819 = vld [vmem:[%s2703 + $0x1cc] sm:$0xf]
      %v2820 = vld [vmem:[%s2703 + $0x1d0] sm:$0xf]
      %v2821 = vld [vmem:[%s2703 + $0x1d4] sm:$0xf]
      %v2822 = vld [vmem:[%s2703 + $0x1d8] sm:$0xf]
      %v2823 = vld [vmem:[%s2703 + $0x1dc] sm:$0xf]
      %v2824 = vld [vmem:[%s2703 + $0x1e0] sm:$0xf]
      %v2825 = vld [vmem:[%s2703 + $0x1e4] sm:$0xf]
      %v2826 = vld [vmem:[%s2703 + $0x1e8] sm:$0xf]
      %v2827 = vld [vmem:[%s2703 + $0x1ec] sm:$0xf]
      %v2828 = vld [vmem:[%s2703 + $0x1f0] sm:$0xf]
      %v2829 = vld [vmem:[%s2703 + $0x1f4] sm:$0xf]
      %v2830 = vld [vmem:[%s2703 + $0x1f8] sm:$0xf]
      %v2831 = vld [vmem:[%s2703 + $0x1fc] sm:$0xf]
      %v2960 = vunpack.c.l.b16 %v2704
      %v2961 = vunpack.c.l.b16 %v2705
      %v2962 = vunpack.c.l.b16 %v2706
      %v2963 = vunpack.c.l.b16 %v2707
      %v2964 = vunpack.c.l.b16 %v2708
      %v2965 = vunpack.c.l.b16 %v2709
      %v2966 = vunpack.c.l.b16 %v2710
      %v2967 = vunpack.c.l.b16 %v2711
      %v2968 = vunpack.c.l.b16 %v2712
      %v2969 = vunpack.c.l.b16 %v2713
      %v2970 = vunpack.c.l.b16 %v2714
      %v2971 = vunpack.c.l.b16 %v2715
      %v2972 = vunpack.c.l.b16 %v2716
      %v2973 = vunpack.c.l.b16 %v2717
      %v2974 = vunpack.c.l.b16 %v2718
      %v2975 = vunpack.c.l.b16 %v2719
      %v2976 = vunpack.c.l.b16 %v2720
      %v2977 = vunpack.c.l.b16 %v2721
      %v2978 = vunpack.c.l.b16 %v2722
      %v2979 = vunpack.c.l.b16 %v2723
      %v2980 = vunpack.c.l.b16 %v2724
      %v2981 = vunpack.c.l.b16 %v2725
      %v2982 = vunpack.c.l.b16 %v2726
      %v2983 = vunpack.c.l.b16 %v2727
      %v2984 = vunpack.c.l.b16 %v2728
      %v2985 = vunpack.c.l.b16 %v2729
      %v2986 = vunpack.c.l.b16 %v2730
      %v2987 = vunpack.c.l.b16 %v2731
      %v2988 = vunpack.c.l.b16 %v2732
      %v2989 = vunpack.c.l.b16 %v2733
      %v2990 = vunpack.c.l.b16 %v2734
      %v2991 = vunpack.c.l.b16 %v2735
      %v2992 = vunpack.c.l.b16 %v2736
      %v2993 = vunpack.c.l.b16 %v2737
      %v2994 = vunpack.c.l.b16 %v2738
      %v2995 = vunpack.c.l.b16 %v2739
      %v2996 = vunpack.c.l.b16 %v2740
      %v2997 = vunpack.c.l.b16 %v2741
      %v2998 = vunpack.c.l.b16 %v2742
      %v2999 = vunpack.c.l.b16 %v2743
      %v3000 = vunpack.c.l.b16 %v2744
      %v3001 = vunpack.c.l.b16 %v2745
      %v3002 = vunpack.c.l.b16 %v2746
      %v3003 = vunpack.c.l.b16 %v2747
      %v3004 = vunpack.c.l.b16 %v2748
      %v3005 = vunpack.c.l.b16 %v2749
      %v3006 = vunpack.c.l.b16 %v2750
      %v3007 = vunpack.c.l.b16 %v2751
      %v3008 = vunpack.c.l.b16 %v2752
      %v3009 = vunpack.c.l.b16 %v2753
      %v3010 = vunpack.c.l.b16 %v2754
      %v3011 = vunpack.c.l.b16 %v2755
      %v3012 = vunpack.c.l.b16 %v2756
      %v3013 = vunpack.c.l.b16 %v2757
      %v3014 = vunpack.c.l.b16 %v2758
      %v3015 = vunpack.c.l.b16 %v2759
      %v3016 = vunpack.c.l.b16 %v2760
      %v3017 = vunpack.c.l.b16 %v2761
      %v3018 = vunpack.c.l.b16 %v2762
      %v3019 = vunpack.c.l.b16 %v2763
      %v3020 = vunpack.c.l.b16 %v2764
      %v3021 = vunpack.c.l.b16 %v2765
      %v3022 = vunpack.c.l.b16 %v2766
      %v3023 = vunpack.c.l.b16 %v2767
      %v3024 = vunpack.c.l.b16 %v2768
      %v3025 = vunpack.c.l.b16 %v2769
      %v3026 = vunpack.c.l.b16 %v2770
      %v3027 = vunpack.c.l.b16 %v2771
      %v3028 = vunpack.c.l.b16 %v2772
      %v3029 = vunpack.c.l.b16 %v2773
      %v3030 = vunpack.c.l.b16 %v2774
      %v3031 = vunpack.c.l.b16 %v2775
      %v3032 = vunpack.c.l.b16 %v2776
      %v3033 = vunpack.c.l.b16 %v2777
      %v3034 = vunpack.c.l.b16 %v2778
      %v3035 = vunpack.c.l.b16 %v2779
      %v3036 = vunpack.c.l.b16 %v2780
      %v3037 = vunpack.c.l.b16 %v2781
      %v3038 = vunpack.c.l.b16 %v2782
      %v3039 = vunpack.c.l.b16 %v2783
      %v3040 = vunpack.c.l.b16 %v2784
      %v3041 = vunpack.c.l.b16 %v2785
      %v3042 = vunpack.c.l.b16 %v2786
      %v3043 = vunpack.c.l.b16 %v2787
      %v3044 = vunpack.c.l.b16 %v2788
      %v3045 = vunpack.c.l.b16 %v2789
      %v3046 = vunpack.c.l.b16 %v2790
      %v3047 = vunpack.c.l.b16 %v2791
      %v3048 = vunpack.c.l.b16 %v2792
      %v3049 = vunpack.c.l.b16 %v2793
      %v3050 = vunpack.c.l.b16 %v2794
      %v3051 = vunpack.c.l.b16 %v2795
      %v3052 = vunpack.c.l.b16 %v2796
      %v3053 = vunpack.c.l.b16 %v2797
      %v3054 = vunpack.c.l.b16 %v2798
      %v3055 = vunpack.c.l.b16 %v2799
      %v3056 = vunpack.c.l.b16 %v2800
      %v3057 = vunpack.c.l.b16 %v2801
      %v3058 = vunpack.c.l.b16 %v2802
      %v3059 = vunpack.c.l.b16 %v2803
      %v3060 = vunpack.c.l.b16 %v2804
      %v3061 = vunpack.c.l.b16 %v2805
      %v3062 = vunpack.c.l.b16 %v2806
      %v3063 = vunpack.c.l.b16 %v2807
      %v3064 = vunpack.c.l.b16 %v2808
      %v3065 = vunpack.c.l.b16 %v2809
      %v3066 = vunpack.c.l.b16 %v2810
      %v3067 = vunpack.c.l.b16 %v2811
      %v3068 = vunpack.c.l.b16 %v2812
      %v3069 = vunpack.c.l.b16 %v2813
      %v3070 = vunpack.c.l.b16 %v2814
      %v3071 = vunpack.c.l.b16 %v2815
      %v3072 = vunpack.c.l.b16 %v2816
      %v3073 = vunpack.c.l.b16 %v2817
      %v3074 = vunpack.c.l.b16 %v2818
      %v3075 = vunpack.c.l.b16 %v2819
      %v3076 = vunpack.c.l.b16 %v2820
      %v3077 = vunpack.c.l.b16 %v2821
      %v3078 = vunpack.c.l.b16 %v2822
      %v3079 = vunpack.c.l.b16 %v2823
      %v3080 = vunpack.c.l.b16 %v2824
      %v3081 = vunpack.c.l.b16 %v2825
      %v3082 = vunpack.c.l.b16 %v2826
      %v3083 = vunpack.c.l.b16 %v2827
      %v3084 = vunpack.c.l.b16 %v2828
      %v3085 = vunpack.c.l.b16 %v2829
      %v3086 = vunpack.c.l.b16 %v2830
      %v3087 = vunpack.c.l.b16 %v2831
      %v3088 = vpack.c.b16 %v2961, %v2960
      %v3089 = vpack.c.b16 %v2963, %v2962
      %v3090 = vpack.c.b16 %v2965, %v2964
      %v3091 = vpack.c.b16 %v2967, %v2966
      %v3092 = vpack.c.b16 %v2969, %v2968
      %v3093 = vpack.c.b16 %v2971, %v2970
      %v3094 = vpack.c.b16 %v2973, %v2972
      %v3095 = vpack.c.b16 %v2975, %v2974
      %v3096 = vpack.c.b16 %v2977, %v2976
      %v3097 = vpack.c.b16 %v2979, %v2978
      %v3098 = vpack.c.b16 %v2981, %v2980
      %v3099 = vpack.c.b16 %v2983, %v2982
      %v3100 = vpack.c.b16 %v2985, %v2984
      %v3101 = vpack.c.b16 %v2987, %v2986
      %v3102 = vpack.c.b16 %v2989, %v2988
      %v3103 = vpack.c.b16 %v2991, %v2990
      %v3104 = vpack.c.b16 %v2993, %v2992
      %v3105 = vpack.c.b16 %v2995, %v2994
      %v3106 = vpack.c.b16 %v2997, %v2996
      %v3107 = vpack.c.b16 %v2999, %v2998
      %v3108 = vpack.c.b16 %v3001, %v3000
      %v3109 = vpack.c.b16 %v3003, %v3002
      %v3110 = vpack.c.b16 %v3005, %v3004
      %v3111 = vpack.c.b16 %v3007, %v3006
      %v3112 = vpack.c.b16 %v3009, %v3008
      %v3113 = vpack.c.b16 %v3011, %v3010
      %v3114 = vpack.c.b16 %v3013, %v3012
      %v3115 = vpack.c.b16 %v3015, %v3014
      %v3116 = vpack.c.b16 %v3017, %v3016
      %v3117 = vpack.c.b16 %v3019, %v3018
      %v3118 = vpack.c.b16 %v3021, %v3020
      %v3119 = vpack.c.b16 %v3023, %v3022
      %v3120 = vpack.c.b16 %v3025, %v3024
      %v3121 = vpack.c.b16 %v3027, %v3026
      %v3122 = vpack.c.b16 %v3029, %v3028
      %v3123 = vpack.c.b16 %v3031, %v3030
      %v3124 = vpack.c.b16 %v3033, %v3032
      %v3125 = vpack.c.b16 %v3035, %v3034
      %v3126 = vpack.c.b16 %v3037, %v3036
      %v3127 = vpack.c.b16 %v3039, %v3038
      %v3128 = vpack.c.b16 %v3041, %v3040
      %v3129 = vpack.c.b16 %v3043, %v3042
      %v3130 = vpack.c.b16 %v3045, %v3044
      %v3131 = vpack.c.b16 %v3047, %v3046
      %v3132 = vpack.c.b16 %v3049, %v3048
      %v3133 = vpack.c.b16 %v3051, %v3050
      %v3134 = vpack.c.b16 %v3053, %v3052
      %v3135 = vpack.c.b16 %v3055, %v3054
      %v3136 = vpack.c.b16 %v3057, %v3056
      %v3137 = vpack.c.b16 %v3059, %v3058
      %v3138 = vpack.c.b16 %v3061, %v3060
      %v3139 = vpack.c.b16 %v3063, %v3062
      %v3140 = vpack.c.b16 %v3065, %v3064
      %v3141 = vpack.c.b16 %v3067, %v3066
      %v3142 = vpack.c.b16 %v3069, %v3068
      %v3143 = vpack.c.b16 %v3071, %v3070
      %v3144 = vpack.c.b16 %v3073, %v3072
      %v3145 = vpack.c.b16 %v3075, %v3074
      %v3146 = vpack.c.b16 %v3077, %v3076
      %v3147 = vpack.c.b16 %v3079, %v3078
      %v3148 = vpack.c.b16 %v3081, %v3080
      %v3149 = vpack.c.b16 %v3083, %v3082
      %v3150 = vpack.c.b16 %v3085, %v3084
      %v3151 = vpack.c.b16 %v3087, %v3086
      %3216 = vmatprep.subr.bf16.mxu0 0
      %3217 = vmatpush1.bf16.msra.mxu0 %v3088
      %3218 = vmatprep.subr.bf16.mxu0 0
      %3219 = vmatpush1.bf16.msra.mxu0 %v3089
      %3220 = vmatprep.subr.bf16.mxu0 0
      %3221 = vmatpush1.bf16.msra.mxu0 %v3090
      %3222 = vmatprep.subr.bf16.mxu0 0
      %3223 = vmatpush1.bf16.msra.mxu0 %v3091
      %3224 = vmatprep.subr.bf16.mxu0 0
      %3225 = vmatpush1.bf16.msra.mxu0 %v3092
      %3226 = vmatprep.subr.bf16.mxu0 0
      %3227 = vmatpush1.bf16.msra.mxu0 %v3093
      %3228 = vmatprep.subr.bf16.mxu0 0
      %3229 = vmatpush1.bf16.msra.mxu0 %v3094
      %3230 = vmatprep.subr.bf16.mxu0 0
      %3231 = vmatpush1.bf16.msra.mxu0 %v3095
      %3232 = vmatprep.subr.bf16.mxu0 0
      %3233 = vmatpush1.bf16.msra.mxu0 %v3096
      %3234 = vmatprep.subr.bf16.mxu0 0
      %3235 = vmatpush1.bf16.msra.mxu0 %v3097
      %3236 = vmatprep.subr.bf16.mxu0 0
      %3237 = vmatpush1.bf16.msra.mxu0 %v3098
      %3238 = vmatprep.subr.bf16.mxu0 0
      %3239 = vmatpush1.bf16.msra.mxu0 %v3099
      %3240 = vmatprep.subr.bf16.mxu0 0
      %3241 = vmatpush1.bf16.msra.mxu0 %v3100
      %3242 = vmatprep.subr.bf16.mxu0 0
      %3243 = vmatpush1.bf16.msra.mxu0 %v3101
      %3244 = vmatprep.subr.bf16.mxu0 0
      %3245 = vmatpush1.bf16.msra.mxu0 %v3102
      %3246 = vmatprep.subr.bf16.mxu0 0
      %3247 = vmatpush1.bf16.msra.mxu0 %v3103
      %3248 = vmatprep.mubr.bf16.mxu0 %v887
      %3249 = vmatmul.mubr.bf16.gmra.mrb[0].mxu0 %v886
      %v3250 = vpop.f32.mrb[0].mxu0
      %v3251 = vadd.f32 0.0, %v3250
      %v3252 = vpop.f32.mrb[0].mxu0
      %v3253 = vpop.f32.mrb[0].mxu0
      %v3254 = vadd.f32 0.0, %v3253
      %v3255 = vpop.f32.mrb[0].mxu0
      %3256 = vmatprep.mubr.bf16.mxu0 %v889
      %3257 = vmatmul.mubr.bf16.gmra.mrb[0].mxu0 %v888
      %v3258 = vpop.f32.mrb[0].mxu0
      %v3259 = vadd.f32 0.0, %v3258
      %v3260 = vpop.f32.mrb[0].mxu0
      %v3261 = vpop.f32.mrb[0].mxu0
      %v3262 = vadd.f32 0.0, %v3261
      %v3263 = vpop.f32.mrb[0].mxu0
      %3264 = vmatprep.mubr.bf16.mxu0 %v891
      %3265 = vmatmul.mubr.bf16.gmra.mrb[0].mxu0 %v890
      %v3266 = vpop.f32.mrb[0].mxu0
      %v3267 = vadd.f32 0.0, %v3266
      %v3268 = vpop.f32.mrb[0].mxu0
      %v3269 = vpop.f32.mrb[0].mxu0
      %v3270 = vadd.f32 0.0, %v3269
      %v3271 = vpop.f32.mrb[0].mxu0
      %3272 = vmatprep.mubr.bf16.mxu0 %v893
      %3273 = vmatmul.mubr.bf16.gmra.mrb[0].mxu0 %v892
      %v3274 = vpop.f32.mrb[0].mxu0
      %v3275 = vadd.f32 0.0, %v3274
      %v3276 = vpop.f32.mrb[0].mxu0
      %v3277 = vpop.f32.mrb[0].mxu0
      %v3278 = vadd.f32 0.0, %v3277
      %v3279 = vpop.f32.mrb[0].mxu0
      %3280 = vdwg.mxu0
      %3281 = vmatprep.subr.bf16.mxu0 0
      %3282 = vmatpush1.bf16.msra.mxu0 %v3104
      %3283 = vmatprep.subr.bf16.mxu0 0
      %3284 = vmatpush1.bf16.msra.mxu0 %v3105
      %3285 = vmatprep.subr.bf16.mxu0 0
      %3286 = vmatpush1.bf16.msra.mxu0 %v3106
      %3287 = vmatprep.subr.bf16.mxu0 0
      %3288 = vmatpush1.bf16.msra.mxu0 %v3107
      %3289 = vmatprep.subr.bf16.mxu0 0
      %3290 = vmatpush1.bf16.msra.mxu0 %v3108
      %3291 = vmatprep.subr.bf16.mxu0 0
      %3292 = vmatpush1.bf16.msra.mxu0 %v3109
      %3293 = vmatprep.subr.bf16.mxu0 0
      %3294 = vmatpush1.bf16.msra.mxu0 %v3110
      %3295 = vmatprep.subr.bf16.mxu0 0
      %3296 = vmatpush1.bf16.msra.mxu0 %v3111
      %3297 = vmatprep.subr.bf16.mxu0 0
      %3298 = vmatpush1.bf16.msra.mxu0 %v3112
      %3299 = vmatprep.subr.bf16.mxu0 0
      %3300 = vmatpush1.bf16.msra.mxu0 %v3113
      %3301 = vmatprep.subr.bf16.mxu0 0
      %3302 = vmatpush1.bf16.msra.mxu0 %v3114
      %3303 = vmatprep.subr.bf16.mxu0 0
      %3304 = vmatpush1.bf16.msra.mxu0 %v3115
      %3305 = vmatprep.subr.bf16.mxu0 0
      %3306 = vmatpush1.bf16.msra.mxu0 %v3116
      %3307 = vmatprep.subr.bf16.mxu0 0
      %3308 = vmatpush1.bf16.msra.mxu0 %v3117
      %3309 = vmatprep.subr.bf16.mxu0 0
      %3310 = vmatpush1.bf16.msra.mxu0 %v3118
      %3311 = vmatprep.subr.bf16.mxu0 0
      %3312 = vmatpush1.bf16.msra.mxu0 %v3119
      %3313 = vmatprep.mubr.bf16.mxu0 %v919
      %3314 = vmatmul.mubr.bf16.gmra.mrb[0].mxu0 %v918
      %v3315 = vpop.f32.mrb[0].mxu0
      %v3316 = vadd.f32 %v3251, %v3315
      %v3317 = vpop.f32.mrb[0].mxu0
      %v3318 = vpop.f32.mrb[0].mxu0
      %v3319 = vadd.f32 %v3254, %v3318
      %v3320 = vpop.f32.mrb[0].mxu0
      %3321 = vmatprep.mubr.bf16.mxu0 %v921
      %3322 = vmatmul.mubr.bf16.gmra.mrb[0].mxu0 %v920
      %v3323 = vpop.f32.mrb[0].mxu0
      %v3324 = vadd.f32 %v3259, %v3323
      %v3325 = vpop.f32.mrb[0].mxu0
      %v3326 = vpop.f32.mrb[0].mxu0
      %v3327 = vadd.f32 %v3262, %v3326
      %v3328 = vpop.f32.mrb[0].mxu0
      %3329 = vmatprep.mubr.bf16.mxu0 %v923
      %3330 = vmatmul.mubr.bf16.gmra.mrb[0].mxu0 %v922
      %v3331 = vpop.f32.mrb[0].mxu0
      %v3332 = vadd.f32 %v3267, %v3331
      %v3333 = vpop.f32.mrb[0].mxu0
      %v3334 = vpop.f32.mrb[0].mxu0
      %v3335 = vadd.f32 %v3270, %v3334
      %v3336 = vpop.f32.mrb[0].mxu0
      %3337 = vmatprep.mubr.bf16.mxu0 %v925
      %3338 = vmatmul.mubr.bf16.gmra.mrb[0].mxu0 %v924
      %v3339 = vpop.f32.mrb[0].mxu0
      %v3340 = vadd.f32 %v3275, %v3339
      %v3341 = vpop.f32.mrb[0].mxu0
      %v3342 = vpop.f32.mrb[0].mxu0
      %v3343 = vadd.f32 %v3278, %v3342
      %v3344 = vpop.f32.mrb[0].mxu0
      %3345 = vdwg.mxu0
      %3346 = vmatprep.subr.bf16.mxu0 0
      %3347 = vmatpush1.bf16.msra.mxu0 %v3120
      %3348 = vmatprep.subr.bf16.mxu0 0
      %3349 = vmatpush1.bf16.msra.mxu0 %v3121
      %3350 = vmatprep.subr.bf16.mxu0 0
      %3351 = vmatpush1.bf16.msra.mxu0 %v3122
      %3352 = vmatprep.subr.bf16.mxu0 0
      %3353 = vmatpush1.bf16.msra.mxu0 %v3123
      %3354 = vmatprep.subr.bf16.mxu0 0
      %3355 = vmatpush1.bf16.msra.mxu0 %v3124
      %3356 = vmatprep.subr.bf16.mxu0 0
      %3357 = vmatpush1.bf16.msra.mxu0 %v3125
      %3358 = vmatprep.subr.bf16.mxu0 0
      %3359 = vmatpush1.bf16.msra.mxu0 %v3126
      %3360 = vmatprep.subr.bf16.mxu0 0
      %3361 = vmatpush1.bf16.msra.mxu0 %v3127
      %3362 = vmatprep.subr.bf16.mxu0 0
      %3363 = vmatpush1.bf16.msra.mxu0 %v3128
      %3364 = vmatprep.subr.bf16.mxu0 0
      %3365 = vmatpush1.bf16.msra.mxu0 %v3129
      %3366 = vmatprep.subr.bf16.mxu0 0
      %3367 = vmatpush1.bf16.msra.mxu0 %v3130
      %3368 = vmatprep.subr.bf16.mxu0 0
      %3369 = vmatpush1.bf16.msra.mxu0 %v3131
      %3370 = vmatprep.subr.bf16.mxu0 0
      %3371 = vmatpush1.bf16.msra.mxu0 %v3132
      %3372 = vmatprep.subr.bf16.mxu0 0
      %3373 = vmatpush1.bf16.msra.mxu0 %v3133
      %3374 = vmatprep.subr.bf16.mxu0 0
      %3375 = vmatpush1.bf16.msra.mxu0 %v3134
      %3376 = vmatprep.subr.bf16.mxu0 0
      %3377 = vmatpush1.bf16.msra.mxu0 %v3135
      %3378 = vmatprep.mubr.bf16.mxu0 %v2656
      %3379 = vmatmul.mubr.bf16.gmra.mrb[0].mxu0 %v2655
      %v3380 = vpop.f32.mrb[0].mxu0
      %v3381 = vadd.f32 %v3316, %v3380
      %v3382 = vpop.f32.mrb[0].mxu0
      %v3383 = vpop.f32.mrb[0].mxu0
      %v3384 = vadd.f32 %v3319, %v3383
      %v3385 = vpop.f32.mrb[0].mxu0
      %3386 = vmatprep.mubr.bf16.mxu0 %v2658
      %3387 = vmatmul.mubr.bf16.gmra.mrb[0].mxu0 %v2657
      %v3388 = vpop.f32.mrb[0].mxu0
      %v3389 = vadd.f32 %v3324, %v3388
      %v3390 = vpop.f32.mrb[0].mxu0
      %v3391 = vpop.f32.mrb[0].mxu0
      %v3392 = vadd.f32 %v3327, %v3391
      %v3393 = vpop.f32.mrb[0].mxu0
      %3394 = vmatprep.mubr.bf16.mxu0 %v2660
      %3395 = vmatmul.mubr.bf16.gmra.mrb[0].mxu0 %v2659
      %v3396 = vpop.f32.mrb[0].mxu0
      %v3397 = vadd.f32 %v3332, %v3396
      %v3398 = vpop.f32.mrb[0].mxu0
      %v3399 = vpop.f32.mrb[0].mxu0
      %v3400 = vadd.f32 %v3335, %v3399
      %v3401 = vpop.f32.mrb[0].mxu0
      %3402 = vmatprep.mubr.bf16.mxu0 %v2662
      %3403 = vmatmul.mubr.bf16.gmra.mrb[0].mxu0 %v2661
      %v3404 = vpop.f32.mrb[0].mxu0
      %v3405 = vadd.f32 %v3340, %v3404
      %v3406 = vpop.f32.mrb[0].mxu0
      %v3407 = vpop.f32.mrb[0].mxu0
      %v3408 = vadd.f32 %v3343, %v3407
      %v3409 = vpop.f32.mrb[0].mxu0
      %3410 = vdwg.mxu0
      %3411 = vmatprep.subr.bf16.mxu0 0
      %3412 = vmatpush1.bf16.msra.mxu0 %v3136
      %3413 = vmatprep.subr.bf16.mxu0 0
      %3414 = vmatpush1.bf16.msra.mxu0 %v3137
      %3415 = vmatprep.subr.bf16.mxu0 0
      %3416 = vmatpush1.bf16.msra.mxu0 %v3138
      %3417 = vmatprep.subr.bf16.mxu0 0
      %3418 = vmatpush1.bf16.msra.mxu0 %v3139
      %3419 = vmatprep.subr.bf16.mxu0 0
      %3420 = vmatpush1.bf16.msra.mxu0 %v3140
      %3421 = vmatprep.subr.bf16.mxu0 0
      %3422 = vmatpush1.bf16.msra.mxu0 %v3141
      %3423 = vmatprep.subr.bf16.mxu0 0
      %3424 = vmatpush1.bf16.msra.mxu0 %v3142
      %3425 = vmatprep.subr.bf16.mxu0 0
      %3426 = vmatpush1.bf16.msra.mxu0 %v3143
      %3427 = vmatprep.subr.bf16.mxu0 0
      %3428 = vmatpush1.bf16.msra.mxu0 %v3144
      %3429 = vmatprep.subr.bf16.mxu0 0
      %3430 = vmatpush1.bf16.msra.mxu0 %v3145
      %3431 = vmatprep.subr.bf16.mxu0 0
      %3432 = vmatpush1.bf16.msra.mxu0 %v3146
      %3433 = vmatprep.subr.bf16.mxu0 0
      %3434 = vmatpush1.bf16.msra.mxu0 %v3147
      %3435 = vmatprep.subr.bf16.mxu0 0
      %3436 = vmatpush1.bf16.msra.mxu0 %v3148
      %3437 = vmatprep.subr.bf16.mxu0 0
      %3438 = vmatpush1.bf16.msra.mxu0 %v3149
      %3439 = vmatprep.subr.bf16.mxu0 0
      %3440 = vmatpush1.bf16.msra.mxu0 %v3150
      %3441 = vmatprep.subr.bf16.mxu0 0
      %3442 = vmatpush1.bf16.msra.mxu0 %v3151
      %3443 = vmatprep.mubr.bf16.mxu0 %v2688
      %3444 = vmatmul.mubr.bf16.gmra.mrb[0].mxu0 %v2687
      %v3445 = vpop.f32.mrb[0].mxu0
      %v3446 = vadd.f32 %v3381, %v3445
      %v3447 = vpop.f32.mrb[0].mxu0
      %v3448 = vpop.f32.mrb[0].mxu0
      %v3449 = vadd.f32 %v3384, %v3448
      %v3450 = vpop.f32.mrb[0].mxu0
      %3451 = vmatprep.mubr.bf16.mxu0 %v2690
      %3452 = vmatmul.mubr.bf16.gmra.mrb[0].mxu0 %v2689
      %v3453 = vpop.f32.mrb[0].mxu0
      %v3454 = vadd.f32 %v3389, %v3453
      %v3455 = vpop.f32.mrb[0].mxu0
      %v3456 = vpop.f32.mrb[0].mxu0
      %v3457 = vadd.f32 %v3392, %v3456
      %v3458 = vpop.f32.mrb[0].mxu0
      %3459 = vmatprep.mubr.bf16.mxu0 %v2692
      %3460 = vmatmul.mubr.bf16.gmra.mrb[0].mxu0 %v2691
      %v3461 = vpop.f32.mrb[0].mxu0
      %v3462 = vadd.f32 %v3397, %v3461
      %v3463 = vpop.f32.mrb[0].mxu0
      %v3464 = vpop.f32.mrb[0].mxu0
      %v3465 = vadd.f32 %v3400, %v3464
      %v3466 = vpop.f32.mrb[0].mxu0
      %3467 = vmatprep.mubr.bf16.mxu0 %v2694
      %3468 = vmatmul.mubr.bf16.gmra.mrb[0].mxu0 %v2693
      %v3469 = vpop.f32.mrb[0].mxu0
      %v3470 = vadd.f32 %v3405, %v3469
      %v3471 = vpop.f32.mrb[0].mxu0
      %v3472 = vpop.f32.mrb[0].mxu0
      %v3473 = vadd.f32 %v3408, %v3472
      %v3474 = vpop.f32.mrb[0].mxu0
      %3475 = vdwg.mxu0
      %v3476 = vunpack.c.l.b16 %v761
      %v3477 = vunpack.c.h.b16 %v761
      %v3478 = vunpack.c.l.b16 %v765
      %v3479 = vunpack.c.h.b16 %v765
      %v3480 = vunpack.c.l.b16 %v769
      %v3481 = vunpack.c.h.b16 %v769
      %v3482 = vunpack.c.l.b16 %v773
      %v3483 = vunpack.c.h.b16 %v773
      %v3484 = vunpack.c.l.b16 %v777
      %v3485 = vunpack.c.h.b16 %v777
      %v3486 = vunpack.c.l.b16 %v781
      %v3487 = vunpack.c.h.b16 %v781
      %v3488 = vunpack.c.l.b16 %v785
      %v3489 = vunpack.c.h.b16 %v785
      %v3490 = vunpack.c.l.b16 %v789
      %v3491 = vunpack.c.h.b16 %v789
      %v3492 = vpack.c.b16 %v3478, %v3476
      %v3493 = vpack.c.b16 %v3479, %v3477
      %v3494 = vpack.c.b16 %v3482, %v3480
      %v3495 = vpack.c.b16 %v3483, %v3481
      %v3496 = vpack.c.b16 %v3486, %v3484
      %v3497 = vpack.c.b16 %v3487, %v3485
      %v3498 = vpack.c.b16 %v3490, %v3488
      %v3499 = vpack.c.b16 %v3491, %v3489
      %s3508 = scalar_lea.vmem %s1, 1536
      %v3509 = vld [vmem:[%s3508] sm:$0xf]
      %v3510 = vld [vmem:[%s3508 + $0x4] sm:$0xf]
      %v3511 = vld [vmem:[%s3508 + $0x8] sm:$0xf]
      %v3512 = vld [vmem:[%s3508 + $0xc] sm:$0xf]
      %v3513 = vld [vmem:[%s3508 + $0x10] sm:$0xf]
      %v3514 = vld [vmem:[%s3508 + $0x14] sm:$0xf]
      %v3515 = vld [vmem:[%s3508 + $0x18] sm:$0xf]
      %v3516 = vld [vmem:[%s3508 + $0x1c] sm:$0xf]
      %v3517 = vld [vmem:[%s3508 + $0x20] sm:$0xf]
      %v3518 = vld [vmem:[%s3508 + $0x24] sm:$0xf]
      %v3519 = vld [vmem:[%s3508 + $0x28] sm:$0xf]
      %v3520 = vld [vmem:[%s3508 + $0x2c] sm:$0xf]
      %v3521 = vld [vmem:[%s3508 + $0x30] sm:$0xf]
      %v3522 = vld [vmem:[%s3508 + $0x34] sm:$0xf]
      %v3523 = vld [vmem:[%s3508 + $0x38] sm:$0xf]
      %v3524 = vld [vmem:[%s3508 + $0x3c] sm:$0xf]
      %v3525 = vld [vmem:[%s3508 + $0x40] sm:$0xf]
      %v3526 = vld [vmem:[%s3508 + $0x44] sm:$0xf]
      %v3527 = vld [vmem:[%s3508 + $0x48] sm:$0xf]
      %v3528 = vld [vmem:[%s3508 + $0x4c] sm:$0xf]
      %v3529 = vld [vmem:[%s3508 + $0x50] sm:$0xf]
      %v3530 = vld [vmem:[%s3508 + $0x54] sm:$0xf]
      %v3531 = vld [vmem:[%s3508 + $0x58] sm:$0xf]
      %v3532 = vld [vmem:[%s3508 + $0x5c] sm:$0xf]
      %v3533 = vld [vmem:[%s3508 + $0x60] sm:$0xf]
      %v3534 = vld [vmem:[%s3508 + $0x64] sm:$0xf]
      %v3535 = vld [vmem:[%s3508 + $0x68] sm:$0xf]
      %v3536 = vld [vmem:[%s3508 + $0x6c] sm:$0xf]
      %v3537 = vld [vmem:[%s3508 + $0x70] sm:$0xf]
      %v3538 = vld [vmem:[%s3508 + $0x74] sm:$0xf]
      %v3539 = vld [vmem:[%s3508 + $0x78] sm:$0xf]
      %v3540 = vld [vmem:[%s3508 + $0x7c] sm:$0xf]
      %v3541 = vld [vmem:[%s3508 + $0x80] sm:$0xf]
      %v3542 = vld [vmem:[%s3508 + $0x84] sm:$0xf]
      %v3543 = vld [vmem:[%s3508 + $0x88] sm:$0xf]
      %v3544 = vld [vmem:[%s3508 + $0x8c] sm:$0xf]
      %v3545 = vld [vmem:[%s3508 + $0x90] sm:$0xf]
      %v3546 = vld [vmem:[%s3508 + $0x94] sm:$0xf]
      %v3547 = vld [vmem:[%s3508 + $0x98] sm:$0xf]
      %v3548 = vld [vmem:[%s3508 + $0x9c] sm:$0xf]
      %v3549 = vld [vmem:[%s3508 + $0xa0] sm:$0xf]
      %v3550 = vld [vmem:[%s3508 + $0xa4] sm:$0xf]
      %v3551 = vld [vmem:[%s3508 + $0xa8] sm:$0xf]
      %v3552 = vld [vmem:[%s3508 + $0xac] sm:$0xf]
      %v3553 = vld [vmem:[%s3508 + $0xb0] sm:$0xf]
      %v3554 = vld [vmem:[%s3508 + $0xb4] sm:$0xf]
      %v3555 = vld [vmem:[%s3508 + $0xb8] sm:$0xf]
      %v3556 = vld [vmem:[%s3508 + $0xbc] sm:$0xf]
      %v3557 = vld [vmem:[%s3508 + $0xc0] sm:$0xf]
      %v3558 = vld [vmem:[%s3508 + $0xc4] sm:$0xf]
      %v3559 = vld [vmem:[%s3508 + $0xc8] sm:$0xf]
      %v3560 = vld [vmem:[%s3508 + $0xcc] sm:$0xf]
      %v3561 = vld [vmem:[%s3508 + $0xd0] sm:$0xf]
      %v3562 = vld [vmem:[%s3508 + $0xd4] sm:$0xf]
      %v3563 = vld [vmem:[%s3508 + $0xd8] sm:$0xf]
      %v3564 = vld [vmem:[%s3508 + $0xdc] sm:$0xf]
      %v3565 = vld [vmem:[%s3508 + $0xe0] sm:$0xf]
      %v3566 = vld [vmem:[%s3508 + $0xe4] sm:$0xf]
      %v3567 = vld [vmem:[%s3508 + $0xe8] sm:$0xf]
      %v3568 = vld [vmem:[%s3508 + $0xec] sm:$0xf]
      %v3569 = vld [vmem:[%s3508 + $0xf0] sm:$0xf]
      %v3570 = vld [vmem:[%s3508 + $0xf4] sm:$0xf]
      %v3571 = vld [vmem:[%s3508 + $0xf8] sm:$0xf]
      %v3572 = vld [vmem:[%s3508 + $0xfc] sm:$0xf]
      %v3573 = vld [vmem:[%s3508 + $0x100] sm:$0xf]
      %v3574 = vld [vmem:[%s3508 + $0x104] sm:$0xf]
      %v3575 = vld [vmem:[%s3508 + $0x108] sm:$0xf]
      %v3576 = vld [vmem:[%s3508 + $0x10c] sm:$0xf]
      %v3577 = vld [vmem:[%s3508 + $0x110] sm:$0xf]
      %v3578 = vld [vmem:[%s3508 + $0x114] sm:$0xf]
      %v3579 = vld [vmem:[%s3508 + $0x118] sm:$0xf]
      %v3580 = vld [vmem:[%s3508 + $0x11c] sm:$0xf]
      %v3581 = vld [vmem:[%s3508 + $0x120] sm:$0xf]
      %v3582 = vld [vmem:[%s3508 + $0x124] sm:$0xf]
      %v3583 = vld [vmem:[%s3508 + $0x128] sm:$0xf]
      %v3584 = vld [vmem:[%s3508 + $0x12c] sm:$0xf]
      %v3585 = vld [vmem:[%s3508 + $0x130] sm:$0xf]
      %v3586 = vld [vmem:[%s3508 + $0x134] sm:$0xf]
      %v3587 = vld [vmem:[%s3508 + $0x138] sm:$0xf]
      %v3588 = vld [vmem:[%s3508 + $0x13c] sm:$0xf]
      %v3589 = vld [vmem:[%s3508 + $0x140] sm:$0xf]
      %v3590 = vld [vmem:[%s3508 + $0x144] sm:$0xf]
      %v3591 = vld [vmem:[%s3508 + $0x148] sm:$0xf]
      %v3592 = vld [vmem:[%s3508 + $0x14c] sm:$0xf]
      %v3593 = vld [vmem:[%s3508 + $0x150] sm:$0xf]
      %v3594 = vld [vmem:[%s3508 + $0x154] sm:$0xf]
      %v3595 = vld [vmem:[%s3508 + $0x158] sm:$0xf]
      %v3596 = vld [vmem:[%s3508 + $0x15c] sm:$0xf]
      %v3597 = vld [vmem:[%s3508 + $0x160] sm:$0xf]
      %v3598 = vld [vmem:[%s3508 + $0x164] sm:$0xf]
      %v3599 = vld [vmem:[%s3508 + $0x168] sm:$0xf]
      %v3600 = vld [vmem:[%s3508 + $0x16c] sm:$0xf]
      %v3601 = vld [vmem:[%s3508 + $0x170] sm:$0xf]
      %v3602 = vld [vmem:[%s3508 + $0x174] sm:$0xf]
      %v3603 = vld [vmem:[%s3508 + $0x178] sm:$0xf]
      %v3604 = vld [vmem:[%s3508 + $0x17c] sm:$0xf]
      %v3605 = vld [vmem:[%s3508 + $0x180] sm:$0xf]
      %v3606 = vld [vmem:[%s3508 + $0x184] sm:$0xf]
      %v3607 = vld [vmem:[%s3508 + $0x188] sm:$0xf]
      %v3608 = vld [vmem:[%s3508 + $0x18c] sm:$0xf]
      %v3609 = vld [vmem:[%s3508 + $0x190] sm:$0xf]
      %v3610 = vld [vmem:[%s3508 + $0x194] sm:$0xf]
      %v3611 = vld [vmem:[%s3508 + $0x198] sm:$0xf]
      %v3612 = vld [vmem:[%s3508 + $0x19c] sm:$0xf]
      %v3613 = vld [vmem:[%s3508 + $0x1a0] sm:$0xf]
      %v3614 = vld [vmem:[%s3508 + $0x1a4] sm:$0xf]
      %v3615 = vld [vmem:[%s3508 + $0x1a8] sm:$0xf]
      %v3616 = vld [vmem:[%s3508 + $0x1ac] sm:$0xf]
      %v3617 = vld [vmem:[%s3508 + $0x1b0] sm:$0xf]
      %v3618 = vld [vmem:[%s3508 + $0x1b4] sm:$0xf]
      %v3619 = vld [vmem:[%s3508 + $0x1b8] sm:$0xf]
      %v3620 = vld [vmem:[%s3508 + $0x1bc] sm:$0xf]
      %v3621 = vld [vmem:[%s3508 + $0x1c0] sm:$0xf]
      %v3622 = vld [vmem:[%s3508 + $0x1c4] sm:$0xf]
      %v3623 = vld [vmem:[%s3508 + $0x1c8] sm:$0xf]
      %v3624 = vld [vmem:[%s3508 + $0x1cc] sm:$0xf]
      %v3625 = vld [vmem:[%s3508 + $0x1d0] sm:$0xf]
      %v3626 = vld [vmem:[%s3508 + $0x1d4] sm:$0xf]
      %v3627 = vld [vmem:[%s3508 + $0x1d8] sm:$0xf]
      %v3628 = vld [vmem:[%s3508 + $0x1dc] sm:$0xf]
      %v3629 = vld [vmem:[%s3508 + $0x1e0] sm:$0xf]
      %v3630 = vld [vmem:[%s3508 + $0x1e4] sm:$0xf]
      %v3631 = vld [vmem:[%s3508 + $0x1e8] sm:$0xf]
      %v3632 = vld [vmem:[%s3508 + $0x1ec] sm:$0xf]
      %v3633 = vld [vmem:[%s3508 + $0x1f0] sm:$0xf]
      %v3634 = vld [vmem:[%s3508 + $0x1f4] sm:$0xf]
      %v3635 = vld [vmem:[%s3508 + $0x1f8] sm:$0xf]
      %v3636 = vld [vmem:[%s3508 + $0x1fc] sm:$0xf]
      %v3765 = vunpack.c.l.b16 %v3509
      %v3766 = vunpack.c.l.b16 %v3510
      %v3767 = vunpack.c.l.b16 %v3511
      %v3768 = vunpack.c.l.b16 %v3512
      %v3769 = vunpack.c.l.b16 %v3513
      %v3770 = vunpack.c.l.b16 %v3514
      %v3771 = vunpack.c.l.b16 %v3515
      %v3772 = vunpack.c.l.b16 %v3516
      %v3773 = vunpack.c.l.b16 %v3517
      %v3774 = vunpack.c.l.b16 %v3518
      %v3775 = vunpack.c.l.b16 %v3519
      %v3776 = vunpack.c.l.b16 %v3520
      %v3777 = vunpack.c.l.b16 %v3521
      %v3778 = vunpack.c.l.b16 %v3522
      %v3779 = vunpack.c.l.b16 %v3523
      %v3780 = vunpack.c.l.b16 %v3524
      %v3781 = vunpack.c.l.b16 %v3525
      %v3782 = vunpack.c.l.b16 %v3526
      %v3783 = vunpack.c.l.b16 %v3527
      %v3784 = vunpack.c.l.b16 %v3528
      %v3785 = vunpack.c.l.b16 %v3529
      %v3786 = vunpack.c.l.b16 %v3530
      %v3787 = vunpack.c.l.b16 %v3531
      %v3788 = vunpack.c.l.b16 %v3532
      %v3789 = vunpack.c.l.b16 %v3533
      %v3790 = vunpack.c.l.b16 %v3534
      %v3791 = vunpack.c.l.b16 %v3535
      %v3792 = vunpack.c.l.b16 %v3536
      %v3793 = vunpack.c.l.b16 %v3537
      %v3794 = vunpack.c.l.b16 %v3538
      %v3795 = vunpack.c.l.b16 %v3539
      %v3796 = vunpack.c.l.b16 %v3540
      %v3797 = vunpack.c.l.b16 %v3541
      %v3798 = vunpack.c.l.b16 %v3542
      %v3799 = vunpack.c.l.b16 %v3543
      %v3800 = vunpack.c.l.b16 %v3544
      %v3801 = vunpack.c.l.b16 %v3545
      %v3802 = vunpack.c.l.b16 %v3546
      %v3803 = vunpack.c.l.b16 %v3547
      %v3804 = vunpack.c.l.b16 %v3548
      %v3805 = vunpack.c.l.b16 %v3549
      %v3806 = vunpack.c.l.b16 %v3550
      %v3807 = vunpack.c.l.b16 %v3551
      %v3808 = vunpack.c.l.b16 %v3552
      %v3809 = vunpack.c.l.b16 %v3553
      %v3810 = vunpack.c.l.b16 %v3554
      %v3811 = vunpack.c.l.b16 %v3555
      %v3812 = vunpack.c.l.b16 %v3556
      %v3813 = vunpack.c.l.b16 %v3557
      %v3814 = vunpack.c.l.b16 %v3558
      %v3815 = vunpack.c.l.b16 %v3559
      %v3816 = vunpack.c.l.b16 %v3560
      %v3817 = vunpack.c.l.b16 %v3561
      %v3818 = vunpack.c.l.b16 %v3562
      %v3819 = vunpack.c.l.b16 %v3563
      %v3820 = vunpack.c.l.b16 %v3564
      %v3821 = vunpack.c.l.b16 %v3565
      %v3822 = vunpack.c.l.b16 %v3566
      %v3823 = vunpack.c.l.b16 %v3567
      %v3824 = vunpack.c.l.b16 %v3568
      %v3825 = vunpack.c.l.b16 %v3569
      %v3826 = vunpack.c.l.b16 %v3570
      %v3827 = vunpack.c.l.b16 %v3571
      %v3828 = vunpack.c.l.b16 %v3572
      %v3829 = vunpack.c.l.b16 %v3573
      %v3830 = vunpack.c.l.b16 %v3574
      %v3831 = vunpack.c.l.b16 %v3575
      %v3832 = vunpack.c.l.b16 %v3576
      %v3833 = vunpack.c.l.b16 %v3577
      %v3834 = vunpack.c.l.b16 %v3578
      %v3835 = vunpack.c.l.b16 %v3579
      %v3836 = vunpack.c.l.b16 %v3580
      %v3837 = vunpack.c.l.b16 %v3581
      %v3838 = vunpack.c.l.b16 %v3582
      %v3839 = vunpack.c.l.b16 %v3583
      %v3840 = vunpack.c.l.b16 %v3584
      %v3841 = vunpack.c.l.b16 %v3585
      %v3842 = vunpack.c.l.b16 %v3586
      %v3843 = vunpack.c.l.b16 %v3587
      %v3844 = vunpack.c.l.b16 %v3588
      %v3845 = vunpack.c.l.b16 %v3589
      %v3846 = vunpack.c.l.b16 %v3590
      %v3847 = vunpack.c.l.b16 %v3591
      %v3848 = vunpack.c.l.b16 %v3592
      %v3849 = vunpack.c.l.b16 %v3593
      %v3850 = vunpack.c.l.b16 %v3594
      %v3851 = vunpack.c.l.b16 %v3595
      %v3852 = vunpack.c.l.b16 %v3596
      %v3853 = vunpack.c.l.b16 %v3597
      %v3854 = vunpack.c.l.b16 %v3598
      %v3855 = vunpack.c.l.b16 %v3599
      %v3856 = vunpack.c.l.b16 %v3600
      %v3857 = vunpack.c.l.b16 %v3601
      %v3858 = vunpack.c.l.b16 %v3602
      %v3859 = vunpack.c.l.b16 %v3603
      %v3860 = vunpack.c.l.b16 %v3604
      %v3861 = vunpack.c.l.b16 %v3605
      %v3862 = vunpack.c.l.b16 %v3606
      %v3863 = vunpack.c.l.b16 %v3607
      %v3864 = vunpack.c.l.b16 %v3608
      %v3865 = vunpack.c.l.b16 %v3609
      %v3866 = vunpack.c.l.b16 %v3610
      %v3867 = vunpack.c.l.b16 %v3611
      %v3868 = vunpack.c.l.b16 %v3612
      %v3869 = vunpack.c.l.b16 %v3613
      %v3870 = vunpack.c.l.b16 %v3614
      %v3871 = vunpack.c.l.b16 %v3615
      %v3872 = vunpack.c.l.b16 %v3616
      %v3873 = vunpack.c.l.b16 %v3617
      %v3874 = vunpack.c.l.b16 %v3618
      %v3875 = vunpack.c.l.b16 %v3619
      %v3876 = vunpack.c.l.b16 %v3620
      %v3877 = vunpack.c.l.b16 %v3621
      %v3878 = vunpack.c.l.b16 %v3622
      %v3879 = vunpack.c.l.b16 %v3623
      %v3880 = vunpack.c.l.b16 %v3624
      %v3881 = vunpack.c.l.b16 %v3625
      %v3882 = vunpack.c.l.b16 %v3626
      %v3883 = vunpack.c.l.b16 %v3627
      %v3884 = vunpack.c.l.b16 %v3628
      %v3885 = vunpack.c.l.b16 %v3629
      %v3886 = vunpack.c.l.b16 %v3630
      %v3887 = vunpack.c.l.b16 %v3631
      %v3888 = vunpack.c.l.b16 %v3632
      %v3889 = vunpack.c.l.b16 %v3633
      %v3890 = vunpack.c.l.b16 %v3634
      %v3891 = vunpack.c.l.b16 %v3635
      %v3892 = vunpack.c.l.b16 %v3636
      %v3893 = vpack.c.b16 %v3766, %v3765
      %v3894 = vpack.c.b16 %v3768, %v3767
      %v3895 = vpack.c.b16 %v3770, %v3769
      %v3896 = vpack.c.b16 %v3772, %v3771
      %v3897 = vpack.c.b16 %v3774, %v3773
      %v3898 = vpack.c.b16 %v3776, %v3775
      %v3899 = vpack.c.b16 %v3778, %v3777
      %v3900 = vpack.c.b16 %v3780, %v3779
      %v3901 = vpack.c.b16 %v3782, %v3781
      %v3902 = vpack.c.b16 %v3784, %v3783
      %v3903 = vpack.c.b16 %v3786, %v3785
      %v3904 = vpack.c.b16 %v3788, %v3787
      %v3905 = vpack.c.b16 %v3790, %v3789
      %v3906 = vpack.c.b16 %v3792, %v3791
      %v3907 = vpack.c.b16 %v3794, %v3793
      %v3908 = vpack.c.b16 %v3796, %v3795
      %v3909 = vpack.c.b16 %v3798, %v3797
      %v3910 = vpack.c.b16 %v3800, %v3799
      %v3911 = vpack.c.b16 %v3802, %v3801
      %v3912 = vpack.c.b16 %v3804, %v3803
      %v3913 = vpack.c.b16 %v3806, %v3805
      %v3914 = vpack.c.b16 %v3808, %v3807
      %v3915 = vpack.c.b16 %v3810, %v3809
      %v3916 = vpack.c.b16 %v3812, %v3811
      %v3917 = vpack.c.b16 %v3814, %v3813
      %v3918 = vpack.c.b16 %v3816, %v3815
      %v3919 = vpack.c.b16 %v3818, %v3817
      %v3920 = vpack.c.b16 %v3820, %v3819
      %v3921 = vpack.c.b16 %v3822, %v3821
      %v3922 = vpack.c.b16 %v3824, %v3823
      %v3923 = vpack.c.b16 %v3826, %v3825
      %v3924 = vpack.c.b16 %v3828, %v3827
      %v3925 = vpack.c.b16 %v3830, %v3829
      %v3926 = vpack.c.b16 %v3832, %v3831
      %v3927 = vpack.c.b16 %v3834, %v3833
      %v3928 = vpack.c.b16 %v3836, %v3835
      %v3929 = vpack.c.b16 %v3838, %v3837
      %v3930 = vpack.c.b16 %v3840, %v3839
      %v3931 = vpack.c.b16 %v3842, %v3841
      %v3932 = vpack.c.b16 %v3844, %v3843
      %v3933 = vpack.c.b16 %v3846, %v3845
      %v3934 = vpack.c.b16 %v3848, %v3847
      %v3935 = vpack.c.b16 %v3850, %v3849
      %v3936 = vpack.c.b16 %v3852, %v3851
      %v3937 = vpack.c.b16 %v3854, %v3853
      %v3938 = vpack.c.b16 %v3856, %v3855
      %v3939 = vpack.c.b16 %v3858, %v3857
      %v3940 = vpack.c.b16 %v3860, %v3859
      %v3941 = vpack.c.b16 %v3862, %v3861
      %v3942 = vpack.c.b16 %v3864, %v3863
      %v3943 = vpack.c.b16 %v3866, %v3865
      %v3944 = vpack.c.b16 %v3868, %v3867
      %v3945 = vpack.c.b16 %v3870, %v3869
      %v3946 = vpack.c.b16 %v3872, %v3871
      %v3947 = vpack.c.b16 %v3874, %v3873
      %v3948 = vpack.c.b16 %v3876, %v3875
      %v3949 = vpack.c.b16 %v3878, %v3877
      %v3950 = vpack.c.b16 %v3880, %v3879
      %v3951 = vpack.c.b16 %v3882, %v3881
      %v3952 = vpack.c.b16 %v3884, %v3883
      %v3953 = vpack.c.b16 %v3886, %v3885
      %v3954 = vpack.c.b16 %v3888, %v3887
      %v3955 = vpack.c.b16 %v3890, %v3889
      %v3956 = vpack.c.b16 %v3892, %v3891
      %4021 = vmatprep.subr.bf16.mxu0 0
      %4022 = vmatpush1.bf16.msra.mxu0 %v3893
      %4023 = vmatprep.subr.bf16.mxu0 0
      %4024 = vmatpush1.bf16.msra.mxu0 %v3894
      %4025 = vmatprep.subr.bf16.mxu0 0
      %4026 = vmatpush1.bf16.msra.mxu0 %v3895
      %4027 = vmatprep.subr.bf16.mxu0 0
      %4028 = vmatpush1.bf16.msra.mxu0 %v3896
      %4029 = vmatprep.subr.bf16.mxu0 0
      %4030 = vmatpush1.bf16.msra.mxu0 %v3897
      %4031 = vmatprep.subr.bf16.mxu0 0
      %4032 = vmatpush1.bf16.msra.mxu0 %v3898
      %4033 = vmatprep.subr.bf16.mxu0 0
      %4034 = vmatpush1.bf16.msra.mxu0 %v3899
      %4035 = vmatprep.subr.bf16.mxu0 0
      %4036 = vmatpush1.bf16.msra.mxu0 %v3900
      %4037 = vmatprep.subr.bf16.mxu0 0
      %4038 = vmatpush1.bf16.msra.mxu0 %v3901
      %4039 = vmatprep.subr.bf16.mxu0 0
      %4040 = vmatpush1.bf16.msra.mxu0 %v3902
      %4041 = vmatprep.subr.bf16.mxu0 0
      %4042 = vmatpush1.bf16.msra.mxu0 %v3903
      %4043 = vmatprep.subr.bf16.mxu0 0
      %4044 = vmatpush1.bf16.msra.mxu0 %v3904
      %4045 = vmatprep.subr.bf16.mxu0 0
      %4046 = vmatpush1.bf16.msra.mxu0 %v3905
      %4047 = vmatprep.subr.bf16.mxu0 0
      %4048 = vmatpush1.bf16.msra.mxu0 %v3906
      %4049 = vmatprep.subr.bf16.mxu0 0
      %4050 = vmatpush1.bf16.msra.mxu0 %v3907
      %4051 = vmatprep.subr.bf16.mxu0 0
      %4052 = vmatpush1.bf16.msra.mxu0 %v3908
      %4053 = vmatprep.mubr.bf16.mxu0 %v919
      %4054 = vmatmul.mubr.bf16.gmra.mrb[0].mxu0 %v918
      %v4055 = vpop.f32.mrb[0].mxu0
      %v4056 = vadd.f32 0.0, %v4055
      %v4057 = vpop.f32.mrb[0].mxu0
      %v4058 = vpop.f32.mrb[0].mxu0
      %v4059 = vadd.f32 0.0, %v4058
      %v4060 = vpop.f32.mrb[0].mxu0
      %4061 = vmatprep.mubr.bf16.mxu0 %v921
      %4062 = vmatmul.mubr.bf16.gmra.mrb[0].mxu0 %v920
      %v4063 = vpop.f32.mrb[0].mxu0
      %v4064 = vadd.f32 0.0, %v4063
      %v4065 = vpop.f32.mrb[0].mxu0
      %v4066 = vpop.f32.mrb[0].mxu0
      %v4067 = vadd.f32 0.0, %v4066
      %v4068 = vpop.f32.mrb[0].mxu0
      %4069 = vmatprep.mubr.bf16.mxu0 %v923
      %4070 = vmatmul.mubr.bf16.gmra.mrb[0].mxu0 %v922
      %v4071 = vpop.f32.mrb[0].mxu0
      %v4072 = vadd.f32 0.0, %v4071
      %v4073 = vpop.f32.mrb[0].mxu0
      %v4074 = vpop.f32.mrb[0].mxu0
      %v4075 = vadd.f32 0.0, %v4074
      %v4076 = vpop.f32.mrb[0].mxu0
      %4077 = vmatprep.mubr.bf16.mxu0 %v925
      %4078 = vmatmul.mubr.bf16.gmra.mrb[0].mxu0 %v924
      %v4079 = vpop.f32.mrb[0].mxu0
      %v4080 = vadd.f32 0.0, %v4079
      %v4081 = vpop.f32.mrb[0].mxu0
      %v4082 = vpop.f32.mrb[0].mxu0
      %v4083 = vadd.f32 0.0, %v4082
      %v4084 = vpop.f32.mrb[0].mxu0
      %4085 = vdwg.mxu0
      %4086 = vmatprep.subr.bf16.mxu0 0
      %4087 = vmatpush1.bf16.msra.mxu0 %v3909
      %4088 = vmatprep.subr.bf16.mxu0 0
      %4089 = vmatpush1.bf16.msra.mxu0 %v3910
      %4090 = vmatprep.subr.bf16.mxu0 0
      %4091 = vmatpush1.bf16.msra.mxu0 %v3911
      %4092 = vmatprep.subr.bf16.mxu0 0
      %4093 = vmatpush1.bf16.msra.mxu0 %v3912
      %4094 = vmatprep.subr.bf16.mxu0 0
      %4095 = vmatpush1.bf16.msra.mxu0 %v3913
      %4096 = vmatprep.subr.bf16.mxu0 0
      %4097 = vmatpush1.bf16.msra.mxu0 %v3914
      %4098 = vmatprep.subr.bf16.mxu0 0
      %4099 = vmatpush1.bf16.msra.mxu0 %v3915
      %4100 = vmatprep.subr.bf16.mxu0 0
      %4101 = vmatpush1.bf16.msra.mxu0 %v3916
      %4102 = vmatprep.subr.bf16.mxu0 0
      %4103 = vmatpush1.bf16.msra.mxu0 %v3917
      %4104 = vmatprep.subr.bf16.mxu0 0
      %4105 = vmatpush1.bf16.msra.mxu0 %v3918
      %4106 = vmatprep.subr.bf16.mxu0 0
      %4107 = vmatpush1.bf16.msra.mxu0 %v3919
      %4108 = vmatprep.subr.bf16.mxu0 0
      %4109 = vmatpush1.bf16.msra.mxu0 %v3920
      %4110 = vmatprep.subr.bf16.mxu0 0
      %4111 = vmatpush1.bf16.msra.mxu0 %v3921
      %4112 = vmatprep.subr.bf16.mxu0 0
      %4113 = vmatpush1.bf16.msra.mxu0 %v3922
      %4114 = vmatprep.subr.bf16.mxu0 0
      %4115 = vmatpush1.bf16.msra.mxu0 %v3923
      %4116 = vmatprep.subr.bf16.mxu0 0
      %4117 = vmatpush1.bf16.msra.mxu0 %v3924
      %4118 = vmatprep.mubr.bf16.mxu0 %v1755
      %4119 = vmatmul.mubr.bf16.gmra.mrb[0].mxu0 %v1754
      %v4120 = vpop.f32.mrb[0].mxu0
      %v4121 = vadd.f32 %v4056, %v4120
      %v4122 = vpop.f32.mrb[0].mxu0
      %v4123 = vpop.f32.mrb[0].mxu0
      %v4124 = vadd.f32 %v4059, %v4123
      %v4125 = vpop.f32.mrb[0].mxu0
      %4126 = vmatprep.mubr.bf16.mxu0 %v1757
      %4127 = vmatmul.mubr.bf16.gmra.mrb[0].mxu0 %v1756
      %v4128 = vpop.f32.mrb[0].mxu0
      %v4129 = vadd.f32 %v4064, %v4128
      %v4130 = vpop.f32.mrb[0].mxu0
      %v4131 = vpop.f32.mrb[0].mxu0
      %v4132 = vadd.f32 %v4067, %v4131
      %v4133 = vpop.f32.mrb[0].mxu0
      %4134 = vmatprep.mubr.bf16.mxu0 %v1759
      %4135 = vmatmul.mubr.bf16.gmra.mrb[0].mxu0 %v1758
      %v4136 = vpop.f32.mrb[0].mxu0
      %v4137 = vadd.f32 %v4072, %v4136
      %v4138 = vpop.f32.mrb[0].mxu0
      %v4139 = vpop.f32.mrb[0].mxu0
      %v4140 = vadd.f32 %v4075, %v4139
      %v4141 = vpop.f32.mrb[0].mxu0
      %4142 = vmatprep.mubr.bf16.mxu0 %v1761
      %4143 = vmatmul.mubr.bf16.gmra.mrb[0].mxu0 %v1760
      %v4144 = vpop.f32.mrb[0].mxu0
      %v4145 = vadd.f32 %v4080, %v4144
      %v4146 = vpop.f32.mrb[0].mxu0
      %v4147 = vpop.f32.mrb[0].mxu0
      %v4148 = vadd.f32 %v4083, %v4147
      %v4149 = vpop.f32.mrb[0].mxu0
      %4150 = vdwg.mxu0
      %4151 = vmatprep.subr.bf16.mxu0 0
      %4152 = vmatpush1.bf16.msra.mxu0 %v3925
      %4153 = vmatprep.subr.bf16.mxu0 0
      %4154 = vmatpush1.bf16.msra.mxu0 %v3926
      %4155 = vmatprep.subr.bf16.mxu0 0
      %4156 = vmatpush1.bf16.msra.mxu0 %v3927
      %4157 = vmatprep.subr.bf16.mxu0 0
      %4158 = vmatpush1.bf16.msra.mxu0 %v3928
      %4159 = vmatprep.subr.bf16.mxu0 0
      %4160 = vmatpush1.bf16.msra.mxu0 %v3929
      %4161 = vmatprep.subr.bf16.mxu0 0
      %4162 = vmatpush1.bf16.msra.mxu0 %v3930
      %4163 = vmatprep.subr.bf16.mxu0 0
      %4164 = vmatpush1.bf16.msra.mxu0 %v3931
      %4165 = vmatprep.subr.bf16.mxu0 0
      %4166 = vmatpush1.bf16.msra.mxu0 %v3932
      %4167 = vmatprep.subr.bf16.mxu0 0
      %4168 = vmatpush1.bf16.msra.mxu0 %v3933
      %4169 = vmatprep.subr.bf16.mxu0 0
      %4170 = vmatpush1.bf16.msra.mxu0 %v3934
      %4171 = vmatprep.subr.bf16.mxu0 0
      %4172 = vmatpush1.bf16.msra.mxu0 %v3935
      %4173 = vmatprep.subr.bf16.mxu0 0
      %4174 = vmatpush1.bf16.msra.mxu0 %v3936
      %4175 = vmatprep.subr.bf16.mxu0 0
      %4176 = vmatpush1.bf16.msra.mxu0 %v3937
      %4177 = vmatprep.subr.bf16.mxu0 0
      %4178 = vmatpush1.bf16.msra.mxu0 %v3938
      %4179 = vmatprep.subr.bf16.mxu0 0
      %4180 = vmatpush1.bf16.msra.mxu0 %v3939
      %4181 = vmatprep.subr.bf16.mxu0 0
      %4182 = vmatpush1.bf16.msra.mxu0 %v3940
      %4183 = vmatprep.mubr.bf16.mxu0 %v2688
      %4184 = vmatmul.mubr.bf16.gmra.mrb[0].mxu0 %v2687
      %v4185 = vpop.f32.mrb[0].mxu0
      %v4186 = vadd.f32 %v4121, %v4185
      %v4187 = vpop.f32.mrb[0].mxu0
      %v4188 = vpop.f32.mrb[0].mxu0
      %v4189 = vadd.f32 %v4124, %v4188
      %v4190 = vpop.f32.mrb[0].mxu0
      %4191 = vmatprep.mubr.bf16.mxu0 %v2690
      %4192 = vmatmul.mubr.bf16.gmra.mrb[0].mxu0 %v2689
      %v4193 = vpop.f32.mrb[0].mxu0
      %v4194 = vadd.f32 %v4129, %v4193
      %v4195 = vpop.f32.mrb[0].mxu0
      %v4196 = vpop.f32.mrb[0].mxu0
      %v4197 = vadd.f32 %v4132, %v4196
      %v4198 = vpop.f32.mrb[0].mxu0
      %4199 = vmatprep.mubr.bf16.mxu0 %v2692
      %4200 = vmatmul.mubr.bf16.gmra.mrb[0].mxu0 %v2691
      %v4201 = vpop.f32.mrb[0].mxu0
      %v4202 = vadd.f32 %v4137, %v4201
      %v4203 = vpop.f32.mrb[0].mxu0
      %v4204 = vpop.f32.mrb[0].mxu0
      %v4205 = vadd.f32 %v4140, %v4204
      %v4206 = vpop.f32.mrb[0].mxu0
      %4207 = vmatprep.mubr.bf16.mxu0 %v2694
      %4208 = vmatmul.mubr.bf16.gmra.mrb[0].mxu0 %v2693
      %v4209 = vpop.f32.mrb[0].mxu0
      %v4210 = vadd.f32 %v4145, %v4209
      %v4211 = vpop.f32.mrb[0].mxu0
      %v4212 = vpop.f32.mrb[0].mxu0
      %v4213 = vadd.f32 %v4148, %v4212
      %v4214 = vpop.f32.mrb[0].mxu0
      %4215 = vdwg.mxu0
      %4216 = vmatprep.subr.bf16.mxu0 0
      %4217 = vmatpush1.bf16.msra.mxu0 %v3941
      %4218 = vmatprep.subr.bf16.mxu0 0
      %4219 = vmatpush1.bf16.msra.mxu0 %v3942
      %4220 = vmatprep.subr.bf16.mxu0 0
      %4221 = vmatpush1.bf16.msra.mxu0 %v3943
      %4222 = vmatprep.subr.bf16.mxu0 0
      %4223 = vmatpush1.bf16.msra.mxu0 %v3944
      %4224 = vmatprep.subr.bf16.mxu0 0
      %4225 = vmatpush1.bf16.msra.mxu0 %v3945
      %4226 = vmatprep.subr.bf16.mxu0 0
      %4227 = vmatpush1.bf16.msra.mxu0 %v3946
      %4228 = vmatprep.subr.bf16.mxu0 0
      %4229 = vmatpush1.bf16.msra.mxu0 %v3947
      %4230 = vmatprep.subr.bf16.mxu0 0
      %4231 = vmatpush1.bf16.msra.mxu0 %v3948
      %4232 = vmatprep.subr.bf16.mxu0 0
      %4233 = vmatpush1.bf16.msra.mxu0 %v3949
      %4234 = vmatprep.subr.bf16.mxu0 0
      %4235 = vmatpush1.bf16.msra.mxu0 %v3950
      %4236 = vmatprep.subr.bf16.mxu0 0
      %4237 = vmatpush1.bf16.msra.mxu0 %v3951
      %4238 = vmatprep.subr.bf16.mxu0 0
      %4239 = vmatpush1.bf16.msra.mxu0 %v3952
      %4240 = vmatprep.subr.bf16.mxu0 0
      %4241 = vmatpush1.bf16.msra.mxu0 %v3953
      %4242 = vmatprep.subr.bf16.mxu0 0
      %4243 = vmatpush1.bf16.msra.mxu0 %v3954
      %4244 = vmatprep.subr.bf16.mxu0 0
      %4245 = vmatpush1.bf16.msra.mxu0 %v3955
      %4246 = vmatprep.subr.bf16.mxu0 0
      %4247 = vmatpush1.bf16.msra.mxu0 %v3956
      %4248 = vmatprep.mubr.bf16.mxu0 %v3493
      %4249 = vmatmul.mubr.bf16.gmra.mrb[0].mxu0 %v3492
      %v4250 = vpop.f32.mrb[0].mxu0
      %v4251 = vadd.f32 %v4186, %v4250
      %v4252 = vpop.f32.mrb[0].mxu0
      %v4253 = vpop.f32.mrb[0].mxu0
      %v4254 = vadd.f32 %v4189, %v4253
      %v4255 = vpop.f32.mrb[0].mxu0
      %4256 = vmatprep.mubr.bf16.mxu0 %v3495
      %4257 = vmatmul.mubr.bf16.gmra.mrb[0].mxu0 %v3494
      %v4258 = vpop.f32.mrb[0].mxu0
      %v4259 = vadd.f32 %v4194, %v4258
      %v4260 = vpop.f32.mrb[0].mxu0
      %v4261 = vpop.f32.mrb[0].mxu0
      %v4262 = vadd.f32 %v4197, %v4261
      %v4263 = vpop.f32.mrb[0].mxu0
      %4264 = vmatprep.mubr.bf16.mxu0 %v3497
      %4265 = vmatmul.mubr.bf16.gmra.mrb[0].mxu0 %v3496
      %v4266 = vpop.f32.mrb[0].mxu0
      %v4267 = vadd.f32 %v4202, %v4266
      %v4268 = vpop.f32.mrb[0].mxu0
      %v4269 = vpop.f32.mrb[0].mxu0
      %v4270 = vadd.f32 %v4205, %v4269
      %v4271 = vpop.f32.mrb[0].mxu0
      %4272 = vmatprep.mubr.bf16.mxu0 %v3499
      %4273 = vmatmul.mubr.bf16.gmra.mrb[0].mxu0 %v3498
      %v4274 = vpop.f32.mrb[0].mxu0
      %v4275 = vadd.f32 %v4210, %v4274
      %v4276 = vpop.f32.mrb[0].mxu0
      %v4277 = vpop.f32.mrb[0].mxu0
      %v4278 = vadd.f32 %v4213, %v4277
      %v4279 = vpop.f32.mrb[0].mxu0
      %4280 = vdwg.mxu0
      %v4281 = vadd.f32 %v3446, %v3449
      %v4282 = vadd.f32 %v4281, %v3454
      %v4283 = vadd.f32 %v4282, %v3457
      %v4284 = vadd.f32 %v4283, %v3462
      %v4285 = vadd.f32 %v4284, %v3465
      %v4286 = vadd.f32 %v4285, %v3470
      %v4287 = vadd.f32 %v4286, %v3473
      %v4288 = vrot.slane %v4287, 4
      %v4289 = vadd.f32 %v4287, %v4288
      %v4290 = vrot.slane %v4289, 2
      %v4291 = vadd.f32 %v4289, %v4290
      %v4292 = vrot.slane %v4291, 1
      %v4293 = vadd.f32 %v4291, %v4292
      %v4294 = vadd.f32 %v4251, %v4254
      %v4295 = vadd.f32 %v4294, %v4259
      %v4296 = vadd.f32 %v4295, %v4262
      %v4297 = vadd.f32 %v4296, %v4267
      %v4298 = vadd.f32 %v4297, %v4270
      %v4299 = vadd.f32 %v4298, %v4275
      %v4300 = vadd.f32 %v4299, %v4278
      %v4301 = vrot.slane %v4300, 4
      %v4302 = vadd.f32 %v4300, %v4301
      %v4303 = vrot.slane %v4302, 2
      %v4304 = vadd.f32 %v4302, %v4303
      %v4305 = vrot.slane %v4304, 1
      %v4306 = vadd.f32 %v4304, %v4305
      %v4307 = vadd.f32 %v2569, %v4293
      %v4308 = vadd.f32 %v2570, %v4306
      %v4309 = vmul.f32 %v3446, %v3446
      %v4310 = vmul.f32 %v4251, %v4251
      %v4311 = vmul.f32 %v3449, %v3449
      %v4312 = vmul.f32 %v4254, %v4254
      %v4313 = vmul.f32 %v3454, %v3454
      %v4314 = vmul.f32 %v4259, %v4259
      %v4315 = vmul.f32 %v3457, %v3457
      %v4316 = vmul.f32 %v4262, %v4262
      %v4317 = vmul.f32 %v3462, %v3462
      %v4318 = vmul.f32 %v4267, %v4267
      %v4319 = vmul.f32 %v3465, %v3465
      %v4320 = vmul.f32 %v4270, %v4270
      %v4321 = vmul.f32 %v3470, %v3470
      %v4322 = vmul.f32 %v4275, %v4275
      %v4323 = vmul.f32 %v3473, %v3473
      %v4324 = vmul.f32 %v4278, %v4278
      %v4325 = vadd.f32 %v4309, %v4311
      %v4326 = vadd.f32 %v4325, %v4313
      %v4327 = vadd.f32 %v4326, %v4315
      %v4328 = vadd.f32 %v4327, %v4317
      %v4329 = vadd.f32 %v4328, %v4319
      %v4330 = vadd.f32 %v4329, %v4321
      %v4331 = vadd.f32 %v4330, %v4323
      %v4332 = vrot.slane %v4331, 4
      %v4333 = vadd.f32 %v4331, %v4332
      %v4334 = vrot.slane %v4333, 2
      %v4335 = vadd.f32 %v4333, %v4334
      %v4336 = vrot.slane %v4335, 1
      %v4337 = vadd.f32 %v4335, %v4336
      %v4338 = vadd.f32 %v4310, %v4312
      %v4339 = vadd.f32 %v4338, %v4314
      %v4340 = vadd.f32 %v4339, %v4316
      %v4341 = vadd.f32 %v4340, %v4318
      %v4342 = vadd.f32 %v4341, %v4320
      %v4343 = vadd.f32 %v4342, %v4322
      %v4344 = vadd.f32 %v4343, %v4324
      %v4345 = vrot.slane %v4344, 4
      %v4346 = vadd.f32 %v4344, %v4345
      %v4347 = vrot.slane %v4346, 2
      %v4348 = vadd.f32 %v4346, %v4347
      %v4349 = vrot.slane %v4348, 1
      %v4350 = vadd.f32 %v4348, %v4349
      %v4351 = vadd.f32 %v2613, %v4337
      %v4352 = vadd.f32 %v2614, %v4350
      %s4353 = scalar_lea.vmem %s208, 16
      %4354 = vst [vmem:[%s4353] sm:$0xff] %v3446
      %4355 = vst [vmem:[%s4353 + $0x8] sm:$0xff] %v4251
      %4356 = vst [vmem:[%s4353 + $0x20] sm:$0xff] %v3449
      %4357 = vst [vmem:[%s4353 + $0x28] sm:$0xff] %v4254
      %4358 = vst [vmem:[%s4353 + $0x40] sm:$0xff] %v3454
      %4359 = vst [vmem:[%s4353 + $0x48] sm:$0xff] %v4259
      %4360 = vst [vmem:[%s4353 + $0x60] sm:$0xff] %v3457
      %4361 = vst [vmem:[%s4353 + $0x68] sm:$0xff] %v4262
      %4362 = vst [vmem:[%s4353 + $0x80] sm:$0xff] %v3462
      %4363 = vst [vmem:[%s4353 + $0x88] sm:$0xff] %v4267
      %4364 = vst [vmem:[%s4353 + $0xa0] sm:$0xff] %v3465
      %4365 = vst [vmem:[%s4353 + $0xa8] sm:$0xff] %v4270
      %4366 = vst [vmem:[%s4353 + $0xc0] sm:$0xff] %v3470
      %4367 = vst [vmem:[%s4353 + $0xc8] sm:$0xff] %v4275
      %4368 = vst [vmem:[%s4353 + $0xe0] sm:$0xff] %v3473
      %4369 = vst [vmem:[%s4353 + $0xe8] sm:$0xff] %v4278
      %v4372 = vcombine.low %v4307, %v4308
      %v4374 = vunpack.c.l.s4 1966171168
      %v4375 = vunpack.c.0.s8 %v4374
      %v4376 = vlaneseq
      %v4377 = vshrl.u32 %v4376, 7
      %v4378 = vsub.s32 %v4375, %v4377
      %v4379 = vrot.slane %v4372, %v4378
      %v4381 = vunpack.c.l.s4 1966171168
      %v4382 = vunpack.c.0.s8 %v4381
      %v4383 = vlaneseq
      %v4384 = vshrl.u32 %v4383, 7
      %v4385 = vsub.s32 %v4382, %v4384
      %v4386 = vrot.slane %v4379, %v4385
      %v4388 = vlaneseq
      %vm4389 = vcmp.ge.s32.totalorder %v4388, 0
      %vm4390 = vcmp.lt.s32.totalorder %v4388, 256
      %vm4391 = vmand %vm4389, %vm4390
      %4392 = vst.msk [vmem:[%s218] ss:$2 sm:$0x3] %vm4391, %v4386
      %v4395 = vcombine.low %v4351, %v4352
      %v4397 = vunpack.c.l.s4 1966171168
      %v4398 = vunpack.c.0.s8 %v4397
      %v4399 = vlaneseq
      %v4400 = vshrl.u32 %v4399, 7
      %v4401 = vsub.s32 %v4398, %v4400
      %v4402 = vrot.slane %v4395, %v4401
      %v4404 = vunpack.c.l.s4 1966171168
      %v4405 = vunpack.c.0.s8 %v4404
      %v4406 = vlaneseq
      %v4407 = vshrl.u32 %v4406, 7
      %v4408 = vsub.s32 %v4405, %v4407
      %v4409 = vrot.slane %v4402, %v4408
      %s4411 = scalar_lea.vmem %s218, 1
      %4412 = vst.msk [vmem:[%s4411] ss:$2 sm:$0x3] %vm4391, %v4409
      %s4413 = smul.u32 8, %s20
      %p4414 = scmp.lt.s32.totalorder %s19, 1
      %s4415 = scalar_select %p4414, %s19, 1
      %p4416 = scmp.lt.s32.totalorder %s4413, 7
      %s4417 = scalar_select %p4416, %s4413, 7
      %s4418 = smul.addr %s4417, 4
      %s4419 = smul.addr %s4415, 32
      %s4420 = sadd.s32 %s4418, %s4419
      %s4421 = smul.addr %s4420, 8
      %s4422 = scalar_lea.vmem %s2, %s4421
      %p4423 = scmp.lt.s32.totalorder %s19, 1
      %s4424 = scalar_select %p4423, %s19, 1
      %p4425 = scmp.lt.s32.totalorder %s20, 0
      %s4426 = scalar_select %p4425, %s20, 0
      %s4427 = smul.addr %s4426, 2
      %s4428 = smul.addr %s4424, 2
      %s4429 = sadd.s32 %s4427, %s4428
      %s4430 = smul.addr %s4429, 2
      %s4431 = scalar_lea.vmem %s3, %s4430
      // Predicated region
      $region29: #{deconv_bn_relu.2} parent=27 // pred_check
        %p4432 = pneg %p94
      $region30: #{deconv_bn_relu.2} parent=27 // pred_check_branch
        %4434 = sbr.rel (%p4432) target = $region32
      $region31: #{deconv_bn_relu.2} parent=27 // pred_region
        %s4435 = smul.u32 8, %s20
      $region32: #{deconv_bn_relu.2} parent=27 // pred_fallthru
        _
      // Predicated region
      $region33: #{deconv_bn_relu.2} parent=27 // pred_check
        %p4436 = pneg %p122
      $region34: #{deconv_bn_relu.2} parent=27 // pred_check_branch
        %4438 = sbr.rel (%p4436) target = $region36
      $region35: #{deconv_bn_relu.2} parent=27 // pred_region
        _
      $region36: #{deconv_bn_relu.2} parent=27 // pred_fallthru
        _
    $region28: #{deconv_bn_relu.2} parent=5 // pred_fallthru
      _
    %p4439 = scmp.le.s32.totalorder 2, %s10
    // Predicated region
    $region37: #{deconv_bn_relu.2} parent=5 // pred_check
      %p4440 = pneg %p4439
    $region38: #{deconv_bn_relu.2} parent=5 // pred_check_branch
      %4442 = sbr.rel (%p4440) target = $region40
    $region39: #{deconv_bn_relu.2} parent=5 // pred_region
      %s4443 = ssub.s32 %s10, 2
      // Predicated region
      $region41: #{deconv_bn_relu.2} parent=39 // pred_check
        %p4444 = pneg %p100
      $region42: #{deconv_bn_relu.2} parent=39 // pred_check_branch
        %4446 = sbr.rel (%p4444) target = $region44
      $region43: #{deconv_bn_relu.2} parent=39 // pred_region
        %s4447 = smul.u32 8, %s22
        %p4448 = scmp.lt.s32.totalorder %s21, 1
        %s4449 = scalar_select %p4448, %s21, 1
        %p4450 = scmp.lt.s32.totalorder %s4447, 7
        %s4451 = scalar_select %p4450, %s4447, 7
        %s4452 = smul.addr %s4451, 4
        %s4453 = smul.addr %s4449, 32
        %s4454 = sadd.s32 %s4452, %s4453
        %s4455 = smul.addr %s4454, 8
        %s4456 = scalar_lea.vmem %s2, %s4455
      $region44: #{deconv_bn_relu.2} parent=39 // pred_fallthru
        _
      // Predicated region
      $region45: #{deconv_bn_relu.2} parent=39 // pred_check
        %p4457 = pneg %p128
      $region46: #{deconv_bn_relu.2} parent=39 // pred_check_branch
        %4459 = sbr.rel (%p4457) target = $region48
      $region47: #{deconv_bn_relu.2} parent=39 // pred_region
        %p4460 = scmp.lt.s32.totalorder %s21, 1
        %s4461 = scalar_select %p4460, %s21, 1
        %p4462 = scmp.lt.s32.totalorder %s22, 0
        %s4463 = scalar_select %p4462, %s22, 0
        %s4464 = smul.addr %s4463, 2
        %s4465 = smul.addr %s4461, 2
        %s4466 = sadd.s32 %s4464, %s4465
        %s4467 = smul.addr %s4466, 2
        %s4468 = scalar_lea.vmem %s3, %s4467
      $region48: #{deconv_bn_relu.2} parent=39 // pred_fallthru
        _
    $region40: #{deconv_bn_relu.2} parent=5 // pred_fallthru
      _
  $region6: #{deconv_bn_relu.2} parent=0 // loop_footer
    %s14 = sadd.s32 1, %s10
  $region7: #{deconv_bn_relu.2} parent=0 // loop_footer_branch
    %9 = sbr.rel target = $region3
  $region8: #{deconv_bn_relu.2} parent=0 // loop_exit
    _

</llo_original>
